<compile_context>
chip_gen: v5e
topology: v5e:2x2
jax: 0.10.0
libtpu: 0.0.40
codegen_flags: <defaults>
</compile_context>

<pallas_src>
import functools
import math

import jax
import jax.numpy as jnp
from jax.experimental import pallas as pl
from jax.experimental.pallas import tpu as pltpu


_VMEM_LIMIT_BYTES = 32 * 1024 * 1024


# ----------------------------------------------------------------------------
# Tiling helpers
# ----------------------------------------------------------------------------
def _choose_tile(n, cap=1024):
    """Return (tile, padded_n): tile is a multiple of 8, <= cap, divides padded_n."""
    if n >= cap:
        tn = cap
    else:
        tn = max(8, ((n + 7) // 8) * 8)
    n_pad = ((n + tn - 1) // tn) * tn
    return tn, n_pad


def _const_spec(arr):
    """Grid-invariant BlockSpec (weights / folded-BN scale / bias), 2-D grid."""
    nd = arr.ndim
    return pl.BlockSpec(arr.shape, lambda b, n: (0,) * nd)


def _batch_spec(arr):
    """Per-batch BlockSpec: leading axis is the batch, rest is taken whole."""
    nd = arr.ndim
    shape = (1,) + arr.shape[1:]
    return pl.BlockSpec(shape, lambda b, n: (b,) + (0,) * (nd - 1))


def _cparams(sem):
    return pltpu.CompilerParams(dimension_semantics=sem,
                                vmem_limit_bytes=_VMEM_LIMIT_BYTES)


# ----------------------------------------------------------------------------
# Kernel bodies
# ----------------------------------------------------------------------------
def _cbr(h_bf16, w_ref, s_ref, b_ref):
    """1x1 conv (matmul) + folded-BN + ReLU, fp32 accumulate, returns fp32."""
    y = jnp.dot(h_bf16, w_ref[...], preferred_element_type=jnp.float32)
    return jnp.maximum(y * s_ref[...] + b_ref[...], 0.0)


def _running_max(h32, gmax_ref, n_valid, tn):
    """Running max over the N-tile grid axis; masks padded rows when needed."""
    @pl.when(pl.program_id(1) == 0)
    def _():
        gmax_ref[...] = jnp.full(gmax_ref.shape, -jnp.inf, gmax_ref.dtype)

    if n_valid is not None:
        rows = (pl.program_id(1) * tn
                + jax.lax.broadcasted_iota(jnp.int32, (h32.shape[0], 1), 0))
        h32 = jnp.where(rows < n_valid, h32, -jnp.inf)

    gmax_ref[0] = jnp.maximum(gmax_ref[0], jnp.max(h32, axis=0, keepdims=True))


def _tnet1_conv_max_kernel(x_ref, w1, s1, b1, w2, s2, b2, w3, s3, b3, gmax_ref,
                           *, n_valid, tn):
    # x_ref: (1, TN, C) bf16; w1 is zero-padded to (C, 64) so features are ignored.
    h = _cbr(x_ref[0], w1, s1, b1).astype(jnp.bfloat16)
    h = _cbr(h, w2, s2, b2).astype(jnp.bfloat16)
    h = _cbr(h, w3, s3, b3)                                   # (TN, 1024) fp32
    _running_max(h, gmax_ref, n_valid, tn)


def _entry_tnet2_kernel(x_ref, w1p_ref, s1, b1, w2, s2, b2,
                        tw1, ts1, tb1, tw2, ts2, tb2, tw3, ts3, tb3,
                        h_ref, gmax_ref, *, n_valid, tn):
    # Fuses: (xyz@T1 concat feats) via per-batch folded W1', backbone conv1->conv2,
    # then the T-Net2 conv chain + running global max.
    y = jnp.dot(x_ref[0], w1p_ref[0], preferred_element_type=jnp.float32)
    h = jnp.maximum(y * s1[...] + b1[...], 0.0).astype(jnp.bfloat16)
    h = _cbr(h, w2, s2, b2).astype(jnp.bfloat16)              # (TN, 64) bf16
    h_ref[0] = h

    t = _cbr(h, tw1, ts1, tb1).astype(jnp.bfloat16)
    t = _cbr(t, tw2, ts2, tb2).astype(jnp.bfloat16)
    t = _cbr(t, tw3, ts3, tb3)                                # (TN, 1024) fp32
    _running_max(t, gmax_ref, n_valid, tn)


def _backbone_kernel(h_ref, w3p_ref, s3, b3, w4, s4, b4, w5, s5, b5, gmax_ref,
                     *, n_valid, tn):
    # conv3 with T2 pre-folded into the per-batch weight (no lf materialization),
    # conv4 -> conv5, running global max.
    y = jnp.dot(h_ref[0], w3p_ref[0], preferred_element_type=jnp.float32)
    h = jnp.maximum(y * s3[...] + b3[...], 0.0).astype(jnp.bfloat16)
    h = _cbr(h, w4, s4, b4).astype(jnp.bfloat16)
    h = _cbr(h, w5, s5, b5)                                   # (TN, 1024) fp32
    _running_max(h, gmax_ref, n_valid, tn)


def _head_kernel(h_ref, w1lp_ref, b1p_ref, s1, w2, s2, b2, w3, s3, b3, w4, b4,
                 o_ref):
    # Seg head: conv1 uses the per-batch T2-folded local weight and a per-batch
    # bias that already contains the global-feature contribution (g@W1g)*s1.
    y = jnp.dot(h_ref[0], w1lp_ref[0], preferred_element_type=jnp.float32)
    h = jnp.maximum(y * s1[...] + b1p_ref[0], 0.0).astype(jnp.bfloat16)
    h = _cbr(h, w2, s2, b2).astype(jnp.bfloat16)
    h = _cbr(h, w3, s3, b3).astype(jnp.bfloat16)
    o = jnp.dot(h, w4[...], preferred_element_type=jnp.float32) + b4[...]
    o_ref[0] = o.astype(o_ref.dtype)


# ----------------------------------------------------------------------------
# pallas_call wrappers
# ----------------------------------------------------------------------------
def tnet1_conv_max(x, w1pad, p, tn, n_valid):
    """x: (B, Npad, C) bf16 -> (B, 1, 1024) fp32 (T-Net1 conv chain + max)."""
    B, n_pad, C = x.shape
    _, s1, b1 = p["c1"]
    w2, s2, b2 = p["c2"]
    w3, s3, b3 = p["c3"]
    consts = [w1pad, s1, b1, w2, s2, b2, w3, s3, b3]
    kernel = functools.partial(_tnet1_conv_max_kernel, n_valid=n_valid, tn=tn)
    return pl.pallas_call(
        kernel,
        out_shape=jax.ShapeDtypeStruct((B, 1, 1024), jnp.float32),
        grid=(B, n_pad // tn),
        in_specs=[pl.BlockSpec((1, tn, C), lambda b, n: (b, n, 0))]
                 + [_const_spec(c) for c in consts],
        out_specs=pl.BlockSpec((1, 1, 1024), lambda b, n: (b, 0, 0)),
        compiler_params=_cparams(("parallel", "arbitrary")),
    )(x, *consts)


def entry_tnet2_stage(x, W1p, params, tn, n_valid):
    """Fused entry convs + T-Net2 conv chain.  Returns h (B,Npad,64), g2 (B,1,1024)."""
    B, n_pad, C = x.shape
    _, s1, b1 = params["bb_c1"]
    w2, s2, b2 = params["bb_c2"]
    p2 = params["tnet2"]
    tw1, ts1, tb1 = p2["c1"]
    tw2, ts2, tb2 = p2["c2"]
    tw3, ts3, tb3 = p2["c3"]
    consts = [s1, b1, w2, s2, b2, tw1, ts1, tb1, tw2, ts2, tb2, tw3, ts3, tb3]
    kernel = functools.partial(_entry_tnet2_kernel, n_valid=n_valid, tn=tn)
    return pl.pallas_call(
        kernel,
        out_shape=(jax.ShapeDtypeStruct((B, n_pad, 64), jnp.bfloat16),
                   jax.ShapeDtypeStruct((B, 1, 1024), jnp.float32)),
        grid=(B, n_pad // tn),
        in_specs=[pl.BlockSpec((1, tn, C), lambda b, n: (b, n, 0)),
                  _batch_spec(W1p)]
                 + [_const_spec(c) for c in consts],
        out_specs=(pl.BlockSpec((1, tn, 64), lambda b, n: (b, n, 0)),
                   pl.BlockSpec((1, 1, 1024), lambda b, n: (b, 0, 0))),
        compiler_params=_cparams(("parallel", "arbitrary")),
    )(x, W1p, *consts)


def backbone_stage(h, W3p, params, tn, n_valid):
    """Fused conv3'(T2 folded) -> conv4 -> conv5 + global max -> (B,1,1024) fp32."""
    B, n_pad, _ = h.shape
    _, s3, b3 = params["bb_c3"]
    w4, s4, b4 = params["bb_c4"]
    w5, s5, b5 = params["bb_c5"]
    consts = [s3, b3, w4, s4, b4, w5, s5, b5]
    kernel = functools.partial(_backbone_kernel, n_valid=n_valid, tn=tn)
    return pl.pallas_call(
        kernel,
        out_shape=jax.ShapeDtypeStruct((B, 1, 1024), jnp.float32),
        grid=(B, n_pad // tn),
        in_specs=[pl.BlockSpec((1, tn, 64), lambda b, n: (b, n, 0)),
                  _batch_spec(W3p)]
                 + [_const_spec(c) for c in consts],
        out_specs=pl.BlockSpec((1, 1, 1024), lambda b, n: (b, 0, 0)),
        compiler_params=_cparams(("parallel", "arbitrary")),
    )(h, W3p, *consts)


def head_stage(h, W1lp, b1p, params, tn):
    """Fused segmentation head -> (B, Npad, num_classes) fp32."""
    B, n_pad, _ = h.shape
    _, s1, _ = params["hd_c1"]
    w2, s2, b2 = params["hd_c2"]
    w3, s3, b3 = params["hd_c3"]
    w4, b4 = params["hd_c4"]
    num_classes = w4.shape[1]
    consts = [s1, w2, s2, b2, w3, s3, b3, w4, b4]
    return pl.pallas_call(
        _head_kernel,
        out_shape=jax.ShapeDtypeStruct((B, n_pad, num_classes), jnp.float32),
        grid=(B, n_pad // tn),
        in_specs=[pl.BlockSpec((1, tn, 64), lambda b, n: (b, n, 0)),
                  _batch_spec(W1lp), _batch_spec(b1p)]
                 + [_const_spec(c) for c in consts],
        out_specs=pl.BlockSpec((1, tn, num_classes), lambda b, n: (b, n, 0)),
        compiler_params=_cparams(("parallel", "parallel")),
    )(h, W1lp, b1p, *consts)


def tnet_fc(g, p, k):
    """T-Net FC chain (fc1->fc2->fc3 + identity) as plain XLA ops; g: (B,1024) fp32."""
    w1, s1, b1 = p["l1"]
    w2, s2, b2 = p["l2"]
    w3, b3 = p["l3"]
    h = jnp.maximum(jnp.dot(g.astype(jnp.bfloat16), w1,
                            preferred_element_type=jnp.float32) * s1 + b1, 0.0)
    h = jnp.maximum(jnp.dot(h.astype(jnp.bfloat16), w2,
                            preferred_element_type=jnp.float32) * s2 + b2, 0.0)
    t = jnp.dot(h.astype(jnp.bfloat16), w3, preferred_element_type=jnp.float32) + b3
    return t.reshape(-1, k, k)                                # fp32 (B, k, k)


# ----------------------------------------------------------------------------
# Deterministic parameter construction (BN folded into fp32 scale/bias)
# ----------------------------------------------------------------------------
def _init_linear(key, cin, cout):
    kw, kb = jax.random.split(key)
    w = jax.random.normal(kw, (cin, cout), jnp.float32) / math.sqrt(cin)
    b = 0.01 * jax.random.normal(kb, (cout,), jnp.float32)
    return w, b


def _make_conv_bn(key, cin, cout, eps=1e-5):
    k1, k2 = jax.random.split(key)
    w, b = _init_linear(k1, cin, cout)
    ks = jax.random.split(k2, 4)
    gamma = 1.0 + 0.1 * jax.random.normal(ks[0], (cout,), jnp.float32)
    beta = 0.01 * jax.random.normal(ks[1], (cout,), jnp.float32)
    mean = 0.01 * jax.random.normal(ks[2], (cout,), jnp.float32)
    var = 1.0 + 0.1 * jnp.abs(jax.random.normal(ks[3], (cout,), jnp.float32))
    scale = gamma / jnp.sqrt(var + eps)
    bias = beta + scale * (b - mean)
    return (w.astype(jnp.bfloat16), scale.reshape(1, -1), bias.reshape(1, -1))


def _make_linear(key, cin, cout):
    w, b = _init_linear(key, cin, cout)
    return (w.astype(jnp.bfloat16), b.reshape(1, -1))


def _make_tnet_params(key, k):
    ks = jax.random.split(key, 6)
    w3, b3 = _make_linear(ks[5], 256, k * k)
    # Fold the identity addition (x.view(-1,k,k) + eye(k)) into the fc3 bias.
    b3 = b3 + jnp.eye(k, dtype=jnp.float32).reshape(1, -1)
    return {
        "c1": _make_conv_bn(ks[0], k, 64),
        "c2": _make_conv_bn(ks[1], 64, 128),
        "c3": _make_conv_bn(ks[2], 128, 1024),
        "l1": _make_conv_bn(ks[3], 1024, 512),
        "l2": _make_conv_bn(ks[4], 512, 256),
        "l3": (w3, b3),
    }


def make_params(key, num_channels=6, num_classes=2):
    ks = jax.random.split(key, 11)
    return {
        "tnet1": _make_tnet_params(ks[0], 3),
        "tnet2": _make_tnet_params(ks[1], 64),
        "bb_c1": _make_conv_bn(ks[2], num_channels, 64),
        "bb_c2": _make_conv_bn(ks[3], 64, 64),
        "bb_c3": _make_conv_bn(ks[4], 64, 64),
        "bb_c4": _make_conv_bn(ks[5], 64, 128),
        "bb_c5": _make_conv_bn(ks[6], 128, 1024),
        "hd_c1": _make_conv_bn(ks[7], 1088, 512),
        "hd_c2": _make_conv_bn(ks[8], 512, 256),
        "hd_c3": _make_conv_bn(ks[9], 256, 128),
        "hd_c4": _make_linear(ks[10], 128, num_classes),
    }


# ----------------------------------------------------------------------------
# Forward pass
# ----------------------------------------------------------------------------
def pointnet_seg_head_forward(params, x_bcn):
    """x_bcn: (B, C, N) float32 (PyTorch NCW).  Returns (B, N, num_classes)."""
    B, C, N = x_bcn.shape
    if C < 3:
        raise ValueError("Input must have at least 3 channels for xyz coordinates.")
    tn, n_pad = _choose_tile(N)
    n_valid = None if n_pad == N else N

    x = jnp.transpose(x_bcn, (0, 2, 1)).astype(jnp.bfloat16)   # (B, N, C)
    if n_pad != N:
        x = jnp.pad(x, ((0, 0), (0, n_pad - N), (0, 0)))       # zero-pad points

    # --- T-Net 1: conv chain + masked max (kernel), FC chain (XLA) ----------
    p1 = params["tnet1"]
    w1_t1, _, _ = p1["c1"]
    w1_t1_pad = jnp.pad(w1_t1, ((0, C - 3), (0, 0)))           # feature rows -> 0
    g1 = tnet1_conv_max(x, w1_t1_pad, p1, tn, n_valid)         # (B, 1, 1024) fp32
    T1 = tnet_fc(g1.reshape(B, 1024), p1, 3)                   # (B, 3, 3) fp32

    # --- Fold T1 into backbone conv1 weight (per batch) ---------------------
    w_bb1, _, _ = params["bb_c1"]
    w1_xyz = jnp.einsum("bij,jk->bik", T1, w_bb1[:3].astype(jnp.float32))
    if C > 3:
        w1_feat = jnp.broadcast_to(w_bb1[3:].astype(jnp.float32)[None],
                                   (B, C - 3, 64))
        W1p = jnp.concatenate([w1_xyz, w1_feat], axis=1)
    else:
        W1p = w1_xyz
    W1p = W1p.astype(jnp.bfloat16)                             # (B, C, 64)

    # --- Entry convs + T-Net2 conv chain + masked max (one kernel) ----------
    h, g2 = entry_tnet2_stage(x, W1p, params, tn, n_valid)     # (B,Npad,64), (B,1,1024)
    T2 = tnet_fc(g2.reshape(B, 1024), params["tnet2"], 64)     # (B, 64, 64) fp32

    # --- Fold T2 into backbone conv3 and head conv1 local weight ------------
    w_bb3, _, _ = params["bb_c3"]
    W3p = jnp.einsum("bij,jk->bik", T2,
                     w_bb3.astype(jnp.float32)).astype(jnp.bfloat16)      # (B,64,64)
    w_hd1, s_hd1, b_hd1 = params["hd_c1"]
    W1lp = jnp.einsum("bij,jk->bik", T2,
                      w_hd1[:64].astype(jnp.float32)).astype(jnp.bfloat16)  # (B,64,512)

    # --- Backbone conv3'->conv4->conv5 + masked global max ------------------
    g = backbone_stage(h, W3p, params, tn, n_valid)            # (B, 1, 1024) fp32

    # --- Hoist global-feature projection into a per-batch bias --------------
    gvec = jnp.dot(g.reshape(B, 1024), w_hd1[64:].astype(jnp.float32))   # (B, 512)
    b1p = (gvec * s_hd1 + b_hd1)[:, None, :]                   # (B, 1, 512) fp32

    # --- Segmentation head ---------------------------------------------------
    out = head_stage(h, W1lp, b1p, params, tn)                 # (B, Npad, nc)
    return out[:, :N] if n_pad != N else out


# ----------------------------------------------------------------------------
# Demo
# ----------------------------------------------------------------------------
if __name__ == "__main__":
    key = jax.random.PRNGKey(0)
    kp, kx = jax.random.split(key)

    B, C, N = 2, 6, 16            # batch, channels (xyz + 3 features), points
    num_classes = 2

    params = make_params(kp, num_channels=C, num_classes=num_classes)
    x = jax.random.normal(kx, (B, C, N), jnp.float32)

    fwd = jax.jit(pointnet_seg_head_forward)
    out = jax.block_until_ready(fwd(params, x))

    assert out.shape == (B, N, num_classes), out.shape
    assert bool(jnp.all(jnp.isfinite(out)))
    print("KERNEL_OK")
</pallas_src>

<mosaic_0001>
module attributes {stable_mosaic.version = 11 : i64} {
  func.func @_tnet1_conv_max_kernel(%arg0: i32, %arg1: i32, %arg2: memref<1x16x6xbf16, #tpu.memory_space<vmem>>, %arg3: memref<6x64xbf16, #tpu.memory_space<vmem>>, %arg4: memref<1x64xf32, #tpu.memory_space<vmem>>, %arg5: memref<1x64xf32, #tpu.memory_space<vmem>>, %arg6: memref<64x128xbf16, #tpu.memory_space<vmem>>, %arg7: memref<1x128xf32, #tpu.memory_space<vmem>>, %arg8: memref<1x128xf32, #tpu.memory_space<vmem>>, %arg9: memref<128x1024xbf16, #tpu.memory_space<vmem>>, %arg10: memref<1x1024xf32, #tpu.memory_space<vmem>>, %arg11: memref<1x1024xf32, #tpu.memory_space<vmem>>, %arg12: memref<1x1x1024xf32, #tpu.memory_space<vmem>>) attributes {dimension_semantics = [#tpu.dimension_semantics<parallel>, #tpu.dimension_semantics<arbitrary>], iteration_bounds = array<i64: 2, 1>, scalar_prefetch = 0 : i64, scratch_operands = 0 : i64, tpu.core_type = #tpu.core_type<tc>, window_params = [{transform_indices = @transform_0, window_bounds = array<i64: 1, 16, 6>}, {pipeline_mode = #tpu.pipeline_mode<synchronous>, transform_indices = @transform_1, window_bounds = array<i64: 6, 64>}, {pipeline_mode = #tpu.pipeline_mode<synchronous>, transform_indices = @transform_2, window_bounds = array<i64: 1, 64>}, {pipeline_mode = #tpu.pipeline_mode<synchronous>, transform_indices = @transform_3, window_bounds = array<i64: 1, 64>}, {pipeline_mode = #tpu.pipeline_mode<synchronous>, transform_indices = @transform_4, window_bounds = array<i64: 64, 128>}, {pipeline_mode = #tpu.pipeline_mode<synchronous>, transform_indices = @transform_5, window_bounds = array<i64: 1, 128>}, {pipeline_mode = #tpu.pipeline_mode<synchronous>, transform_indices = @transform_6, window_bounds = array<i64: 1, 128>}, {pipeline_mode = #tpu.pipeline_mode<synchronous>, transform_indices = @transform_7, window_bounds = array<i64: 128, 1024>}, {pipeline_mode = #tpu.pipeline_mode<synchronous>, transform_indices = @transform_8, window_bounds = array<i64: 1, 1024>}, {pipeline_mode = #tpu.pipeline_mode<synchronous>, transform_indices = @transform_9, window_bounds = array<i64: 1, 1024>}, {transform_indices = @transform_10, window_bounds = array<i64: 1, 1, 1024>}]} {
    %c0 = arith.constant 0 : index
    %c0_0 = arith.constant 0 : index
    %c0_1 = arith.constant 0 : index
    %0 = vector.load %arg2[%c0, %c0_0, %c0_1] : memref<1x16x6xbf16, #tpu.memory_space<vmem>>, vector<1x16x6xbf16>
    %1 = vector.shape_cast %0 : vector<1x16x6xbf16> to vector<16x6xbf16>
    %c0_2 = arith.constant 0 : index
    %c0_3 = arith.constant 0 : index
    %2 = vector.load %arg3[%c0_2, %c0_3] : memref<6x64xbf16, #tpu.memory_space<vmem>>, vector<6x64xbf16>
    %cst = arith.constant dense<0.000000e+00> : vector<16x64xf32>
    %3 = tpu.matmul %1, %2, %cst {dimension_numbers = #tpu.dot_dimension_numbers<[1], [0], [0], [1], [0, 0, 1, 1], [], []>} : vector<16x6xbf16>, vector<6x64xbf16>, vector<16x64xf32> -> vector<16x64xf32>
    %c0_4 = arith.constant 0 : index
    %c0_5 = arith.constant 0 : index
    %4 = vector.load %arg4[%c0_4, %c0_5] : memref<1x64xf32, #tpu.memory_space<vmem>>, vector<1x64xf32>
    %5 = vector.broadcast %4 : vector<1x64xf32> to vector<16x64xf32>
    %6 = arith.mulf %3, %5 : vector<16x64xf32>
    %c0_6 = arith.constant 0 : index
    %c0_7 = arith.constant 0 : index
    %7 = vector.load %arg5[%c0_6, %c0_7] : memref<1x64xf32, #tpu.memory_space<vmem>>, vector<1x64xf32>
    %8 = vector.broadcast %7 : vector<1x64xf32> to vector<16x64xf32>
    %9 = arith.addf %6, %8 : vector<16x64xf32>
    %cst_8 = arith.constant 0.000000e+00 : f32
    %10 = vector.broadcast %cst_8 : f32 to vector<16x64xf32>
    %11 = arith.maximumf %9, %10 : vector<16x64xf32>
    %12 = arith.truncf %11 : vector<16x64xf32> to vector<16x64xbf16>
    %c0_9 = arith.constant 0 : index
    %c0_10 = arith.constant 0 : index
    %13 = vector.load %arg6[%c0_9, %c0_10] : memref<64x128xbf16, #tpu.memory_space<vmem>>, vector<64x128xbf16>
    %cst_11 = arith.constant dense<0.000000e+00> : vector<16x128xf32>
    %14 = tpu.matmul %12, %13, %cst_11 {dimension_numbers = #tpu.dot_dimension_numbers<[1], [0], [0], [1], [0, 0, 1, 1], [], []>} : vector<16x64xbf16>, vector<64x128xbf16>, vector<16x128xf32> -> vector<16x128xf32>
    %c0_12 = arith.constant 0 : index
    %c0_13 = arith.constant 0 : index
    %15 = vector.load %arg7[%c0_12, %c0_13] : memref<1x128xf32, #tpu.memory_space<vmem>>, vector<1x128xf32>
    %16 = vector.broadcast %15 : vector<1x128xf32> to vector<16x128xf32>
    %17 = arith.mulf %14, %16 : vector<16x128xf32>
    %c0_14 = arith.constant 0 : index
    %c0_15 = arith.constant 0 : index
    %18 = vector.load %arg8[%c0_14, %c0_15] : memref<1x128xf32, #tpu.memory_space<vmem>>, vector<1x128xf32>
    %19 = vector.broadcast %18 : vector<1x128xf32> to vector<16x128xf32>
    %20 = arith.addf %17, %19 : vector<16x128xf32>
    %cst_16 = arith.constant 0.000000e+00 : f32
    %21 = vector.broadcast %cst_16 : f32 to vector<16x128xf32>
    %22 = arith.maximumf %20, %21 : vector<16x128xf32>
    %23 = arith.truncf %22 : vector<16x128xf32> to vector<16x128xbf16>
    %c0_17 = arith.constant 0 : index
    %c0_18 = arith.constant 0 : index
    %24 = vector.load %arg9[%c0_17, %c0_18] : memref<128x1024xbf16, #tpu.memory_space<vmem>>, vector<128x1024xbf16>
    %cst_19 = arith.constant dense<0.000000e+00> : vector<16x1024xf32>
    %25 = tpu.matmul %23, %24, %cst_19 {dimension_numbers = #tpu.dot_dimension_numbers<[1], [0], [0], [1], [0, 0, 1, 1], [], []>} : vector<16x128xbf16>, vector<128x1024xbf16>, vector<16x1024xf32> -> vector<16x1024xf32>
    %c0_20 = arith.constant 0 : index
    %c0_21 = arith.constant 0 : index
    %26 = vector.load %arg10[%c0_20, %c0_21] : memref<1x1024xf32, #tpu.memory_space<vmem>>, vector<1x1024xf32>
    %27 = vector.broadcast %26 : vector<1x1024xf32> to vector<16x1024xf32>
    %28 = arith.mulf %25, %27 : vector<16x1024xf32>
    %c0_22 = arith.constant 0 : index
    %c0_23 = arith.constant 0 : index
    %29 = vector.load %arg11[%c0_22, %c0_23] : memref<1x1024xf32, #tpu.memory_space<vmem>>, vector<1x1024xf32>
    %30 = vector.broadcast %29 : vector<1x1024xf32> to vector<16x1024xf32>
    %31 = arith.addf %28, %30 : vector<16x1024xf32>
    %cst_24 = arith.constant 0.000000e+00 : f32
    %32 = vector.broadcast %cst_24 : f32 to vector<16x1024xf32>
    %33 = arith.maximumf %31, %32 : vector<16x1024xf32>
    %c0_i32 = arith.constant 0 : i32
    %34 = arith.cmpi eq, %arg1, %c0_i32 : i32
    %35 = arith.extui %34 : i1 to i32
    %c0_i32_25 = arith.constant 0 : i32
    %36 = arith.cmpi ne, %35, %c0_i32_25 : i32
    scf.if %36 {
      %cst_33 = arith.constant 0xFF800000 : f32
      %45 = vector.broadcast %cst_33 : f32 to vector<1x1x1024xf32>
      %c0_34 = arith.constant 0 : index
      %c0_35 = arith.constant 0 : index
      %c0_36 = arith.constant 0 : index
      %46 = vector.load %arg12[%c0_34, %c0_35, %c0_36] : memref<1x1x1024xf32, #tpu.memory_space<vmem>>, vector<1x1x1024xf32>
      tpu.vector_store %arg12[%c0_34, %c0_35, %c0_36], %45 {strides = array<i32>} : memref<1x1x1024xf32, #tpu.memory_space<vmem>>, vector<1x1x1024xf32>,
    } else {
    }
    %c0_26 = arith.constant 0 : index
    %c0_27 = arith.constant 0 : index
    %c0_28 = arith.constant 0 : index
    %37 = vector.load %arg12[%c0_26, %c0_27, %c0_28] : memref<1x1x1024xf32, #tpu.memory_space<vmem>>, vector<1x1x1024xf32>
    %38 = vector.shape_cast %37 : vector<1x1x1024xf32> to vector<1x1024xf32>
    %cst_29 = arith.constant dense<0xFF800000> : vector<1024xf32>
    %39 = vector.multi_reduction <maximumf>, %33, %cst_29 [0] : vector<16x1024xf32> to vector<1024xf32>
    %40 = vector.shape_cast %39 : vector<1024xf32> to vector<1x1024xf32>
    %41 = arith.maximumf %38, %40 : vector<1x1024xf32>
    %c0_30 = arith.constant 0 : index
    %c0_31 = arith.constant 0 : index
    %c0_32 = arith.constant 0 : index
    %42 = vector.load %arg12[%c0_30, %c0_31, %c0_32] : memref<1x1x1024xf32, #tpu.memory_space<vmem>>, vector<1x1x1024xf32>
    %43 = vector.shape_cast %42 : vector<1x1x1024xf32> to vector<1x1024xf32>
    %44 = vector.shape_cast %41 : vector<1x1024xf32> to vector<1x1x1024xf32>
    tpu.vector_store %arg12[%c0_30, %c0_31, %c0_32], %44 {strides = array<i32>} : memref<1x1x1024xf32, #tpu.memory_space<vmem>>, vector<1x1x1024xf32>,
    return
  }
  func.func @transform_0(%arg0: i32, %arg1: i32) -> (i32, i32, i32) {
    %c0_i32 = arith.constant 0 : i32
    %c0_i32_0 = arith.constant 0 : i32
    return %arg0, %arg1, %c0_i32 : i32, i32, i32
  }
  func.func @transform_1(%arg0: i32, %arg1: i32) -> (i32, i32) {
    %c0_i32 = arith.constant 0 : i32
    %c0_i32_0 = arith.constant 0 : i32
    %c0_i32_1 = arith.constant 0 : i32
    return %c0_i32, %c0_i32_0 : i32, i32
  }
  func.func @transform_2(%arg0: i32, %arg1: i32) -> (i32, i32) {
    %c0_i32 = arith.constant 0 : i32
    %c0_i32_0 = arith.constant 0 : i32
    %c0_i32_1 = arith.constant 0 : i32
    return %c0_i32, %c0_i32_0 : i32, i32
  }
  func.func @transform_3(%arg0: i32, %arg1: i32) -> (i32, i32) {
    %c0_i32 = arith.constant 0 : i32
    %c0_i32_0 = arith.constant 0 : i32
    %c0_i32_1 = arith.constant 0 : i32
    return %c0_i32, %c0_i32_0 : i32, i32
  }
  func.func @transform_4(%arg0: i32, %arg1: i32) -> (i32, i32) {
    %c0_i32 = arith.constant 0 : i32
    %c0_i32_0 = arith.constant 0 : i32
    %c0_i32_1 = arith.constant 0 : i32
    return %c0_i32, %c0_i32_0 : i32, i32
  }
  func.func @transform_5(%arg0: i32, %arg1: i32) -> (i32, i32) {
    %c0_i32 = arith.constant 0 : i32
    %c0_i32_0 = arith.constant 0 : i32
    %c0_i32_1 = arith.constant 0 : i32
    return %c0_i32, %c0_i32_0 : i32, i32
  }
  func.func @transform_6(%arg0: i32, %arg1: i32) -> (i32, i32) {
    %c0_i32 = arith.constant 0 : i32
    %c0_i32_0 = arith.constant 0 : i32
    %c0_i32_1 = arith.constant 0 : i32
    return %c0_i32, %c0_i32_0 : i32, i32
  }
  func.func @transform_7(%arg0: i32, %arg1: i32) -> (i32, i32) {
    %c0_i32 = arith.constant 0 : i32
    %c0_i32_0 = arith.constant 0 : i32
    %c0_i32_1 = arith.constant 0 : i32
    return %c0_i32, %c0_i32_0 : i32, i32
  }
  func.func @transform_8(%arg0: i32, %arg1: i32) -> (i32, i32) {
    %c0_i32 = arith.constant 0 : i32
    %c0_i32_0 = arith.constant 0 : i32
    %c0_i32_1 = arith.constant 0 : i32
    return %c0_i32, %c0_i32_0 : i32, i32
  }
  func.func @transform_9(%arg0: i32, %arg1: i32) -> (i32, i32) {
    %c0_i32 = arith.constant 0 : i32
    %c0_i32_0 = arith.constant 0 : i32
    %c0_i32_1 = arith.constant 0 : i32
    return %c0_i32, %c0_i32_0 : i32, i32
  }
  func.func @transform_10(%arg0: i32, %arg1: i32) -> (i32, i32, i32) {
    %c0_i32 = arith.constant 0 : i32
    %c0_i32_0 = arith.constant 0 : i32
    %c0_i32_1 = arith.constant 0 : i32
    return %arg0, %c0_i32, %c0_i32_0 : i32, i32, i32
  }
}

module attributes {stable_mosaic.version = 11 : i64} {
  func.func @_entry_tnet2_kernel(%arg0: i32, %arg1: i32, %arg2: memref<1x16x6xbf16, #tpu.memory_space<vmem>>, %arg3: memref<1x6x64xbf16, #tpu.memory_space<vmem>>, %arg4: memref<1x64xf32, #tpu.memory_space<vmem>>, %arg5: memref<1x64xf32, #tpu.memory_space<vmem>>, %arg6: memref<64x64xbf16, #tpu.memory_space<vmem>>, %arg7: memref<1x64xf32, #tpu.memory_space<vmem>>, %arg8: memref<1x64xf32, #tpu.memory_space<vmem>>, %arg9: memref<64x64xbf16, #tpu.memory_space<vmem>>, %arg10: memref<1x64xf32, #tpu.memory_space<vmem>>, %arg11: memref<1x64xf32, #tpu.memory_space<vmem>>, %arg12: memref<64x128xbf16, #tpu.memory_space<vmem>>, %arg13: memref<1x128xf32, #tpu.memory_space<vmem>>, %arg14: memref<1x128xf32, #tpu.memory_space<vmem>>, %arg15: memref<128x1024xbf16, #tpu.memory_space<vmem>>, %arg16: memref<1x1024xf32, #tpu.memory_space<vmem>>, %arg17: memref<1x1024xf32, #tpu.memory_space<vmem>>, %arg18: memref<1x16x64xbf16, #tpu.memory_space<vmem>>, %arg19: memref<1x1x1024xf32, #tpu.memory_space<vmem>>) attributes {dimension_semantics = [#tpu.dimension_semantics<parallel>, #tpu.dimension_semantics<arbitrary>], iteration_bounds = array<i64: 2, 1>, scalar_prefetch = 0 : i64, scratch_operands = 0 : i64, tpu.core_type = #tpu.core_type<tc>, window_params = [{transform_indices = @transform_0, window_bounds = array<i64: 1, 16, 6>}, {transform_indices = @transform_1, window_bounds = array<i64: 1, 6, 64>}, {pipeline_mode = #tpu.pipeline_mode<synchronous>, transform_indices = @transform_2, window_bounds = array<i64: 1, 64>}, {pipeline_mode = #tpu.pipeline_mode<synchronous>, transform_indices = @transform_3, window_bounds = array<i64: 1, 64>}, {pipeline_mode = #tpu.pipeline_mode<synchronous>, transform_indices = @transform_4, window_bounds = array<i64: 64, 64>}, {pipeline_mode = #tpu.pipeline_mode<synchronous>, transform_indices = @transform_5, window_bounds = array<i64: 1, 64>}, {pipeline_mode = #tpu.pipeline_mode<synchronous>, transform_indices = @transform_6, window_bounds = array<i64: 1, 64>}, {pipeline_mode = #tpu.pipeline_mode<synchronous>, transform_indices = @transform_7, window_bounds = array<i64: 64, 64>}, {pipeline_mode = #tpu.pipeline_mode<synchronous>, transform_indices = @transform_8, window_bounds = array<i64: 1, 64>}, {pipeline_mode = #tpu.pipeline_mode<synchronous>, transform_indices = @transform_9, window_bounds = array<i64: 1, 64>}, {pipeline_mode = #tpu.pipeline_mode<synchronous>, transform_indices = @transform_10, window_bounds = array<i64: 64, 128>}, {pipeline_mode = #tpu.pipeline_mode<synchronous>, transform_indices = @transform_11, window_bounds = array<i64: 1, 128>}, {pipeline_mode = #tpu.pipeline_mode<synchronous>, transform_indices = @transform_12, window_bounds = array<i64: 1, 128>}, {pipeline_mode = #tpu.pipeline_mode<synchronous>, transform_indices = @transform_13, window_bounds = array<i64: 128, 1024>}, {pipeline_mode = #tpu.pipeline_mode<synchronous>, transform_indices = @transform_14, window_bounds = array<i64: 1, 1024>}, {pipeline_mode = #tpu.pipeline_mode<synchronous>, transform_indices = @transform_15, window_bounds = array<i64: 1, 1024>}, {transform_indices = @transform_16, window_bounds = array<i64: 1, 16, 64>}, {transform_indices = @transform_17, window_bounds = array<i64: 1, 1, 1024>}]} {
    %c0 = arith.constant 0 : index
    %c0_0 = arith.constant 0 : index
    %c0_1 = arith.constant 0 : index
    %0 = vector.load %arg2[%c0, %c0_0, %c0_1] : memref<1x16x6xbf16, #tpu.memory_space<vmem>>, vector<1x16x6xbf16>
    %1 = vector.shape_cast %0 : vector<1x16x6xbf16> to vector<16x6xbf16>
    %c0_2 = arith.constant 0 : index
    %c0_3 = arith.constant 0 : index
    %c0_4 = arith.constant 0 : index
    %2 = vector.load %arg3[%c0_2, %c0_3, %c0_4] : memref<1x6x64xbf16, #tpu.memory_space<vmem>>, vector<1x6x64xbf16>
    %3 = vector.shape_cast %2 : vector<1x6x64xbf16> to vector<6x64xbf16>
    %cst = arith.constant dense<0.000000e+00> : vector<16x64xf32>
    %4 = tpu.matmul %1, %3, %cst {dimension_numbers = #tpu.dot_dimension_numbers<[1], [0], [0], [1], [0, 0, 1, 1], [], []>} : vector<16x6xbf16>, vector<6x64xbf16>, vector<16x64xf32> -> vector<16x64xf32>
    %c0_5 = arith.constant 0 : index
    %c0_6 = arith.constant 0 : index
    %5 = vector.load %arg4[%c0_5, %c0_6] : memref<1x64xf32, #tpu.memory_space<vmem>>, vector<1x64xf32>
    %6 = vector.broadcast %5 : vector<1x64xf32> to vector<16x64xf32>
    %7 = arith.mulf %4, %6 : vector<16x64xf32>
    %c0_7 = arith.constant 0 : index
    %c0_8 = arith.constant 0 : index
    %8 = vector.load %arg5[%c0_7, %c0_8] : memref<1x64xf32, #tpu.memory_space<vmem>>, vector<1x64xf32>
    %9 = vector.broadcast %8 : vector<1x64xf32> to vector<16x64xf32>
    %10 = arith.addf %7, %9 : vector<16x64xf32>
    %cst_9 = arith.constant 0.000000e+00 : f32
    %11 = vector.broadcast %cst_9 : f32 to vector<16x64xf32>
    %12 = arith.maximumf %10, %11 : vector<16x64xf32>
    %13 = arith.truncf %12 : vector<16x64xf32> to vector<16x64xbf16>
    %c0_10 = arith.constant 0 : index
    %c0_11 = arith.constant 0 : index
    %14 = vector.load %arg6[%c0_10, %c0_11] : memref<64x64xbf16, #tpu.memory_space<vmem>>, vector<64x64xbf16>
    %cst_12 = arith.constant dense<0.000000e+00> : vector<16x64xf32>
    %15 = tpu.matmul %13, %14, %cst_12 {dimension_numbers = #tpu.dot_dimension_numbers<[1], [0], [0], [1], [0, 0, 1, 1], [], []>} : vector<16x64xbf16>, vector<64x64xbf16>, vector<16x64xf32> -> vector<16x64xf32>
    %c0_13 = arith.constant 0 : index
    %c0_14 = arith.constant 0 : index
    %16 = vector.load %arg7[%c0_13, %c0_14] : memref<1x64xf32, #tpu.memory_space<vmem>>, vector<1x64xf32>
    %17 = vector.broadcast %16 : vector<1x64xf32> to vector<16x64xf32>
    %18 = arith.mulf %15, %17 : vector<16x64xf32>
    %c0_15 = arith.constant 0 : index
    %c0_16 = arith.constant 0 : index
    %19 = vector.load %arg8[%c0_15, %c0_16] : memref<1x64xf32, #tpu.memory_space<vmem>>, vector<1x64xf32>
    %20 = vector.broadcast %19 : vector<1x64xf32> to vector<16x64xf32>
    %21 = arith.addf %18, %20 : vector<16x64xf32>
    %cst_17 = arith.constant 0.000000e+00 : f32
    %22 = vector.broadcast %cst_17 : f32 to vector<16x64xf32>
    %23 = arith.maximumf %21, %22 : vector<16x64xf32>
    %24 = arith.truncf %23 : vector<16x64xf32> to vector<16x64xbf16>
    %c0_18 = arith.constant 0 : index
    %c0_19 = arith.constant 0 : index
    %c0_20 = arith.constant 0 : index
    %25 = vector.load %arg18[%c0_18, %c0_19, %c0_20] : memref<1x16x64xbf16, #tpu.memory_space<vmem>>, vector<1x16x64xbf16>
    %26 = vector.shape_cast %25 : vector<1x16x64xbf16> to vector<16x64xbf16>
    %27 = vector.shape_cast %24 : vector<16x64xbf16> to vector<1x16x64xbf16>
    tpu.vector_store %arg18[%c0_18, %c0_19, %c0_20], %27 {strides = array<i32>} : memref<1x16x64xbf16, #tpu.memory_space<vmem>>, vector<1x16x64xbf16>,
    %c0_21 = arith.constant 0 : index
    %c0_22 = arith.constant 0 : index
    %28 = vector.load %arg9[%c0_21, %c0_22] : memref<64x64xbf16, #tpu.memory_space<vmem>>, vector<64x64xbf16>
    %cst_23 = arith.constant dense<0.000000e+00> : vector<16x64xf32>
    %29 = tpu.matmul %24, %28, %cst_23 {dimension_numbers = #tpu.dot_dimension_numbers<[1], [0], [0], [1], [0, 0, 1, 1], [], []>} : vector<16x64xbf16>, vector<64x64xbf16>, vector<16x64xf32> -> vector<16x64xf32>
    %c0_24 = arith.constant 0 : index
    %c0_25 = arith.constant 0 : index
    %30 = vector.load %arg10[%c0_24, %c0_25] : memref<1x64xf32, #tpu.memory_space<vmem>>, vector<1x64xf32>
    %31 = vector.broadcast %30 : vector<1x64xf32> to vector<16x64xf32>
    %32 = arith.mulf %29, %31 : vector<16x64xf32>
    %c0_26 = arith.constant 0 : index
    %c0_27 = arith.constant 0 : index
    %33 = vector.load %arg11[%c0_26, %c0_27] : memref<1x64xf32, #tpu.memory_space<vmem>>, vector<1x64xf32>
    %34 = vector.broadcast %33 : vector<1x64xf32> to vector<16x64xf32>
    %35 = arith.addf %32, %34 : vector<16x64xf32>
    %cst_28 = arith.constant 0.000000e+00 : f32
    %36 = vector.broadcast %cst_28 : f32 to vector<16x64xf32>
    %37 = arith.maximumf %35, %36 : vector<16x64xf32>
    %38 = arith.truncf %37 : vector<16x64xf32> to vector<16x64xbf16>
    %c0_29 = arith.constant 0 : index
    %c0_30 = arith.constant 0 : index
    %39 = vector.load %arg12[%c0_29, %c0_30] : memref<64x128xbf16, #tpu.memory_space<vmem>>, vector<64x128xbf16>
    %cst_31 = arith.constant dense<0.000000e+00> : vector<16x128xf32>
    %40 = tpu.matmul %38, %39, %cst_31 {dimension_numbers = #tpu.dot_dimension_numbers<[1], [0], [0], [1], [0, 0, 1, 1], [], []>} : vector<16x64xbf16>, vector<64x128xbf16>, vector<16x128xf32> -> vector<16x128xf32>
    %c0_32 = arith.constant 0 : index
    %c0_33 = arith.constant 0 : index
    %41 = vector.load %arg13[%c0_32, %c0_33] : memref<1x128xf32, #tpu.memory_space<vmem>>, vector<1x128xf32>
    %42 = vector.broadcast %41 : vector<1x128xf32> to vector<16x128xf32>
    %43 = arith.mulf %40, %42 : vector<16x128xf32>
    %c0_34 = arith.constant 0 : index
    %c0_35 = arith.constant 0 : index
    %44 = vector.load %arg14[%c0_34, %c0_35] : memref<1x128xf32, #tpu.memory_space<vmem>>, vector<1x128xf32>
    %45 = vector.broadcast %44 : vector<1x128xf32> to vector<16x128xf32>
    %46 = arith.addf %43, %45 : vector<16x128xf32>
    %cst_36 = arith.constant 0.000000e+00 : f32
    %47 = vector.broadcast %cst_36 : f32 to vector<16x128xf32>
    %48 = arith.maximumf %46, %47 : vector<16x128xf32>
    %49 = arith.truncf %48 : vector<16x128xf32> to vector<16x128xbf16>
    %c0_37 = arith.constant 0 : index
    %c0_38 = arith.constant 0 : index
    %50 = vector.load %arg15[%c0_37, %c0_38] : memref<128x1024xbf16, #tpu.memory_space<vmem>>, vector<128x1024xbf16>
    %cst_39 = arith.constant dense<0.000000e+00> : vector<16x1024xf32>
    %51 = tpu.matmul %49, %50, %cst_39 {dimension_numbers = #tpu.dot_dimension_numbers<[1], [0], [0], [1], [0, 0, 1, 1], [], []>} : vector<16x128xbf16>, vector<128x1024xbf16>, vector<16x1024xf32> -> vector<16x1024xf32>
    %c0_40 = arith.constant 0 : index
    %c0_41 = arith.constant 0 : index
    %52 = vector.load %arg16[%c0_40, %c0_41] : memref<1x1024xf32, #tpu.memory_space<vmem>>, vector<1x1024xf32>
    %53 = vector.broadcast %52 : vector<1x1024xf32> to vector<16x1024xf32>
    %54 = arith.mulf %51, %53 : vector<16x1024xf32>
    %c0_42 = arith.constant 0 : index
    %c0_43 = arith.constant 0 : index
    %55 = vector.load %arg17[%c0_42, %c0_43] : memref<1x1024xf32, #tpu.memory_space<vmem>>, vector<1x1024xf32>
    %56 = vector.broadcast %55 : vector<1x1024xf32> to vector<16x1024xf32>
    %57 = arith.addf %54, %56 : vector<16x1024xf32>
    %cst_44 = arith.constant 0.000000e+00 : f32
    %58 = vector.broadcast %cst_44 : f32 to vector<16x1024xf32>
    %59 = arith.maximumf %57, %58 : vector<16x1024xf32>
    %c0_i32 = arith.constant 0 : i32
    %60 = arith.cmpi eq, %arg1, %c0_i32 : i32
    %61 = arith.extui %60 : i1 to i32
    %c0_i32_45 = arith.constant 0 : i32
    %62 = arith.cmpi ne, %61, %c0_i32_45 : i32
    scf.if %62 {
      %cst_53 = arith.constant 0xFF800000 : f32
      %71 = vector.broadcast %cst_53 : f32 to vector<1x1x1024xf32>
      %c0_54 = arith.constant 0 : index
      %c0_55 = arith.constant 0 : index
      %c0_56 = arith.constant 0 : index
      %72 = vector.load %arg19[%c0_54, %c0_55, %c0_56] : memref<1x1x1024xf32, #tpu.memory_space<vmem>>, vector<1x1x1024xf32>
      tpu.vector_store %arg19[%c0_54, %c0_55, %c0_56], %71 {strides = array<i32>} : memref<1x1x1024xf32, #tpu.memory_space<vmem>>, vector<1x1x1024xf32>,
    } else {
    }
    %c0_46 = arith.constant 0 : index
    %c0_47 = arith.constant 0 : index
    %c0_48 = arith.constant 0 : index
    %63 = vector.load %arg19[%c0_46, %c0_47, %c0_48] : memref<1x1x1024xf32, #tpu.memory_space<vmem>>, vector<1x1x1024xf32>
    %64 = vector.shape_cast %63 : vector<1x1x1024xf32> to vector<1x1024xf32>
    %cst_49 = arith.constant dense<0xFF800000> : vector<1024xf32>
    %65 = vector.multi_reduction <maximumf>, %59, %cst_49 [0] : vector<16x1024xf32> to vector<1024xf32>
    %66 = vector.shape_cast %65 : vector<1024xf32> to vector<1x1024xf32>
    %67 = arith.maximumf %64, %66 : vector<1x1024xf32>
    %c0_50 = arith.constant 0 : index
    %c0_51 = arith.constant 0 : index
    %c0_52 = arith.constant 0 : index
    %68 = vector.load %arg19[%c0_50, %c0_51, %c0_52] : memref<1x1x1024xf32, #tpu.memory_space<vmem>>, vector<1x1x1024xf32>
    %69 = vector.shape_cast %68 : vector<1x1x1024xf32> to vector<1x1024xf32>
    %70 = vector.shape_cast %67 : vector<1x1024xf32> to vector<1x1x1024xf32>
    tpu.vector_store %arg19[%c0_50, %c0_51, %c0_52], %70 {strides = array<i32>} : memref<1x1x1024xf32, #tpu.memory_space<vmem>>, vector<1x1x1024xf32>,
    return
  }
  func.func @transform_0(%arg0: i32, %arg1: i32) -> (i32, i32, i32) {
    %c0_i32 = arith.constant 0 : i32
    %c0_i32_0 = arith.constant 0 : i32
    return %arg0, %arg1, %c0_i32 : i32, i32, i32
  }
  func.func @transform_1(%arg0: i32, %arg1: i32) -> (i32, i32, i32) {
    %c0_i32 = arith.constant 0 : i32
    %c0_i32_0 = arith.constant 0 : i32
    %c0_i32_1 = arith.constant 0 : i32
    return %arg0, %c0_i32, %c0_i32_0 : i32, i32, i32
  }
  func.func @transform_2(%arg0: i32, %arg1: i32) -> (i32, i32) {
    %c0_i32 = arith.constant 0 : i32
    %c0_i32_0 = arith.constant 0 : i32
    %c0_i32_1 = arith.constant 0 : i32
    return %c0_i32, %c0_i32_0 : i32, i32
  }
  func.func @transform_3(%arg0: i32, %arg1: i32) -> (i32, i32) {
    %c0_i32 = arith.constant 0 : i32
    %c0_i32_0 = arith.constant 0 : i32
    %c0_i32_1 = arith.constant 0 : i32
    return %c0_i32, %c0_i32_0 : i32, i32
  }
  func.func @transform_4(%arg0: i32, %arg1: i32) -> (i32, i32) {
    %c0_i32 = arith.constant 0 : i32
    %c0_i32_0 = arith.constant 0 : i32
    %c0_i32_1 = arith.constant 0 : i32
    return %c0_i32, %c0_i32_0 : i32, i32
  }
  func.func @transform_5(%arg0: i32, %arg1: i32) -> (i32, i32) {
    %c0_i32 = arith.constant 0 : i32
    %c0_i32_0 = arith.constant 0 : i32
    %c0_i32_1 = arith.constant 0 : i32
    return %c0_i32, %c0_i32_0 : i32, i32
  }
  func.func @transform_6(%arg0: i32, %arg1: i32) -> (i32, i32) {
    %c0_i32 = arith.constant 0 : i32
    %c0_i32_0 = arith.constant 0 : i32
    %c0_i32_1 = arith.constant 0 : i32
    return %c0_i32, %c0_i32_0 : i32, i32
  }
  func.func @transform_7(%arg0: i32, %arg1: i32) -> (i32, i32) {
    %c0_i32 = arith.constant 0 : i32
    %c0_i32_0 = arith.constant 0 : i32
    %c0_i32_1 = arith.constant 0 : i32
    return %c0_i32, %c0_i32_0 : i32, i32
  }
  func.func @transform_8(%arg0: i32, %arg1: i32) -> (i32, i32) {
    %c0_i32 = arith.constant 0 : i32
    %c0_i32_0 = arith.constant 0 : i32
    %c0_i32_1 = arith.constant 0 : i32
    return %c0_i32, %c0_i32_0 : i32, i32
  }
  func.func @transform_9(%arg0: i32, %arg1: i32) -> (i32, i32) {
    %c0_i32 = arith.constant 0 : i32
    %c0_i32_0 = arith.constant 0 : i32
    %c0_i32_1 = arith.constant 0 : i32
    return %c0_i32, %c0_i32_0 : i32, i32
  }
  func.func @transform_10(%arg0: i32, %arg1: i32) -> (i32, i32) {
    %c0_i32 = arith.constant 0 : i32
    %c0_i32_0 = arith.constant 0 : i32
    %c0_i32_1 = arith.constant 0 : i32
    return %c0_i32, %c0_i32_0 : i32, i32
  }
  func.func @transform_11(%arg0: i32, %arg1: i32) -> (i32, i32) {
    %c0_i32 = arith.constant 0 : i32
    %c0_i32_0 = arith.constant 0 : i32
    %c0_i32_1 = arith.constant 0 : i32
    return %c0_i32, %c0_i32_0 : i32, i32
  }
  func.func @transform_12(%arg0: i32, %arg1: i32) -> (i32, i32) {
    %c0_i32 = arith.constant 0 : i32
    %c0_i32_0 = arith.constant 0 : i32
    %c0_i32_1 = arith.constant 0 : i32
    return %c0_i32, %c0_i32_0 : i32, i32
  }
  func.func @transform_13(%arg0: i32, %arg1: i32) -> (i32, i32) {
    %c0_i32 = arith.constant 0 : i32
    %c0_i32_0 = arith.constant 0 : i32
    %c0_i32_1 = arith.constant 0 : i32
    return %c0_i32, %c0_i32_0 : i32, i32
  }
  func.func @transform_14(%arg0: i32, %arg1: i32) -> (i32, i32) {
    %c0_i32 = arith.constant 0 : i32
    %c0_i32_0 = arith.constant 0 : i32
    %c0_i32_1 = arith.constant 0 : i32
    return %c0_i32, %c0_i32_0 : i32, i32
  }
  func.func @transform_15(%arg0: i32, %arg1: i32) -> (i32, i32) {
    %c0_i32 = arith.constant 0 : i32
    %c0_i32_0 = arith.constant 0 : i32
    %c0_i32_1 = arith.constant 0 : i32
    return %c0_i32, %c0_i32_0 : i32, i32
  }
  func.func @transform_16(%arg0: i32, %arg1: i32) -> (i32, i32, i32) {
    %c0_i32 = arith.constant 0 : i32
    %c0_i32_0 = arith.constant 0 : i32
    return %arg0, %arg1, %c0_i32 : i32, i32, i32
  }
  func.func @transform_17(%arg0: i32, %arg1: i32) -> (i32, i32, i32) {
    %c0_i32 = arith.constant 0 : i32
    %c0_i32_0 = arith.constant 0 : i32
    %c0_i32_1 = arith.constant 0 : i32
    return %arg0, %c0_i32, %c0_i32_0 : i32, i32, i32
  }
}

module attributes {stable_mosaic.version = 11 : i64} {
  func.func @_backbone_kernel(%arg0: i32, %arg1: i32, %arg2: memref<1x16x64xbf16, #tpu.memory_space<vmem>>, %arg3: memref<1x64x64xbf16, #tpu.memory_space<vmem>>, %arg4: memref<1x64xf32, #tpu.memory_space<vmem>>, %arg5: memref<1x64xf32, #tpu.memory_space<vmem>>, %arg6: memref<64x128xbf16, #tpu.memory_space<vmem>>, %arg7: memref<1x128xf32, #tpu.memory_space<vmem>>, %arg8: memref<1x128xf32, #tpu.memory_space<vmem>>, %arg9: memref<128x1024xbf16, #tpu.memory_space<vmem>>, %arg10: memref<1x1024xf32, #tpu.memory_space<vmem>>, %arg11: memref<1x1024xf32, #tpu.memory_space<vmem>>, %arg12: memref<1x1x1024xf32, #tpu.memory_space<vmem>>) attributes {dimension_semantics = [#tpu.dimension_semantics<parallel>, #tpu.dimension_semantics<arbitrary>], iteration_bounds = array<i64: 2, 1>, scalar_prefetch = 0 : i64, scratch_operands = 0 : i64, tpu.core_type = #tpu.core_type<tc>, window_params = [{transform_indices = @transform_0, window_bounds = array<i64: 1, 16, 64>}, {transform_indices = @transform_1, window_bounds = array<i64: 1, 64, 64>}, {pipeline_mode = #tpu.pipeline_mode<synchronous>, transform_indices = @transform_2, window_bounds = array<i64: 1, 64>}, {pipeline_mode = #tpu.pipeline_mode<synchronous>, transform_indices = @transform_3, window_bounds = array<i64: 1, 64>}, {pipeline_mode = #tpu.pipeline_mode<synchronous>, transform_indices = @transform_4, window_bounds = array<i64: 64, 128>}, {pipeline_mode = #tpu.pipeline_mode<synchronous>, transform_indices = @transform_5, window_bounds = array<i64: 1, 128>}, {pipeline_mode = #tpu.pipeline_mode<synchronous>, transform_indices = @transform_6, window_bounds = array<i64: 1, 128>}, {pipeline_mode = #tpu.pipeline_mode<synchronous>, transform_indices = @transform_7, window_bounds = array<i64: 128, 1024>}, {pipeline_mode = #tpu.pipeline_mode<synchronous>, transform_indices = @transform_8, window_bounds = array<i64: 1, 1024>}, {pipeline_mode = #tpu.pipeline_mode<synchronous>, transform_indices = @transform_9, window_bounds = array<i64: 1, 1024>}, {transform_indices = @transform_10, window_bounds = array<i64: 1, 1, 1024>}]} {
    %c0 = arith.constant 0 : index
    %c0_0 = arith.constant 0 : index
    %c0_1 = arith.constant 0 : index
    %0 = vector.load %arg2[%c0, %c0_0, %c0_1] : memref<1x16x64xbf16, #tpu.memory_space<vmem>>, vector<1x16x64xbf16>
    %1 = vector.shape_cast %0 : vector<1x16x64xbf16> to vector<16x64xbf16>
    %c0_2 = arith.constant 0 : index
    %c0_3 = arith.constant 0 : index
    %c0_4 = arith.constant 0 : index
    %2 = vector.load %arg3[%c0_2, %c0_3, %c0_4] : memref<1x64x64xbf16, #tpu.memory_space<vmem>>, vector<1x64x64xbf16>
    %3 = vector.shape_cast %2 : vector<1x64x64xbf16> to vector<64x64xbf16>
    %cst = arith.constant dense<0.000000e+00> : vector<16x64xf32>
    %4 = tpu.matmul %1, %3, %cst {dimension_numbers = #tpu.dot_dimension_numbers<[1], [0], [0], [1], [0, 0, 1, 1], [], []>} : vector<16x64xbf16>, vector<64x64xbf16>, vector<16x64xf32> -> vector<16x64xf32>
    %c0_5 = arith.constant 0 : index
    %c0_6 = arith.constant 0 : index
    %5 = vector.load %arg4[%c0_5, %c0_6] : memref<1x64xf32, #tpu.memory_space<vmem>>, vector<1x64xf32>
    %6 = vector.broadcast %5 : vector<1x64xf32> to vector<16x64xf32>
    %7 = arith.mulf %4, %6 : vector<16x64xf32>
    %c0_7 = arith.constant 0 : index
    %c0_8 = arith.constant 0 : index
    %8 = vector.load %arg5[%c0_7, %c0_8] : memref<1x64xf32, #tpu.memory_space<vmem>>, vector<1x64xf32>
    %9 = vector.broadcast %8 : vector<1x64xf32> to vector<16x64xf32>
    %10 = arith.addf %7, %9 : vector<16x64xf32>
    %cst_9 = arith.constant 0.000000e+00 : f32
    %11 = vector.broadcast %cst_9 : f32 to vector<16x64xf32>
    %12 = arith.maximumf %10, %11 : vector<16x64xf32>
    %13 = arith.truncf %12 : vector<16x64xf32> to vector<16x64xbf16>
    %c0_10 = arith.constant 0 : index
    %c0_11 = arith.constant 0 : index
    %14 = vector.load %arg6[%c0_10, %c0_11] : memref<64x128xbf16, #tpu.memory_space<vmem>>, vector<64x128xbf16>
    %cst_12 = arith.constant dense<0.000000e+00> : vector<16x128xf32>
    %15 = tpu.matmul %13, %14, %cst_12 {dimension_numbers = #tpu.dot_dimension_numbers<[1], [0], [0], [1], [0, 0, 1, 1], [], []>} : vector<16x64xbf16>, vector<64x128xbf16>, vector<16x128xf32> -> vector<16x128xf32>
    %c0_13 = arith.constant 0 : index
    %c0_14 = arith.constant 0 : index
    %16 = vector.load %arg7[%c0_13, %c0_14] : memref<1x128xf32, #tpu.memory_space<vmem>>, vector<1x128xf32>
    %17 = vector.broadcast %16 : vector<1x128xf32> to vector<16x128xf32>
    %18 = arith.mulf %15, %17 : vector<16x128xf32>
    %c0_15 = arith.constant 0 : index
    %c0_16 = arith.constant 0 : index
    %19 = vector.load %arg8[%c0_15, %c0_16] : memref<1x128xf32, #tpu.memory_space<vmem>>, vector<1x128xf32>
    %20 = vector.broadcast %19 : vector<1x128xf32> to vector<16x128xf32>
    %21 = arith.addf %18, %20 : vector<16x128xf32>
    %cst_17 = arith.constant 0.000000e+00 : f32
    %22 = vector.broadcast %cst_17 : f32 to vector<16x128xf32>
    %23 = arith.maximumf %21, %22 : vector<16x128xf32>
    %24 = arith.truncf %23 : vector<16x128xf32> to vector<16x128xbf16>
    %c0_18 = arith.constant 0 : index
    %c0_19 = arith.constant 0 : index
    %25 = vector.load %arg9[%c0_18, %c0_19] : memref<128x1024xbf16, #tpu.memory_space<vmem>>, vector<128x1024xbf16>
    %cst_20 = arith.constant dense<0.000000e+00> : vector<16x1024xf32>
    %26 = tpu.matmul %24, %25, %cst_20 {dimension_numbers = #tpu.dot_dimension_numbers<[1], [0], [0], [1], [0, 0, 1, 1], [], []>} : vector<16x128xbf16>, vector<128x1024xbf16>, vector<16x1024xf32> -> vector<16x1024xf32>
    %c0_21 = arith.constant 0 : index
    %c0_22 = arith.constant 0 : index
    %27 = vector.load %arg10[%c0_21, %c0_22] : memref<1x1024xf32, #tpu.memory_space<vmem>>, vector<1x1024xf32>
    %28 = vector.broadcast %27 : vector<1x1024xf32> to vector<16x1024xf32>
    %29 = arith.mulf %26, %28 : vector<16x1024xf32>
    %c0_23 = arith.constant 0 : index
    %c0_24 = arith.constant 0 : index
    %30 = vector.load %arg11[%c0_23, %c0_24] : memref<1x1024xf32, #tpu.memory_space<vmem>>, vector<1x1024xf32>
    %31 = vector.broadcast %30 : vector<1x1024xf32> to vector<16x1024xf32>
    %32 = arith.addf %29, %31 : vector<16x1024xf32>
    %cst_25 = arith.constant 0.000000e+00 : f32
    %33 = vector.broadcast %cst_25 : f32 to vector<16x1024xf32>
    %34 = arith.maximumf %32, %33 : vector<16x1024xf32>
    %c0_i32 = arith.constant 0 : i32
    %35 = arith.cmpi eq, %arg1, %c0_i32 : i32
    %36 = arith.extui %35 : i1 to i32
    %c0_i32_26 = arith.constant 0 : i32
    %37 = arith.cmpi ne, %36, %c0_i32_26 : i32
    scf.if %37 {
      %cst_34 = arith.constant 0xFF800000 : f32
      %46 = vector.broadcast %cst_34 : f32 to vector<1x1x1024xf32>
      %c0_35 = arith.constant 0 : index
      %c0_36 = arith.constant 0 : index
      %c0_37 = arith.constant 0 : index
      %47 = vector.load %arg12[%c0_35, %c0_36, %c0_37] : memref<1x1x1024xf32, #tpu.memory_space<vmem>>, vector<1x1x1024xf32>
      tpu.vector_store %arg12[%c0_35, %c0_36, %c0_37], %46 {strides = array<i32>} : memref<1x1x1024xf32, #tpu.memory_space<vmem>>, vector<1x1x1024xf32>,
    } else {
    }
    %c0_27 = arith.constant 0 : index
    %c0_28 = arith.constant 0 : index
    %c0_29 = arith.constant 0 : index
    %38 = vector.load %arg12[%c0_27, %c0_28, %c0_29] : memref<1x1x1024xf32, #tpu.memory_space<vmem>>, vector<1x1x1024xf32>
    %39 = vector.shape_cast %38 : vector<1x1x1024xf32> to vector<1x1024xf32>
    %cst_30 = arith.constant dense<0xFF800000> : vector<1024xf32>
    %40 = vector.multi_reduction <maximumf>, %34, %cst_30 [0] : vector<16x1024xf32> to vector<1024xf32>
    %41 = vector.shape_cast %40 : vector<1024xf32> to vector<1x1024xf32>
    %42 = arith.maximumf %39, %41 : vector<1x1024xf32>
    %c0_31 = arith.constant 0 : index
    %c0_32 = arith.constant 0 : index
    %c0_33 = arith.constant 0 : index
    %43 = vector.load %arg12[%c0_31, %c0_32, %c0_33] : memref<1x1x1024xf32, #tpu.memory_space<vmem>>, vector<1x1x1024xf32>
    %44 = vector.shape_cast %43 : vector<1x1x1024xf32> to vector<1x1024xf32>
    %45 = vector.shape_cast %42 : vector<1x1024xf32> to vector<1x1x1024xf32>
    tpu.vector_store %arg12[%c0_31, %c0_32, %c0_33], %45 {strides = array<i32>} : memref<1x1x1024xf32, #tpu.memory_space<vmem>>, vector<1x1x1024xf32>,
    return
  }
  func.func @transform_0(%arg0: i32, %arg1: i32) -> (i32, i32, i32) {
    %c0_i32 = arith.constant 0 : i32
    %c0_i32_0 = arith.constant 0 : i32
    return %arg0, %arg1, %c0_i32 : i32, i32, i32
  }
  func.func @transform_1(%arg0: i32, %arg1: i32) -> (i32, i32, i32) {
    %c0_i32 = arith.constant 0 : i32
    %c0_i32_0 = arith.constant 0 : i32
    %c0_i32_1 = arith.constant 0 : i32
    return %arg0, %c0_i32, %c0_i32_0 : i32, i32, i32
  }
  func.func @transform_2(%arg0: i32, %arg1: i32) -> (i32, i32) {
    %c0_i32 = arith.constant 0 : i32
    %c0_i32_0 = arith.constant 0 : i32
    %c0_i32_1 = arith.constant 0 : i32
    return %c0_i32, %c0_i32_0 : i32, i32
  }
  func.func @transform_3(%arg0: i32, %arg1: i32) -> (i32, i32) {
    %c0_i32 = arith.constant 0 : i32
    %c0_i32_0 = arith.constant 0 : i32
    %c0_i32_1 = arith.constant 0 : i32
    return %c0_i32, %c0_i32_0 : i32, i32
  }
  func.func @transform_4(%arg0: i32, %arg1: i32) -> (i32, i32) {
    %c0_i32 = arith.constant 0 : i32
    %c0_i32_0 = arith.constant 0 : i32
    %c0_i32_1 = arith.constant 0 : i32
    return %c0_i32, %c0_i32_0 : i32, i32
  }
  func.func @transform_5(%arg0: i32, %arg1: i32) -> (i32, i32) {
    %c0_i32 = arith.constant 0 : i32
    %c0_i32_0 = arith.constant 0 : i32
    %c0_i32_1 = arith.constant 0 : i32
    return %c0_i32, %c0_i32_0 : i32, i32
  }
  func.func @transform_6(%arg0: i32, %arg1: i32) -> (i32, i32) {
    %c0_i32 = arith.constant 0 : i32
    %c0_i32_0 = arith.constant 0 : i32
    %c0_i32_1 = arith.constant 0 : i32
    return %c0_i32, %c0_i32_0 : i32, i32
  }
  func.func @transform_7(%arg0: i32, %arg1: i32) -> (i32, i32) {
    %c0_i32 = arith.constant 0 : i32
    %c0_i32_0 = arith.constant 0 : i32
    %c0_i32_1 = arith.constant 0 : i32
    return %c0_i32, %c0_i32_0 : i32, i32
  }
  func.func @transform_8(%arg0: i32, %arg1: i32) -> (i32, i32) {
    %c0_i32 = arith.constant 0 : i32
    %c0_i32_0 = arith.constant 0 : i32
    %c0_i32_1 = arith.constant 0 : i32
    return %c0_i32, %c0_i32_0 : i32, i32
  }
  func.func @transform_9(%arg0: i32, %arg1: i32) -> (i32, i32) {
    %c0_i32 = arith.constant 0 : i32
    %c0_i32_0 = arith.constant 0 : i32
    %c0_i32_1 = arith.constant 0 : i32
    return %c0_i32, %c0_i32_0 : i32, i32
  }
  func.func @transform_10(%arg0: i32, %arg1: i32) -> (i32, i32, i32) {
    %c0_i32 = arith.constant 0 : i32
    %c0_i32_0 = arith.constant 0 : i32
    %c0_i32_1 = arith.constant 0 : i32
    return %arg0, %c0_i32, %c0_i32_0 : i32, i32, i32
  }
}

module attributes {stable_mosaic.version = 11 : i64} {
  func.func @_head_kernel(%arg0: i32, %arg1: i32, %arg2: memref<1x16x64xbf16, #tpu.memory_space<vmem>>, %arg3: memref<1x64x512xbf16, #tpu.memory_space<vmem>>, %arg4: memref<1x1x512xf32, #tpu.memory_space<vmem>>, %arg5: memref<1x512xf32, #tpu.memory_space<vmem>>, %arg6: memref<512x256xbf16, #tpu.memory_space<vmem>>, %arg7: memref<1x256xf32, #tpu.memory_space<vmem>>, %arg8: memref<1x256xf32, #tpu.memory_space<vmem>>, %arg9: memref<256x128xbf16, #tpu.memory_space<vmem>>, %arg10: memref<1x128xf32, #tpu.memory_space<vmem>>, %arg11: memref<1x128xf32, #tpu.memory_space<vmem>>, %arg12: memref<128x2xbf16, #tpu.memory_space<vmem>>, %arg13: memref<1x2xf32, #tpu.memory_space<vmem>>, %arg14: memref<1x16x2xf32, #tpu.memory_space<vmem>>) attributes {dimension_semantics = [#tpu.dimension_semantics<parallel>, #tpu.dimension_semantics<parallel>], iteration_bounds = array<i64: 2, 1>, scalar_prefetch = 0 : i64, scratch_operands = 0 : i64, tpu.core_type = #tpu.core_type<tc>, window_params = [{transform_indices = @transform_0, window_bounds = array<i64: 1, 16, 64>}, {transform_indices = @transform_1, window_bounds = array<i64: 1, 64, 512>}, {transform_indices = @transform_2, window_bounds = array<i64: 1, 1, 512>}, {pipeline_mode = #tpu.pipeline_mode<synchronous>, transform_indices = @transform_3, window_bounds = array<i64: 1, 512>}, {pipeline_mode = #tpu.pipeline_mode<synchronous>, transform_indices = @transform_4, window_bounds = array<i64: 512, 256>}, {pipeline_mode = #tpu.pipeline_mode<synchronous>, transform_indices = @transform_5, window_bounds = array<i64: 1, 256>}, {pipeline_mode = #tpu.pipeline_mode<synchronous>, transform_indices = @transform_6, window_bounds = array<i64: 1, 256>}, {pipeline_mode = #tpu.pipeline_mode<synchronous>, transform_indices = @transform_7, window_bounds = array<i64: 256, 128>}, {pipeline_mode = #tpu.pipeline_mode<synchronous>, transform_indices = @transform_8, window_bounds = array<i64: 1, 128>}, {pipeline_mode = #tpu.pipeline_mode<synchronous>, transform_indices = @transform_9, window_bounds = array<i64: 1, 128>}, {pipeline_mode = #tpu.pipeline_mode<synchronous>, transform_indices = @transform_10, window_bounds = array<i64: 128, 2>}, {pipeline_mode = #tpu.pipeline_mode<synchronous>, transform_indices = @transform_11, window_bounds = array<i64: 1, 2>}, {transform_indices = @transform_12, window_bounds = array<i64: 1, 16, 2>}]} {
    %c0 = arith.constant 0 : index
    %c0_0 = arith.constant 0 : index
    %c0_1 = arith.constant 0 : index
    %0 = vector.load %arg2[%c0, %c0_0, %c0_1] : memref<1x16x64xbf16, #tpu.memory_space<vmem>>, vector<1x16x64xbf16>
    %1 = vector.shape_cast %0 : vector<1x16x64xbf16> to vector<16x64xbf16>
    %c0_2 = arith.constant 0 : index
    %c0_3 = arith.constant 0 : index
    %c0_4 = arith.constant 0 : index
    %2 = vector.load %arg3[%c0_2, %c0_3, %c0_4] : memref<1x64x512xbf16, #tpu.memory_space<vmem>>, vector<1x64x512xbf16>
    %3 = vector.shape_cast %2 : vector<1x64x512xbf16> to vector<64x512xbf16>
    %cst = arith.constant dense<0.000000e+00> : vector<16x512xf32>
    %4 = tpu.matmul %1, %3, %cst {dimension_numbers = #tpu.dot_dimension_numbers<[1], [0], [0], [1], [0, 0, 1, 1], [], []>} : vector<16x64xbf16>, vector<64x512xbf16>, vector<16x512xf32> -> vector<16x512xf32>
    %c0_5 = arith.constant 0 : index
    %c0_6 = arith.constant 0 : index
    %5 = vector.load %arg5[%c0_5, %c0_6] : memref<1x512xf32, #tpu.memory_space<vmem>>, vector<1x512xf32>
    %6 = vector.broadcast %5 : vector<1x512xf32> to vector<16x512xf32>
    %7 = arith.mulf %4, %6 : vector<16x512xf32>
    %c0_7 = arith.constant 0 : index
    %c0_8 = arith.constant 0 : index
    %c0_9 = arith.constant 0 : index
    %8 = vector.load %arg4[%c0_7, %c0_8, %c0_9] : memref<1x1x512xf32, #tpu.memory_space<vmem>>, vector<1x1x512xf32>
    %9 = vector.shape_cast %8 : vector<1x1x512xf32> to vector<1x512xf32>
    %10 = vector.broadcast %9 : vector<1x512xf32> to vector<16x512xf32>
    %11 = arith.addf %7, %10 : vector<16x512xf32>
    %cst_10 = arith.constant 0.000000e+00 : f32
    %12 = vector.broadcast %cst_10 : f32 to vector<16x512xf32>
    %13 = arith.maximumf %11, %12 : vector<16x512xf32>
    %14 = arith.truncf %13 : vector<16x512xf32> to vector<16x512xbf16>
    %c0_11 = arith.constant 0 : index
    %c0_12 = arith.constant 0 : index
    %15 = vector.load %arg6[%c0_11, %c0_12] : memref<512x256xbf16, #tpu.memory_space<vmem>>, vector<512x256xbf16>
    %cst_13 = arith.constant dense<0.000000e+00> : vector<16x256xf32>
    %16 = tpu.matmul %14, %15, %cst_13 {dimension_numbers = #tpu.dot_dimension_numbers<[1], [0], [0], [1], [0, 0, 1, 1], [], []>} : vector<16x512xbf16>, vector<512x256xbf16>, vector<16x256xf32> -> vector<16x256xf32>
    %c0_14 = arith.constant 0 : index
    %c0_15 = arith.constant 0 : index
    %17 = vector.load %arg7[%c0_14, %c0_15] : memref<1x256xf32, #tpu.memory_space<vmem>>, vector<1x256xf32>
    %18 = vector.broadcast %17 : vector<1x256xf32> to vector<16x256xf32>
    %19 = arith.mulf %16, %18 : vector<16x256xf32>
    %c0_16 = arith.constant 0 : index
    %c0_17 = arith.constant 0 : index
    %20 = vector.load %arg8[%c0_16, %c0_17] : memref<1x256xf32, #tpu.memory_space<vmem>>, vector<1x256xf32>
    %21 = vector.broadcast %20 : vector<1x256xf32> to vector<16x256xf32>
    %22 = arith.addf %19, %21 : vector<16x256xf32>
    %cst_18 = arith.constant 0.000000e+00 : f32
    %23 = vector.broadcast %cst_18 : f32 to vector<16x256xf32>
    %24 = arith.maximumf %22, %23 : vector<16x256xf32>
    %25 = arith.truncf %24 : vector<16x256xf32> to vector<16x256xbf16>
    %c0_19 = arith.constant 0 : index
    %c0_20 = arith.constant 0 : index
    %26 = vector.load %arg9[%c0_19, %c0_20] : memref<256x128xbf16, #tpu.memory_space<vmem>>, vector<256x128xbf16>
    %cst_21 = arith.constant dense<0.000000e+00> : vector<16x128xf32>
    %27 = tpu.matmul %25, %26, %cst_21 {dimension_numbers = #tpu.dot_dimension_numbers<[1], [0], [0], [1], [0, 0, 1, 1], [], []>} : vector<16x256xbf16>, vector<256x128xbf16>, vector<16x128xf32> -> vector<16x128xf32>
    %c0_22 = arith.constant 0 : index
    %c0_23 = arith.constant 0 : index
    %28 = vector.load %arg10[%c0_22, %c0_23] : memref<1x128xf32, #tpu.memory_space<vmem>>, vector<1x128xf32>
    %29 = vector.broadcast %28 : vector<1x128xf32> to vector<16x128xf32>
    %30 = arith.mulf %27, %29 : vector<16x128xf32>
    %c0_24 = arith.constant 0 : index
    %c0_25 = arith.constant 0 : index
    %31 = vector.load %arg11[%c0_24, %c0_25] : memref<1x128xf32, #tpu.memory_space<vmem>>, vector<1x128xf32>
    %32 = vector.broadcast %31 : vector<1x128xf32> to vector<16x128xf32>
    %33 = arith.addf %30, %32 : vector<16x128xf32>
    %cst_26 = arith.constant 0.000000e+00 : f32
    %34 = vector.broadcast %cst_26 : f32 to vector<16x128xf32>
    %35 = arith.maximumf %33, %34 : vector<16x128xf32>
    %36 = arith.truncf %35 : vector<16x128xf32> to vector<16x128xbf16>
    %c0_27 = arith.constant 0 : index
    %c0_28 = arith.constant 0 : index
    %37 = vector.load %arg12[%c0_27, %c0_28] : memref<128x2xbf16, #tpu.memory_space<vmem>>, vector<128x2xbf16>
    %cst_29 = arith.constant dense<0.000000e+00> : vector<16x2xf32>
    %38 = tpu.matmul %36, %37, %cst_29 {dimension_numbers = #tpu.dot_dimension_numbers<[1], [0], [0], [1], [0, 0, 1, 1], [], []>} : vector<16x128xbf16>, vector<128x2xbf16>, vector<16x2xf32> -> vector<16x2xf32>
    %c0_30 = arith.constant 0 : index
    %c0_31 = arith.constant 0 : index
    %39 = vector.load %arg13[%c0_30, %c0_31] : memref<1x2xf32, #tpu.memory_space<vmem>>, vector<1x2xf32>
    %40 = vector.broadcast %39 : vector<1x2xf32> to vector<16x2xf32>
    %41 = arith.addf %38, %40 : vector<16x2xf32>
    %c0_32 = arith.constant 0 : index
    %c0_33 = arith.constant 0 : index
    %c0_34 = arith.constant 0 : index
    %42 = vector.load %arg14[%c0_32, %c0_33, %c0_34] : memref<1x16x2xf32, #tpu.memory_space<vmem>>, vector<1x16x2xf32>
    %43 = vector.shape_cast %42 : vector<1x16x2xf32> to vector<16x2xf32>
    %44 = vector.shape_cast %41 : vector<16x2xf32> to vector<1x16x2xf32>
    tpu.vector_store %arg14[%c0_32, %c0_33, %c0_34], %44 {strides = array<i32>} : memref<1x16x2xf32, #tpu.memory_space<vmem>>, vector<1x16x2xf32>,
    return
  }
  func.func @transform_0(%arg0: i32, %arg1: i32) -> (i32, i32, i32) {
    %c0_i32 = arith.constant 0 : i32
    %c0_i32_0 = arith.constant 0 : i32
    return %arg0, %arg1, %c0_i32 : i32, i32, i32
  }
  func.func @transform_1(%arg0: i32, %arg1: i32) -> (i32, i32, i32) {
    %c0_i32 = arith.constant 0 : i32
    %c0_i32_0 = arith.constant 0 : i32
    %c0_i32_1 = arith.constant 0 : i32
    return %arg0, %c0_i32, %c0_i32_0 : i32, i32, i32
  }
  func.func @transform_2(%arg0: i32, %arg1: i32) -> (i32, i32, i32) {
    %c0_i32 = arith.constant 0 : i32
    %c0_i32_0 = arith.constant 0 : i32
    %c0_i32_1 = arith.constant 0 : i32
    return %arg0, %c0_i32, %c0_i32_0 : i32, i32, i32
  }
  func.func @transform_3(%arg0: i32, %arg1: i32) -> (i32, i32) {
    %c0_i32 = arith.constant 0 : i32
    %c0_i32_0 = arith.constant 0 : i32
    %c0_i32_1 = arith.constant 0 : i32
    return %c0_i32, %c0_i32_0 : i32, i32
  }
  func.func @transform_4(%arg0: i32, %arg1: i32) -> (i32, i32) {
    %c0_i32 = arith.constant 0 : i32
    %c0_i32_0 = arith.constant 0 : i32
    %c0_i32_1 = arith.constant 0 : i32
    return %c0_i32, %c0_i32_0 : i32, i32
  }
  func.func @transform_5(%arg0: i32, %arg1: i32) -> (i32, i32) {
    %c0_i32 = arith.constant 0 : i32
    %c0_i32_0 = arith.constant 0 : i32
    %c0_i32_1 = arith.constant 0 : i32
    return %c0_i32, %c0_i32_0 : i32, i32
  }
  func.func @transform_6(%arg0: i32, %arg1: i32) -> (i32, i32) {
    %c0_i32 = arith.constant 0 : i32
    %c0_i32_0 = arith.constant 0 : i32
    %c0_i32_1 = arith.constant 0 : i32
    return %c0_i32, %c0_i32_0 : i32, i32
  }
  func.func @transform_7(%arg0: i32, %arg1: i32) -> (i32, i32) {
    %c0_i32 = arith.constant 0 : i32
    %c0_i32_0 = arith.constant 0 : i32
    %c0_i32_1 = arith.constant 0 : i32
    return %c0_i32, %c0_i32_0 : i32, i32
  }
  func.func @transform_8(%arg0: i32, %arg1: i32) -> (i32, i32) {
    %c0_i32 = arith.constant 0 : i32
    %c0_i32_0 = arith.constant 0 : i32
    %c0_i32_1 = arith.constant 0 : i32
    return %c0_i32, %c0_i32_0 : i32, i32
  }
  func.func @transform_9(%arg0: i32, %arg1: i32) -> (i32, i32) {
    %c0_i32 = arith.constant 0 : i32
    %c0_i32_0 = arith.constant 0 : i32
    %c0_i32_1 = arith.constant 0 : i32
    return %c0_i32, %c0_i32_0 : i32, i32
  }
  func.func @transform_10(%arg0: i32, %arg1: i32) -> (i32, i32) {
    %c0_i32 = arith.constant 0 : i32
    %c0_i32_0 = arith.constant 0 : i32
    %c0_i32_1 = arith.constant 0 : i32
    return %c0_i32, %c0_i32_0 : i32, i32
  }
  func.func @transform_11(%arg0: i32, %arg1: i32) -> (i32, i32) {
    %c0_i32 = arith.constant 0 : i32
    %c0_i32_0 = arith.constant 0 : i32
    %c0_i32_1 = arith.constant 0 : i32
    return %c0_i32, %c0_i32_0 : i32, i32
  }
  func.func @transform_12(%arg0: i32, %arg1: i32) -> (i32, i32, i32) {
    %c0_i32 = arith.constant 0 : i32
    %c0_i32_0 = arith.constant 0 : i32
    return %arg0, %arg1, %c0_i32 : i32, i32, i32
  }
}

</mosaic_0001>

<llo_original>
// kernel: pointnet_seg_head_forward.4
$region0: #{pointnet_seg_head_forward.4}
  #allocation0 [shape = 'u32[]', space=smem, size = 0x4, offset = 0x4, fixed_abs, tag = 'smem constant byte address 0x4 - core index']
  #allocation1 [shape = 'u32[72,128]{1,0:T(1,128)}', space=vmem, size = 0x9000, scoped, tag = 'internal scratch']
  %s0 = inlined_call_operand.vmem [shape: bf16[2,16,6], index: 0, kind: input, shape index: {}]
  %s1 = inlined_call_operand.vmem [shape: bf16[6,64], index: 1, kind: input, shape index: {}]
  %s2 = inlined_call_operand.hbm [shape: f32[1,64], index: 2, kind: input, shape index: {}]
  %s3 = inlined_call_operand.hbm [shape: f32[1,64], index: 3, kind: input, shape index: {}]
  %s4 = inlined_call_operand.hbm [shape: bf16[64,128], index: 4, kind: input, shape index: {}]
  %s5 = inlined_call_operand.hbm [shape: f32[1,128], index: 5, kind: input, shape index: {}]
  %s6 = inlined_call_operand.hbm [shape: f32[1,128], index: 6, kind: input, shape index: {}]
  %s7 = inlined_call_operand.hbm [shape: bf16[128,1024], index: 7, kind: input, shape index: {}]
  %s8 = inlined_call_operand.hbm [shape: f32[1,1024], index: 8, kind: input, shape index: {}]
  %s9 = inlined_call_operand.hbm [shape: f32[1,1024], index: 9, kind: input, shape index: {}]
  %s10 = inlined_call_operand.vmem [shape: f32[2,1,1024], index: 10, kind: output, shape index: {}]
  %s11 = sld [smem:[#allocation0]]
  $region109: #{pointnet_seg_head_forward.4} parent=0
    _
  %s13 = ssub.s32 1, %s11
  %s14 = scalar_select 0, %s13, %s11
  $region1: #{pointnet_seg_head_forward.4} parent=0
    #allocation2 [shape = 'u8[512]{0}', space=vmem, size = 0x400, scoped, tag = 'input window, operand 2, single buffered']
    #allocation3 [shape = 's32[2]{0}', space=sflag, size = 0x8, scoped, tag = 'scoped memory for pointnet_seg_head_forward.4']
    #allocation4 [shape = 'u8[512]{0}', space=vmem, size = 0x400, scoped, tag = 'input window, operand 3, single buffered']
    #allocation5 [shape = 's32[1]{0}', space=sflag, size = 0x4, scoped, tag = 'scoped memory for pointnet_seg_head_forward.4']
    #allocation6 [shape = 'u8[16384]{0}', space=vmem, size = 0x4000, scoped, tag = 'input window, operand 4, single buffered']
    #allocation7 [shape = 'u8[512]{0}', space=vmem, size = 0x400, scoped, tag = 'input window, operand 5, single buffered']
    #allocation8 [shape = 's32[1]{0}', space=sflag, size = 0x4, scoped, tag = 'scoped memory for pointnet_seg_head_forward.4']
    #allocation9 [shape = 'u8[512]{0}', space=vmem, size = 0x400, scoped, tag = 'input window, operand 6, single buffered']
    #allocation10 [shape = 'u8[262144]{0}', space=vmem, size = 0x40000, scoped, tag = 'input window, operand 7, single buffered']
    #allocation11 [shape = 's32[1]{0}', space=sflag, size = 0x4, scoped, tag = 'scoped memory for pointnet_seg_head_forward.4']
    #allocation12 [shape = 'u8[4096]{0}', space=vmem, size = 0x1000, scoped, tag = 'input window, operand 8, single buffered']
    #allocation13 [shape = 'u8[4096]{0}', space=vmem, size = 0x1000, scoped, tag = 'input window, operand 9, single buffered']
    #allocation14 [shape = 's32[1]{0}', space=sflag, size = 0x4, scoped, tag = 'scoped memory for pointnet_seg_head_forward.4']
    %15 = vsyncpa [#allocation3], 0
    %16 = vsyncpa [#allocation5], 0
    %17 = vsyncpa [#allocation8], 0
    %18 = vsyncpa [#allocation11], 0
    %19 = vsyncpa [#allocation14], 0
    loop: start=0, step=1, limit=4
    $region2: #{pointnet_seg_head_forward.4} parent=1 // loop_pre_header
      _
    $region3: #{pointnet_seg_head_forward.4} parent=1 // loop_header
      %s21 = sphi 0, %s25
      %p22 = scmp.ge.s32.totalorder %s21, 4
      %s28 = sphi 0, %s40
      %s29 = sphi 0, %s36
      %s30 = sphi 0, %s28
      %s31 = sphi 0, %s29
      %s32 = sphi 0, %s30
      %s33 = sphi 0, %s31
      %s45 = sphi 0, %s47
      %s48 = sphi 0, %s45
      %s49 = sphi 0, %s48
      %s65 = sphi 0, %s49
      %s69 = sphi 0, %s69
      %s71 = sphi 0, %s69
      %s72 = sphi 0, %s71
      %s86 = sphi 0, %s72
      %s90 = sphi 0, %s90
      %s92 = sphi 0, %s90
      %s93 = sphi 0, %s92
      %s107 = sphi 0, %s93
      %s111 = sphi 0, %s111
      %s113 = sphi 0, %s111
      %s114 = sphi 0, %s113
      %s128 = sphi 0, %s114
      %s132 = sphi 0, %s132
      %s134 = sphi 0, %s132
      %s135 = sphi 0, %s134
      %s149 = sphi 0, %s135
      %s153 = sphi 0, %s153
      %s155 = sphi 0, %s153
      %s156 = sphi 0, %s155
      %s170 = sphi 0, %s156
      %s174 = sphi 0, %s174
      %s176 = sphi 0, %s174
      %s177 = sphi 0, %s176
      %s191 = sphi 0, %s177
      %s195 = sphi 0, %s195
      %s197 = sphi 0, %s195
      %s198 = sphi 0, %s197
      %s212 = sphi 0, %s198
      %s216 = sphi 0, %s216
      %s218 = sphi 0, %s216
      %s219 = sphi 0, %s218
      %s233 = sphi 0, %s219
      %s237 = sphi 0, %s237
      %s239 = sphi 0, %s237
      %s240 = sphi 0, %s239
      %s254 = sphi 0, %s240
      %s260 = sphi 0, %s262
      %s263 = sphi 0, %s260
      %s264 = sphi 0, %s263
      %s280 = sphi 0, %s264
    $region4: #{pointnet_seg_head_forward.4} parent=1 // loop_header_branch
      %24 = sbr.rel (%p22) target = $region8
    $region5: #{pointnet_seg_head_forward.4} parent=1 // loop_body
      %s26 = ssub.s32 %s21, 1
      %s27 = ssub.s32 %s21, 2
      %s34 = sadd.s32 1, %s29
      %p35 = scmp.ge.s32.totalorder %s34, 1
      %s36 = scalar_select %p35, 0, %s34
      %s37 = sadd.s32 1, %s28
      %s38 = scalar_select %p35, %s37, %s28
      %p39 = scmp.ge.s32.totalorder %s38, 2
      %s40 = scalar_select %p39, 0, %s38
      %s41 = ssub.s32 %s28, %s40
      %s42 = ssub.s32 %s29, %s36
      %s43 = sor.u32 %s41, %s42
      %p44 = scmp.eq.s32.totalorder %s43, 0
      %s46 = sadd.s32 %s45, 1
      %s47 = scalar_select %p44, %s45, %s46
      %p50 = pneg %p44
      %p51 = scmp.eq.s32.totalorder %s21, 1
      %p52 = por %p50, %p51
      %p53 = scmp.ne.s32.totalorder %s45, %s48
      %p54 = scmp.eq.s32.totalorder %s21, 0
      %p55 = por %p53, %p54
      %p56 = scmp.ne.s32.totalorder %s45, %s48
      %p57 = scmp.eq.s32.totalorder %s26, 1
      %p58 = por %p56, %p57
      %p59 = scmp.ne.s32.totalorder %s48, %s49
      %p60 = scmp.eq.s32.totalorder %s26, 0
      %p61 = por %p59, %p60
      %p62 = scmp.ne.s32.totalorder %s48, %s49
      %p63 = scmp.eq.s32.totalorder %s27, 1
      %p64 = por %p62, %p63
      %p66 = scmp.ne.s32.totalorder %s49, %s65
      %p67 = scmp.eq.s32.totalorder %s27, 0
      %p68 = por %p66, %p67
      %s70 = sadd.s32 %s69, 1
      %p73 = scmp.eq.s32.totalorder %s21, 1
      %p74 = scmp.ne.s32.totalorder %s69, %s71
      %p75 = scmp.eq.s32.totalorder %s21, 0
      %p76 = por %p74, %p75
      %p77 = scmp.ne.s32.totalorder %s69, %s71
      %p78 = scmp.eq.s32.totalorder %s26, 1
      %p79 = por %p77, %p78
      %p80 = scmp.ne.s32.totalorder %s71, %s72
      %p81 = scmp.eq.s32.totalorder %s26, 0
      %p82 = por %p80, %p81
      %p83 = scmp.ne.s32.totalorder %s71, %s72
      %p84 = scmp.eq.s32.totalorder %s27, 1
      %p85 = por %p83, %p84
      %p87 = scmp.ne.s32.totalorder %s72, %s86
      %p88 = scmp.eq.s32.totalorder %s27, 0
      %p89 = por %p87, %p88
      %s91 = sadd.s32 %s90, 1
      %p94 = scmp.eq.s32.totalorder %s21, 1
      %p95 = scmp.ne.s32.totalorder %s90, %s92
      %p96 = scmp.eq.s32.totalorder %s21, 0
      %p97 = por %p95, %p96
      %p98 = scmp.ne.s32.totalorder %s90, %s92
      %p99 = scmp.eq.s32.totalorder %s26, 1
      %p100 = por %p98, %p99
      %p101 = scmp.ne.s32.totalorder %s92, %s93
      %p102 = scmp.eq.s32.totalorder %s26, 0
      %p103 = por %p101, %p102
      %p104 = scmp.ne.s32.totalorder %s92, %s93
      %p105 = scmp.eq.s32.totalorder %s27, 1
      %p106 = por %p104, %p105
      %p108 = scmp.ne.s32.totalorder %s93, %s107
      %p109 = scmp.eq.s32.totalorder %s27, 0
      %p110 = por %p108, %p109
      %s112 = sadd.s32 %s111, 1
      %p115 = scmp.eq.s32.totalorder %s21, 1
      %p116 = scmp.ne.s32.totalorder %s111, %s113
      %p117 = scmp.eq.s32.totalorder %s21, 0
      %p118 = por %p116, %p117
      %p119 = scmp.ne.s32.totalorder %s111, %s113
      %p120 = scmp.eq.s32.totalorder %s26, 1
      %p121 = por %p119, %p120
      %p122 = scmp.ne.s32.totalorder %s113, %s114
      %p123 = scmp.eq.s32.totalorder %s26, 0
      %p124 = por %p122, %p123
      %p125 = scmp.ne.s32.totalorder %s113, %s114
      %p126 = scmp.eq.s32.totalorder %s27, 1
      %p127 = por %p125, %p126
      %p129 = scmp.ne.s32.totalorder %s114, %s128
      %p130 = scmp.eq.s32.totalorder %s27, 0
      %p131 = por %p129, %p130
      %s133 = sadd.s32 %s132, 1
      %p136 = scmp.eq.s32.totalorder %s21, 1
      %p137 = scmp.ne.s32.totalorder %s132, %s134
      %p138 = scmp.eq.s32.totalorder %s21, 0
      %p139 = por %p137, %p138
      %p140 = scmp.ne.s32.totalorder %s132, %s134
      %p141 = scmp.eq.s32.totalorder %s26, 1
      %p142 = por %p140, %p141
      %p143 = scmp.ne.s32.totalorder %s134, %s135
      %p144 = scmp.eq.s32.totalorder %s26, 0
      %p145 = por %p143, %p144
      %p146 = scmp.ne.s32.totalorder %s134, %s135
      %p147 = scmp.eq.s32.totalorder %s27, 1
      %p148 = por %p146, %p147
      %p150 = scmp.ne.s32.totalorder %s135, %s149
      %p151 = scmp.eq.s32.totalorder %s27, 0
      %p152 = por %p150, %p151
      %s154 = sadd.s32 %s153, 1
      %p157 = scmp.eq.s32.totalorder %s21, 1
      %p158 = scmp.ne.s32.totalorder %s153, %s155
      %p159 = scmp.eq.s32.totalorder %s21, 0
      %p160 = por %p158, %p159
      %p161 = scmp.ne.s32.totalorder %s153, %s155
      %p162 = scmp.eq.s32.totalorder %s26, 1
      %p163 = por %p161, %p162
      %p164 = scmp.ne.s32.totalorder %s155, %s156
      %p165 = scmp.eq.s32.totalorder %s26, 0
      %p166 = por %p164, %p165
      %p167 = scmp.ne.s32.totalorder %s155, %s156
      %p168 = scmp.eq.s32.totalorder %s27, 1
      %p169 = por %p167, %p168
      %p171 = scmp.ne.s32.totalorder %s156, %s170
      %p172 = scmp.eq.s32.totalorder %s27, 0
      %p173 = por %p171, %p172
      %s175 = sadd.s32 %s174, 1
      %p178 = scmp.eq.s32.totalorder %s21, 1
      %p179 = scmp.ne.s32.totalorder %s174, %s176
      %p180 = scmp.eq.s32.totalorder %s21, 0
      %p181 = por %p179, %p180
      %p182 = scmp.ne.s32.totalorder %s174, %s176
      %p183 = scmp.eq.s32.totalorder %s26, 1
      %p184 = por %p182, %p183
      %p185 = scmp.ne.s32.totalorder %s176, %s177
      %p186 = scmp.eq.s32.totalorder %s26, 0
      %p187 = por %p185, %p186
      %p188 = scmp.ne.s32.totalorder %s176, %s177
      %p189 = scmp.eq.s32.totalorder %s27, 1
      %p190 = por %p188, %p189
      %p192 = scmp.ne.s32.totalorder %s177, %s191
      %p193 = scmp.eq.s32.totalorder %s27, 0
      %p194 = por %p192, %p193
      %s196 = sadd.s32 %s195, 1
      %p199 = scmp.eq.s32.totalorder %s21, 1
      %p200 = scmp.ne.s32.totalorder %s195, %s197
      %p201 = scmp.eq.s32.totalorder %s21, 0
      %p202 = por %p200, %p201
      %p203 = scmp.ne.s32.totalorder %s195, %s197
      %p204 = scmp.eq.s32.totalorder %s26, 1
      %p205 = por %p203, %p204
      %p206 = scmp.ne.s32.totalorder %s197, %s198
      %p207 = scmp.eq.s32.totalorder %s26, 0
      %p208 = por %p206, %p207
      %p209 = scmp.ne.s32.totalorder %s197, %s198
      %p210 = scmp.eq.s32.totalorder %s27, 1
      %p211 = por %p209, %p210
      %p213 = scmp.ne.s32.totalorder %s198, %s212
      %p214 = scmp.eq.s32.totalorder %s27, 0
      %p215 = por %p213, %p214
      %s217 = sadd.s32 %s216, 1
      %p220 = scmp.eq.s32.totalorder %s21, 1
      %p221 = scmp.ne.s32.totalorder %s216, %s218
      %p222 = scmp.eq.s32.totalorder %s21, 0
      %p223 = por %p221, %p222
      %p224 = scmp.ne.s32.totalorder %s216, %s218
      %p225 = scmp.eq.s32.totalorder %s26, 1
      %p226 = por %p224, %p225
      %p227 = scmp.ne.s32.totalorder %s218, %s219
      %p228 = scmp.eq.s32.totalorder %s26, 0
      %p229 = por %p227, %p228
      %p230 = scmp.ne.s32.totalorder %s218, %s219
      %p231 = scmp.eq.s32.totalorder %s27, 1
      %p232 = por %p230, %p231
      %p234 = scmp.ne.s32.totalorder %s219, %s233
      %p235 = scmp.eq.s32.totalorder %s27, 0
      %p236 = por %p234, %p235
      %s238 = sadd.s32 %s237, 1
      %p241 = scmp.eq.s32.totalorder %s21, 1
      %p242 = scmp.ne.s32.totalorder %s237, %s239
      %p243 = scmp.eq.s32.totalorder %s21, 0
      %p244 = por %p242, %p243
      %p245 = scmp.ne.s32.totalorder %s237, %s239
      %p246 = scmp.eq.s32.totalorder %s26, 1
      %p247 = por %p245, %p246
      %p248 = scmp.ne.s32.totalorder %s239, %s240
      %p249 = scmp.eq.s32.totalorder %s26, 0
      %p250 = por %p248, %p249
      %p251 = scmp.ne.s32.totalorder %s239, %s240
      %p252 = scmp.eq.s32.totalorder %s27, 1
      %p253 = por %p251, %p252
      %p255 = scmp.ne.s32.totalorder %s240, %s254
      %p256 = scmp.eq.s32.totalorder %s27, 0
      %p257 = por %p255, %p256
      %s258 = ssub.s32 %s28, %s40
      %p259 = scmp.eq.s32.totalorder %s258, 0
      %s261 = sadd.s32 %s260, 1
      %s262 = scalar_select %p259, %s260, %s261
      %p265 = pneg %p259
      %p266 = scmp.eq.s32.totalorder %s21, 1
      %p267 = por %p265, %p266
      %p268 = scmp.ne.s32.totalorder %s260, %s263
      %p269 = scmp.eq.s32.totalorder %s21, 0
      %p270 = por %p268, %p269
      %p271 = scmp.ne.s32.totalorder %s260, %s263
      %p272 = scmp.eq.s32.totalorder %s26, 1
      %p273 = por %p271, %p272
      %p274 = scmp.ne.s32.totalorder %s263, %s264
      %p275 = scmp.eq.s32.totalorder %s26, 0
      %p276 = por %p274, %p275
      %p277 = scmp.ne.s32.totalorder %s263, %s264
      %p278 = scmp.eq.s32.totalorder %s27, 1
      %p279 = por %p277, %p278
      %p281 = scmp.ne.s32.totalorder %s264, %s280
      %p282 = scmp.eq.s32.totalorder %s27, 0
      %p283 = por %p281, %p282
      %p284 = scmp.le.s32.totalorder 1, %s21
      %p285 = scmp.lt.s32.totalorder %s21, 3
      %p286 = pnand %p284, %p285
      %p287 = pneg %p286
      // Predicated region
      $region9: #{pointnet_seg_head_forward.4} parent=5 // pred_check
        _
      $region10: #{pointnet_seg_head_forward.4} parent=5 // pred_check_branch
        %289 = sbr.rel (%p286) target = $region12
      $region11: #{pointnet_seg_head_forward.4} parent=5 // pred_region
        %s290 = ssub.s32 %s21, 1
        // Predicated region
        $region13: #{pointnet_seg_head_forward.4} parent=11 // pred_check
          %p291 = pneg %p82
        $region14: #{pointnet_seg_head_forward.4} parent=11 // pred_check_branch
          %293 = sbr.rel (%p291) target = $region16
        $region15: #{pointnet_seg_head_forward.4} parent=11 // pred_region
          _
        $region16: #{pointnet_seg_head_forward.4} parent=11 // pred_fallthru
          _
        // Predicated region
        $region17: #{pointnet_seg_head_forward.4} parent=11 // pred_check
          %p294 = pneg %p103
        $region18: #{pointnet_seg_head_forward.4} parent=11 // pred_check_branch
          %296 = sbr.rel (%p294) target = $region20
        $region19: #{pointnet_seg_head_forward.4} parent=11 // pred_region
          %298 = vsyncadd [#allocation3], 0
          %s300 = sshll.u32 %s2, 4
          %s301 = int_to_ptr.hbm [resolvable:$true] %s300
          %s302 = sshll.u32 [#allocation2], 4
          %s303 = int_to_ptr.vmem [resolvable:$true] %s302
          %305 = dma.hbm_to_vmem [thread:$0]  %s301, 16, %s303, [#allocation3]
        $region20: #{pointnet_seg_head_forward.4} parent=11 // pred_fallthru
          _
        // Predicated region
        $region21: #{pointnet_seg_head_forward.4} parent=11 // pred_check
          %p306 = pneg %p124
        $region22: #{pointnet_seg_head_forward.4} parent=11 // pred_check_branch
          %308 = sbr.rel (%p306) target = $region24
        $region23: #{pointnet_seg_head_forward.4} parent=11 // pred_region
          %310 = vsyncadd [#allocation5], 0
          %s312 = sshll.u32 %s3, 4
          %s313 = int_to_ptr.hbm [resolvable:$true] %s312
          %s314 = sshll.u32 [#allocation4], 4
          %s315 = int_to_ptr.vmem [resolvable:$true] %s314
          %317 = dma.hbm_to_vmem [thread:$0]  %s313, 16, %s315, [#allocation5]
        $region24: #{pointnet_seg_head_forward.4} parent=11 // pred_fallthru
          _
        // Predicated region
        $region25: #{pointnet_seg_head_forward.4} parent=11 // pred_check
          %p318 = pneg %p145
        $region26: #{pointnet_seg_head_forward.4} parent=11 // pred_check_branch
          %320 = sbr.rel (%p318) target = $region28
        $region27: #{pointnet_seg_head_forward.4} parent=11 // pred_region
          %322 = vsyncadd [#allocation5], 0
          %s323 = sshll.u32 %s4, 4
          %s324 = int_to_ptr.hbm [resolvable:$true] %s323
          %s325 = sshll.u32 [#allocation6], 4
          %s326 = int_to_ptr.vmem [resolvable:$true] %s325
          %331 = dma.hbm_to_vmem [thread:$0]  %s324, 512, %s326, [#allocation5], 64, 64, 4
        $region28: #{pointnet_seg_head_forward.4} parent=11 // pred_fallthru
          _
        // Predicated region
        $region29: #{pointnet_seg_head_forward.4} parent=11 // pred_check
          %p332 = pneg %p166
        $region30: #{pointnet_seg_head_forward.4} parent=11 // pred_check_branch
          %334 = sbr.rel (%p332) target = $region32
        $region31: #{pointnet_seg_head_forward.4} parent=11 // pred_region
          %336 = vsyncadd [#allocation8], 0
          %s338 = sshll.u32 %s5, 4
          %s339 = int_to_ptr.hbm [resolvable:$true] %s338
          %s340 = sshll.u32 [#allocation7], 4
          %s341 = int_to_ptr.vmem [resolvable:$true] %s340
          %343 = dma.hbm_to_vmem [thread:$0]  %s339, 16, %s341, [#allocation8]
        $region32: #{pointnet_seg_head_forward.4} parent=11 // pred_fallthru
          _
        // Predicated region
        $region33: #{pointnet_seg_head_forward.4} parent=11 // pred_check
          %p344 = pneg %p187
        $region34: #{pointnet_seg_head_forward.4} parent=11 // pred_check_branch
          %346 = sbr.rel (%p344) target = $region36
        $region35: #{pointnet_seg_head_forward.4} parent=11 // pred_region
          %348 = vsyncadd [#allocation8], 0
          %s350 = sshll.u32 %s6, 4
          %s351 = int_to_ptr.hbm [resolvable:$true] %s350
          %s352 = sshll.u32 [#allocation9], 4
          %s353 = int_to_ptr.vmem [resolvable:$true] %s352
          %355 = dma.hbm_to_vmem [thread:$0]  %s351, 16, %s353, [#allocation8]
        $region36: #{pointnet_seg_head_forward.4} parent=11 // pred_fallthru
          _
        // Predicated region
        $region37: #{pointnet_seg_head_forward.4} parent=11 // pred_check
          %p356 = pneg %p208
        $region38: #{pointnet_seg_head_forward.4} parent=11 // pred_check_branch
          %358 = sbr.rel (%p356) target = $region40
        $region39: #{pointnet_seg_head_forward.4} parent=11 // pred_region
          %360 = vsyncadd [#allocation11], 0
          %s361 = sshll.u32 %s7, 4
          %s362 = int_to_ptr.hbm [resolvable:$true] %s361
          %s363 = sshll.u32 [#allocation10], 4
          %s364 = int_to_ptr.vmem [resolvable:$true] %s363
          %369 = dma.hbm_to_vmem [thread:$0]  %s362, 8192, %s364, [#allocation11], 512, 512, 32
        $region40: #{pointnet_seg_head_forward.4} parent=11 // pred_fallthru
          _
        // Predicated region
        $region41: #{pointnet_seg_head_forward.4} parent=11 // pred_check
          %p370 = pneg %p229
        $region42: #{pointnet_seg_head_forward.4} parent=11 // pred_check_branch
          %372 = sbr.rel (%p370) target = $region44
        $region43: #{pointnet_seg_head_forward.4} parent=11 // pred_region
          %374 = vsyncadd [#allocation11], 0
          %s376 = sshll.u32 %s8, 4
          %s377 = int_to_ptr.hbm [resolvable:$true] %s376
          %s378 = sshll.u32 [#allocation12], 4
          %s379 = int_to_ptr.vmem [resolvable:$true] %s378
          %381 = dma.hbm_to_vmem [thread:$0]  %s377, 128, %s379, [#allocation11]
        $region44: #{pointnet_seg_head_forward.4} parent=11 // pred_fallthru
          _
        // Predicated region
        $region45: #{pointnet_seg_head_forward.4} parent=11 // pred_check
          %p382 = pneg %p250
        $region46: #{pointnet_seg_head_forward.4} parent=11 // pred_check_branch
          %384 = sbr.rel (%p382) target = $region48
        $region47: #{pointnet_seg_head_forward.4} parent=11 // pred_region
          %386 = vsyncadd [#allocation14], 0
          %s388 = sshll.u32 %s9, 4
          %s389 = int_to_ptr.hbm [resolvable:$true] %s388
          %s390 = sshll.u32 [#allocation13], 4
          %s391 = int_to_ptr.vmem [resolvable:$true] %s390
          %393 = dma.hbm_to_vmem [thread:$0]  %s389, 128, %s391, [#allocation14]
        $region48: #{pointnet_seg_head_forward.4} parent=11 // pred_fallthru
          _
      $region12: #{pointnet_seg_head_forward.4} parent=5 // pred_fallthru
        _
      %p394 = scmp.lt.s32.totalorder %s21, 2
      // Predicated region
      $region49: #{pointnet_seg_head_forward.4} parent=5 // pred_check
        %p395 = pneg %p394
      $region50: #{pointnet_seg_head_forward.4} parent=5 // pred_check_branch
        %397 = sbr.rel (%p395) target = $region52
      $region51: #{pointnet_seg_head_forward.4} parent=5 // pred_region
        // Predicated region
        $region53: #{pointnet_seg_head_forward.4} parent=51 // pred_check
          %p398 = pneg %p55
        $region54: #{pointnet_seg_head_forward.4} parent=51 // pred_check_branch
          %400 = sbr.rel (%p398) target = $region56
        $region55: #{pointnet_seg_head_forward.4} parent=51 // pred_region
          %s401 = smul.u32 2, %s29
          %p402 = scmp.lt.s32.totalorder %s28, 1
          %s403 = scalar_select %p402, %s28, 1
          %p404 = scmp.lt.s32.totalorder %s401, 1
          %s405 = scalar_select %p404, %s401, 1
          %s406 = smul.addr %s403, 2
          %s407 = sadd.s32 %s405, %s406
          %s408 = smul.addr %s407, 4
          %s409 = scalar_lea.vmem %s0, %s408
          %s410 = smul.u32 2, %s29
        $region56: #{pointnet_seg_head_forward.4} parent=51 // pred_fallthru
          _
      $region52: #{pointnet_seg_head_forward.4} parent=5 // pred_fallthru
        _
      %p411 = scmp.le.s32.totalorder 1, %s21
      %p412 = scmp.lt.s32.totalorder %s21, 3
      %p413 = pnand %p411, %p412
      %p414 = pneg %p413
      // Predicated region
      $region57: #{pointnet_seg_head_forward.4} parent=5 // pred_check
        _
      $region58: #{pointnet_seg_head_forward.4} parent=5 // pred_check_branch
        %416 = sbr.rel (%p413) target = $region60
      $region59: #{pointnet_seg_head_forward.4} parent=5 // pred_region
        %s417 = ssub.s32 %s21, 1
        // Predicated region
        $region61: #{pointnet_seg_head_forward.4} parent=59 // pred_check
          %p418 = pneg %p103
        $region62: #{pointnet_seg_head_forward.4} parent=59 // pred_check_branch
          %420 = sbr.rel (%p418) target = $region64
        $region63: #{pointnet_seg_head_forward.4} parent=59 // pred_region
          %422 = dma.done [#allocation3], 16
        $region64: #{pointnet_seg_head_forward.4} parent=59 // pred_fallthru
          _
        // Predicated region
        $region65: #{pointnet_seg_head_forward.4} parent=59 // pred_check
          %p423 = pneg %p124
        $region66: #{pointnet_seg_head_forward.4} parent=59 // pred_check_branch
          %425 = sbr.rel (%p423) target = $region68
        $region67: #{pointnet_seg_head_forward.4} parent=59 // pred_region
          %427 = dma.done [#allocation5], 16
        $region68: #{pointnet_seg_head_forward.4} parent=59 // pred_fallthru
          _
        // Predicated region
        $region69: #{pointnet_seg_head_forward.4} parent=59 // pred_check
          %p428 = pneg %p145
        $region70: #{pointnet_seg_head_forward.4} parent=59 // pred_check_branch
          %430 = sbr.rel (%p428) target = $region72
        $region71: #{pointnet_seg_head_forward.4} parent=59 // pred_region
          %432 = dma.done [#allocation5], 512
        $region72: #{pointnet_seg_head_forward.4} parent=59 // pred_fallthru
          _
        // Predicated region
        $region73: #{pointnet_seg_head_forward.4} parent=59 // pred_check
          %p433 = pneg %p166
        $region74: #{pointnet_seg_head_forward.4} parent=59 // pred_check_branch
          %435 = sbr.rel (%p433) target = $region76
        $region75: #{pointnet_seg_head_forward.4} parent=59 // pred_region
          %437 = dma.done [#allocation8], 16
        $region76: #{pointnet_seg_head_forward.4} parent=59 // pred_fallthru
          _
        // Predicated region
        $region77: #{pointnet_seg_head_forward.4} parent=59 // pred_check
          %p438 = pneg %p187
        $region78: #{pointnet_seg_head_forward.4} parent=59 // pred_check_branch
          %440 = sbr.rel (%p438) target = $region80
        $region79: #{pointnet_seg_head_forward.4} parent=59 // pred_region
          %442 = dma.done [#allocation8], 16
        $region80: #{pointnet_seg_head_forward.4} parent=59 // pred_fallthru
          _
        // Predicated region
        $region81: #{pointnet_seg_head_forward.4} parent=59 // pred_check
          %p443 = pneg %p208
        $region82: #{pointnet_seg_head_forward.4} parent=59 // pred_check_branch
          %445 = sbr.rel (%p443) target = $region84
        $region83: #{pointnet_seg_head_forward.4} parent=59 // pred_region
          %447 = dma.done [#allocation11], 8192
        $region84: #{pointnet_seg_head_forward.4} parent=59 // pred_fallthru
          _
        // Predicated region
        $region85: #{pointnet_seg_head_forward.4} parent=59 // pred_check
          %p448 = pneg %p229
        $region86: #{pointnet_seg_head_forward.4} parent=59 // pred_check_branch
          %450 = sbr.rel (%p448) target = $region88
        $region87: #{pointnet_seg_head_forward.4} parent=59 // pred_region
          %452 = dma.done [#allocation11], 128
        $region88: #{pointnet_seg_head_forward.4} parent=59 // pred_fallthru
          _
        // Predicated region
        $region89: #{pointnet_seg_head_forward.4} parent=59 // pred_check
          %p453 = pneg %p250
        $region90: #{pointnet_seg_head_forward.4} parent=59 // pred_check_branch
          %455 = sbr.rel (%p453) target = $region92
        $region91: #{pointnet_seg_head_forward.4} parent=59 // pred_region
          %457 = dma.done [#allocation14], 128
        $region92: #{pointnet_seg_head_forward.4} parent=59 // pred_fallthru
          _
        %s458 = smul.u32 2, %s31
        %p459 = scmp.lt.s32.totalorder %s30, 1
        %s460 = scalar_select %p459, %s30, 1
        %p461 = scmp.lt.s32.totalorder %s458, 1
        %s462 = scalar_select %p461, %s458, 1
        %s463 = smul.addr %s460, 2
        %s464 = sadd.s32 %s462, %s463
        %s465 = smul.addr %s464, 4
        %s466 = scalar_lea.vmem %s0, %s465
        %p467 = pneg %p61
        %p468 = pneg %p58
        %p469 = pneg %p82
        %p470 = pneg %p79
        %p471 = pneg %p103
        %p472 = pneg %p100
        %p473 = pneg %p124
        %p474 = pneg %p121
        %p475 = pneg %p145
        %p476 = pneg %p142
        %p477 = pneg %p166
        %p478 = pneg %p163
        %p479 = pneg %p187
        %p480 = pneg %p184
        %p481 = pneg %p208
        %p482 = pneg %p205
        %p483 = pneg %p229
        %p484 = pneg %p226
        %p485 = pneg %p250
        %p486 = pneg %p247
        %p487 = pneg %p276
        %p488 = pneg %p273
        %p489 = scmp.lt.s32.totalorder %s30, 1
        %s490 = scalar_select %p489, %s30, 1
        %s491 = smul.addr %s490, 8
        %s492 = scalar_lea.vmem %s10, %s491
        %s493 = smul.u32 2, %s31
        %p494 = scmp.lt.s32.totalorder %s30, 1
        %s495 = scalar_select %p494, %s30, 1
        %p496 = scmp.lt.s32.totalorder %s493, 1
        %s497 = scalar_select %p496, %s493, 1
        %s498 = smul.addr %s495, 2
        %s499 = sadd.s32 %s497, %s498
        %s500 = smul.addr %s499, 4
        %s501 = scalar_lea.vmem %s0, %s500
        %s502 = smul.u32 2, %s31
        %p503 = scmp.lt.s32.totalorder %s30, 1
        %s504 = scalar_select %p503, %s30, 1
        %s505 = smul.addr %s504, 8
        %s506 = scalar_lea.vmem %s10, %s505
        %v508 = vld [vmem:[%s501] sm:$0xf]
        %v509 = vld [vmem:[%s501 + $0x4] sm:$0xf]
        %v510 = vld [vmem:[%s1] sm:$0x7]
        %v513 = vunpack.c.l.b16 %v508
        %v514 = vunpack.c.l.b16 %v509
        %v515 = vpack.c.b16 %v514, %v513
        %vm516 = vcmask 48128
        %v518 = vsel %vm516, %v515, 0
        %vm520 = vcmask 1042432
        %v522 = vsel %vm520, %v510, 0
        %524 = vmatpush.bf16.msra.mxu0 0
        %525 = vmatpush.bf16.msra.mxu0 0
        %526 = vmatpush.bf16.msra.mxu0 0
        %527 = vmatpush.bf16.msra.mxu0 0
        %528 = vmatpush.bf16.msra.mxu0 0
        %529 = vmatpush.bf16.msra.mxu0 0
        %530 = vmatpush.bf16.msra.mxu0 0
        %531 = vmatpush.bf16.msra.mxu0 %v522
        %532 = vmatmul.bf16.gmra.mxu0 %v518
        %v533 = vpop.f32.mrf.mxu0
        %v534 = vadd.f32 0.0, %v533
        %v535 = vpop.f32.mrf.mxu0
        %v536 = vadd.f32 0.0, %v535
        %537 = vdwg.mxu0
        %v538 = vld [vmem:[#allocation2] sm:$0x1]
        %v540 = vperm.slane %v538, 0
        %v542 = vmul.f32 %v534, %v540
        %v543 = vmul.f32 %v536, %v540
        %v544 = vld [vmem:[#allocation4] sm:$0x1]
        %v546 = vperm.slane %v544, 0
        %v548 = vadd.f32 %v542, %v546
        %v549 = vadd.f32 %v543, %v546
        %v550 = vmax.f32 %v548, 0.0
        %v551 = vmax.f32 %v549, 0.0
        %v552 = vpack.c.bf16 %v551, %v550
        %v553 = vld [vmem:[#allocation6] sm:$0xf]
        %v554 = vld [vmem:[#allocation6 + $0x4] sm:$0xf]
        %v555 = vld [vmem:[#allocation6 + $0x8] sm:$0xf]
        %v556 = vld [vmem:[#allocation6 + $0xc] sm:$0xf]
        %v557 = vld [vmem:[#allocation6 + $0x10] sm:$0xf]
        %v558 = vld [vmem:[#allocation6 + $0x14] sm:$0xf]
        %v559 = vld [vmem:[#allocation6 + $0x18] sm:$0xf]
        %v560 = vld [vmem:[#allocation6 + $0x1c] sm:$0xf]
        %v569 = vunpack.c.l.b16 %v553
        %v570 = vunpack.c.l.b16 %v554
        %v571 = vunpack.c.l.b16 %v555
        %v572 = vunpack.c.l.b16 %v556
        %v573 = vunpack.c.l.b16 %v557
        %v574 = vunpack.c.l.b16 %v558
        %v575 = vunpack.c.l.b16 %v559
        %v576 = vunpack.c.l.b16 %v560
        %v577 = vpack.c.b16 %v570, %v569
        %v578 = vpack.c.b16 %v572, %v571
        %v579 = vpack.c.b16 %v574, %v573
        %v580 = vpack.c.b16 %v576, %v575
        %vm585 = vcmask 523264
        %v587 = vsel %vm585, %v552, 0
        %589 = vmatpush.bf16.msra.mxu0 0
        %590 = vmatpush.bf16.msra.mxu0 0
        %591 = vmatpush.bf16.msra.mxu0 0
        %592 = vmatpush.bf16.msra.mxu0 0
        %593 = vmatpush.bf16.msra.mxu0 %v580
        %594 = vmatpush.bf16.msra.mxu0 %v579
        %595 = vmatpush.bf16.msra.mxu0 %v578
        %596 = vmatpush.bf16.msra.mxu0 %v577
        %597 = vmatmul.bf16.gmra.mxu0 %v587
        %v598 = vpop.f32.mrf.mxu0
        %v599 = vadd.f32 0.0, %v598
        %v600 = vpop.f32.mrf.mxu0
        %v601 = vadd.f32 0.0, %v600
        %602 = vdwg.mxu0
        %v603 = vld [vmem:[#allocation7] sm:$0x1]
        %v605 = vperm.slane %v603, 0
        %v607 = vmul.f32 %v599, %v605
        %v608 = vmul.f32 %v601, %v605
        %v609 = vld [vmem:[#allocation9] sm:$0x1]
        %v611 = vperm.slane %v609, 0
        %v613 = vadd.f32 %v607, %v611
        %v614 = vadd.f32 %v608, %v611
        %v615 = vmax.f32 %v613, 0.0
        %v616 = vmax.f32 %v614, 0.0
        %v617 = vpack.c.bf16 %v616, %v615
        %v618 = vld [vmem:[#allocation10] sm:$0xff]
        %v619 = vld [vmem:[#allocation10 + $0x8] sm:$0xff]
        %v620 = vld [vmem:[#allocation10 + $0x10] sm:$0xff]
        %v621 = vld [vmem:[#allocation10 + $0x18] sm:$0xff]
        %v622 = vld [vmem:[#allocation10 + $0x20] sm:$0xff]
        %v623 = vld [vmem:[#allocation10 + $0x28] sm:$0xff]
        %v624 = vld [vmem:[#allocation10 + $0x30] sm:$0xff]
        %v625 = vld [vmem:[#allocation10 + $0x38] sm:$0xff]
        %v626 = vld [vmem:[#allocation10 + $0x40] sm:$0xff]
        %v627 = vld [vmem:[#allocation10 + $0x48] sm:$0xff]
        %v628 = vld [vmem:[#allocation10 + $0x50] sm:$0xff]
        %v629 = vld [vmem:[#allocation10 + $0x58] sm:$0xff]
        %v630 = vld [vmem:[#allocation10 + $0x60] sm:$0xff]
        %v631 = vld [vmem:[#allocation10 + $0x68] sm:$0xff]
        %v632 = vld [vmem:[#allocation10 + $0x70] sm:$0xff]
        %v633 = vld [vmem:[#allocation10 + $0x78] sm:$0xff]
        %v634 = vld [vmem:[#allocation10 + $0x80] sm:$0xff]
        %v635 = vld [vmem:[#allocation10 + $0x88] sm:$0xff]
        %v636 = vld [vmem:[#allocation10 + $0x90] sm:$0xff]
        %v637 = vld [vmem:[#allocation10 + $0x98] sm:$0xff]
        %v638 = vld [vmem:[#allocation10 + $0xa0] sm:$0xff]
        %v639 = vld [vmem:[#allocation10 + $0xa8] sm:$0xff]
        %v640 = vld [vmem:[#allocation10 + $0xb0] sm:$0xff]
        %v641 = vld [vmem:[#allocation10 + $0xb8] sm:$0xff]
        %v642 = vld [vmem:[#allocation10 + $0xc0] sm:$0xff]
        %v643 = vld [vmem:[#allocation10 + $0xc8] sm:$0xff]
        %v644 = vld [vmem:[#allocation10 + $0xd0] sm:$0xff]
        %v645 = vld [vmem:[#allocation10 + $0xd8] sm:$0xff]
        %v646 = vld [vmem:[#allocation10 + $0xe0] sm:$0xff]
        %v647 = vld [vmem:[#allocation10 + $0xe8] sm:$0xff]
        %v648 = vld [vmem:[#allocation10 + $0xf0] sm:$0xff]
        %v649 = vld [vmem:[#allocation10 + $0xf8] sm:$0xff]
        %v650 = vld [vmem:[#allocation10 + $0x100] sm:$0xff]
        %v651 = vld [vmem:[#allocation10 + $0x108] sm:$0xff]
        %v652 = vld [vmem:[#allocation10 + $0x110] sm:$0xff]
        %v653 = vld [vmem:[#allocation10 + $0x118] sm:$0xff]
        %v654 = vld [vmem:[#allocation10 + $0x120] sm:$0xff]
        %v655 = vld [vmem:[#allocation10 + $0x128] sm:$0xff]
        %v656 = vld [vmem:[#allocation10 + $0x130] sm:$0xff]
        %v657 = vld [vmem:[#allocation10 + $0x138] sm:$0xff]
        %v658 = vld [vmem:[#allocation10 + $0x140] sm:$0xff]
        %v659 = vld [vmem:[#allocation10 + $0x148] sm:$0xff]
        %v660 = vld [vmem:[#allocation10 + $0x150] sm:$0xff]
        %v661 = vld [vmem:[#allocation10 + $0x158] sm:$0xff]
        %v662 = vld [vmem:[#allocation10 + $0x160] sm:$0xff]
        %v663 = vld [vmem:[#allocation10 + $0x168] sm:$0xff]
        %v664 = vld [vmem:[#allocation10 + $0x170] sm:$0xff]
        %v665 = vld [vmem:[#allocation10 + $0x178] sm:$0xff]
        %v666 = vld [vmem:[#allocation10 + $0x180] sm:$0xff]
        %v667 = vld [vmem:[#allocation10 + $0x188] sm:$0xff]
        %v668 = vld [vmem:[#allocation10 + $0x190] sm:$0xff]
        %v669 = vld [vmem:[#allocation10 + $0x198] sm:$0xff]
        %v670 = vld [vmem:[#allocation10 + $0x1a0] sm:$0xff]
        %v671 = vld [vmem:[#allocation10 + $0x1a8] sm:$0xff]
        %v672 = vld [vmem:[#allocation10 + $0x1b0] sm:$0xff]
        %v673 = vld [vmem:[#allocation10 + $0x1b8] sm:$0xff]
        %v674 = vld [vmem:[#allocation10 + $0x1c0] sm:$0xff]
        %v675 = vld [vmem:[#allocation10 + $0x1c8] sm:$0xff]
        %v676 = vld [vmem:[#allocation10 + $0x1d0] sm:$0xff]
        %v677 = vld [vmem:[#allocation10 + $0x1d8] sm:$0xff]
        %v678 = vld [vmem:[#allocation10 + $0x1e0] sm:$0xff]
        %v679 = vld [vmem:[#allocation10 + $0x1e8] sm:$0xff]
        %v680 = vld [vmem:[#allocation10 + $0x1f0] sm:$0xff]
        %v681 = vld [vmem:[#allocation10 + $0x1f8] sm:$0xff]
        %v746 = vunpack.c.l.b16 %v618
        %v747 = vunpack.c.h.b16 %v618
        %v748 = vunpack.c.l.b16 %v619
        %v749 = vunpack.c.h.b16 %v619
        %v750 = vunpack.c.l.b16 %v620
        %v751 = vunpack.c.h.b16 %v620
        %v752 = vunpack.c.l.b16 %v621
        %v753 = vunpack.c.h.b16 %v621
        %v754 = vunpack.c.l.b16 %v622
        %v755 = vunpack.c.h.b16 %v622
        %v756 = vunpack.c.l.b16 %v623
        %v757 = vunpack.c.h.b16 %v623
        %v758 = vunpack.c.l.b16 %v624
        %v759 = vunpack.c.h.b16 %v624
        %v760 = vunpack.c.l.b16 %v625
        %v761 = vunpack.c.h.b16 %v625
        %v762 = vunpack.c.l.b16 %v626
        %v763 = vunpack.c.h.b16 %v626
        %v764 = vunpack.c.l.b16 %v627
        %v765 = vunpack.c.h.b16 %v627
        %v766 = vunpack.c.l.b16 %v628
        %v767 = vunpack.c.h.b16 %v628
        %v768 = vunpack.c.l.b16 %v629
        %v769 = vunpack.c.h.b16 %v629
        %v770 = vunpack.c.l.b16 %v630
        %v771 = vunpack.c.h.b16 %v630
        %v772 = vunpack.c.l.b16 %v631
        %v773 = vunpack.c.h.b16 %v631
        %v774 = vunpack.c.l.b16 %v632
        %v775 = vunpack.c.h.b16 %v632
        %v776 = vunpack.c.l.b16 %v633
        %v777 = vunpack.c.h.b16 %v633
        %v778 = vunpack.c.l.b16 %v634
        %v779 = vunpack.c.h.b16 %v634
        %v780 = vunpack.c.l.b16 %v635
        %v781 = vunpack.c.h.b16 %v635
        %v782 = vunpack.c.l.b16 %v636
        %v783 = vunpack.c.h.b16 %v636
        %v784 = vunpack.c.l.b16 %v637
        %v785 = vunpack.c.h.b16 %v637
        %v786 = vunpack.c.l.b16 %v638
        %v787 = vunpack.c.h.b16 %v638
        %v788 = vunpack.c.l.b16 %v639
        %v789 = vunpack.c.h.b16 %v639
        %v790 = vunpack.c.l.b16 %v640
        %v791 = vunpack.c.h.b16 %v640
        %v792 = vunpack.c.l.b16 %v641
        %v793 = vunpack.c.h.b16 %v641
        %v794 = vunpack.c.l.b16 %v642
        %v795 = vunpack.c.h.b16 %v642
        %v796 = vunpack.c.l.b16 %v643
        %v797 = vunpack.c.h.b16 %v643
        %v798 = vunpack.c.l.b16 %v644
        %v799 = vunpack.c.h.b16 %v644
        %v800 = vunpack.c.l.b16 %v645
        %v801 = vunpack.c.h.b16 %v645
        %v802 = vunpack.c.l.b16 %v646
        %v803 = vunpack.c.h.b16 %v646
        %v804 = vunpack.c.l.b16 %v647
        %v805 = vunpack.c.h.b16 %v647
        %v806 = vunpack.c.l.b16 %v648
        %v807 = vunpack.c.h.b16 %v648
        %v808 = vunpack.c.l.b16 %v649
        %v809 = vunpack.c.h.b16 %v649
        %v810 = vunpack.c.l.b16 %v650
        %v811 = vunpack.c.h.b16 %v650
        %v812 = vunpack.c.l.b16 %v651
        %v813 = vunpack.c.h.b16 %v651
        %v814 = vunpack.c.l.b16 %v652
        %v815 = vunpack.c.h.b16 %v652
        %v816 = vunpack.c.l.b16 %v653
        %v817 = vunpack.c.h.b16 %v653
        %v818 = vunpack.c.l.b16 %v654
        %v819 = vunpack.c.h.b16 %v654
        %v820 = vunpack.c.l.b16 %v655
        %v821 = vunpack.c.h.b16 %v655
        %v822 = vunpack.c.l.b16 %v656
        %v823 = vunpack.c.h.b16 %v656
        %v824 = vunpack.c.l.b16 %v657
        %v825 = vunpack.c.h.b16 %v657
        %v826 = vunpack.c.l.b16 %v658
        %v827 = vunpack.c.h.b16 %v658
        %v828 = vunpack.c.l.b16 %v659
        %v829 = vunpack.c.h.b16 %v659
        %v830 = vunpack.c.l.b16 %v660
        %v831 = vunpack.c.h.b16 %v660
        %v832 = vunpack.c.l.b16 %v661
        %v833 = vunpack.c.h.b16 %v661
        %v834 = vunpack.c.l.b16 %v662
        %v835 = vunpack.c.h.b16 %v662
        %v836 = vunpack.c.l.b16 %v663
        %v837 = vunpack.c.h.b16 %v663
        %v838 = vunpack.c.l.b16 %v664
        %v839 = vunpack.c.h.b16 %v664
        %v840 = vunpack.c.l.b16 %v665
        %v841 = vunpack.c.h.b16 %v665
        %v842 = vunpack.c.l.b16 %v666
        %v843 = vunpack.c.h.b16 %v666
        %v844 = vunpack.c.l.b16 %v667
        %v845 = vunpack.c.h.b16 %v667
        %v846 = vunpack.c.l.b16 %v668
        %v847 = vunpack.c.h.b16 %v668
        %v848 = vunpack.c.l.b16 %v669
        %v849 = vunpack.c.h.b16 %v669
        %v850 = vunpack.c.l.b16 %v670
        %v851 = vunpack.c.h.b16 %v670
        %v852 = vunpack.c.l.b16 %v671
        %v853 = vunpack.c.h.b16 %v671
        %v854 = vunpack.c.l.b16 %v672
        %v855 = vunpack.c.h.b16 %v672
        %v856 = vunpack.c.l.b16 %v673
        %v857 = vunpack.c.h.b16 %v673
        %v858 = vunpack.c.l.b16 %v674
        %v859 = vunpack.c.h.b16 %v674
        %v860 = vunpack.c.l.b16 %v675
        %v861 = vunpack.c.h.b16 %v675
        %v862 = vunpack.c.l.b16 %v676
        %v863 = vunpack.c.h.b16 %v676
        %v864 = vunpack.c.l.b16 %v677
        %v865 = vunpack.c.h.b16 %v677
        %v866 = vunpack.c.l.b16 %v678
        %v867 = vunpack.c.h.b16 %v678
        %v868 = vunpack.c.l.b16 %v679
        %v869 = vunpack.c.h.b16 %v679
        %v870 = vunpack.c.l.b16 %v680
        %v871 = vunpack.c.h.b16 %v680
        %v872 = vunpack.c.l.b16 %v681
        %v873 = vunpack.c.h.b16 %v681
        %v874 = vpack.c.b16 %v754, %v746
        %v875 = vpack.c.b16 %v755, %v747
        %v876 = vpack.c.b16 %v756, %v748
        %v877 = vpack.c.b16 %v757, %v749
        %v878 = vpack.c.b16 %v758, %v750
        %v879 = vpack.c.b16 %v759, %v751
        %v880 = vpack.c.b16 %v760, %v752
        %v881 = vpack.c.b16 %v761, %v753
        %v882 = vpack.c.b16 %v770, %v762
        %v883 = vpack.c.b16 %v771, %v763
        %v884 = vpack.c.b16 %v772, %v764
        %v885 = vpack.c.b16 %v773, %v765
        %v886 = vpack.c.b16 %v774, %v766
        %v887 = vpack.c.b16 %v775, %v767
        %v888 = vpack.c.b16 %v776, %v768
        %v889 = vpack.c.b16 %v777, %v769
        %v890 = vpack.c.b16 %v786, %v778
        %v891 = vpack.c.b16 %v787, %v779
        %v892 = vpack.c.b16 %v788, %v780
        %v893 = vpack.c.b16 %v789, %v781
        %v894 = vpack.c.b16 %v790, %v782
        %v895 = vpack.c.b16 %v791, %v783
        %v896 = vpack.c.b16 %v792, %v784
        %v897 = vpack.c.b16 %v793, %v785
        %v898 = vpack.c.b16 %v802, %v794
        %v899 = vpack.c.b16 %v803, %v795
        %v900 = vpack.c.b16 %v804, %v796
        %v901 = vpack.c.b16 %v805, %v797
        %v902 = vpack.c.b16 %v806, %v798
        %v903 = vpack.c.b16 %v807, %v799
        %v904 = vpack.c.b16 %v808, %v800
        %v905 = vpack.c.b16 %v809, %v801
        %v906 = vpack.c.b16 %v818, %v810
        %v907 = vpack.c.b16 %v819, %v811
        %v908 = vpack.c.b16 %v820, %v812
        %v909 = vpack.c.b16 %v821, %v813
        %v910 = vpack.c.b16 %v822, %v814
        %v911 = vpack.c.b16 %v823, %v815
        %v912 = vpack.c.b16 %v824, %v816
        %v913 = vpack.c.b16 %v825, %v817
        %v914 = vpack.c.b16 %v834, %v826
        %v915 = vpack.c.b16 %v835, %v827
        %v916 = vpack.c.b16 %v836, %v828
        %v917 = vpack.c.b16 %v837, %v829
        %v918 = vpack.c.b16 %v838, %v830
        %v919 = vpack.c.b16 %v839, %v831
        %v920 = vpack.c.b16 %v840, %v832
        %v921 = vpack.c.b16 %v841, %v833
        %v922 = vpack.c.b16 %v850, %v842
        %v923 = vpack.c.b16 %v851, %v843
        %v924 = vpack.c.b16 %v852, %v844
        %v925 = vpack.c.b16 %v853, %v845
        %v926 = vpack.c.b16 %v854, %v846
        %v927 = vpack.c.b16 %v855, %v847
        %v928 = vpack.c.b16 %v856, %v848
        %v929 = vpack.c.b16 %v857, %v849
        %v930 = vpack.c.b16 %v866, %v858
        %v931 = vpack.c.b16 %v867, %v859
        %v932 = vpack.c.b16 %v868, %v860
        %v933 = vpack.c.b16 %v869, %v861
        %v934 = vpack.c.b16 %v870, %v862
        %v935 = vpack.c.b16 %v871, %v863
        %v936 = vpack.c.b16 %v872, %v864
        %v937 = vpack.c.b16 %v873, %v865
        %1002 = vmatpush.bf16.msra.mxu0 %v930
        %1003 = vmatpush.bf16.msra.mxu0 %v922
        %1004 = vmatpush.bf16.msra.mxu0 %v914
        %1005 = vmatpush.bf16.msra.mxu0 %v906
        %1006 = vmatpush.bf16.msra.mxu0 %v898
        %1007 = vmatpush.bf16.msra.mxu0 %v890
        %1008 = vmatpush.bf16.msra.mxu0 %v882
        %1009 = vmatpush.bf16.msra.mxu0 %v874
        %1010 = vmatmul.bf16.gmra.mxu0 %v617
        %v1011 = vpop.f32.mrf.mxu0
        %v1012 = vadd.f32 0.0, %v1011
        %v1013 = vpop.f32.mrf.mxu0
        %v1014 = vadd.f32 0.0, %v1013
        %1015 = vdwg.mxu0
        %1016 = vmatpush.bf16.msra.mxu0 %v931
        %1017 = vmatpush.bf16.msra.mxu0 %v923
        %1018 = vmatpush.bf16.msra.mxu0 %v915
        %1019 = vmatpush.bf16.msra.mxu0 %v907
        %1020 = vmatpush.bf16.msra.mxu0 %v899
        %1021 = vmatpush.bf16.msra.mxu0 %v891
        %1022 = vmatpush.bf16.msra.mxu0 %v883
        %1023 = vmatpush.bf16.msra.mxu0 %v875
        %1024 = vmatmul.bf16.gmra.mxu0 %v617
        %v1025 = vpop.f32.mrf.mxu0
        %v1026 = vadd.f32 0.0, %v1025
        %v1027 = vpop.f32.mrf.mxu0
        %v1028 = vadd.f32 0.0, %v1027
        %1029 = vdwg.mxu0
        %1030 = vmatpush.bf16.msra.mxu0 %v932
        %1031 = vmatpush.bf16.msra.mxu0 %v924
        %1032 = vmatpush.bf16.msra.mxu0 %v916
        %1033 = vmatpush.bf16.msra.mxu0 %v908
        %1034 = vmatpush.bf16.msra.mxu0 %v900
        %1035 = vmatpush.bf16.msra.mxu0 %v892
        %1036 = vmatpush.bf16.msra.mxu0 %v884
        %1037 = vmatpush.bf16.msra.mxu0 %v876
        %1038 = vmatmul.bf16.gmra.mxu0 %v617
        %v1039 = vpop.f32.mrf.mxu0
        %v1040 = vadd.f32 0.0, %v1039
        %v1041 = vpop.f32.mrf.mxu0
        %v1042 = vadd.f32 0.0, %v1041
        %1043 = vdwg.mxu0
        %1044 = vmatpush.bf16.msra.mxu0 %v933
        %1045 = vmatpush.bf16.msra.mxu0 %v925
        %1046 = vmatpush.bf16.msra.mxu0 %v917
        %1047 = vmatpush.bf16.msra.mxu0 %v909
        %1048 = vmatpush.bf16.msra.mxu0 %v901
        %1049 = vmatpush.bf16.msra.mxu0 %v893
        %1050 = vmatpush.bf16.msra.mxu0 %v885
        %1051 = vmatpush.bf16.msra.mxu0 %v877
        %1052 = vmatmul.bf16.gmra.mxu0 %v617
        %v1053 = vpop.f32.mrf.mxu0
        %v1054 = vadd.f32 0.0, %v1053
        %v1055 = vpop.f32.mrf.mxu0
        %v1056 = vadd.f32 0.0, %v1055
        %1057 = vdwg.mxu0
        %1058 = vmatpush.bf16.msra.mxu0 %v934
        %1059 = vmatpush.bf16.msra.mxu0 %v926
        %1060 = vmatpush.bf16.msra.mxu0 %v918
        %1061 = vmatpush.bf16.msra.mxu0 %v910
        %1062 = vmatpush.bf16.msra.mxu0 %v902
        %1063 = vmatpush.bf16.msra.mxu0 %v894
        %1064 = vmatpush.bf16.msra.mxu0 %v886
        %1065 = vmatpush.bf16.msra.mxu0 %v878
        %1066 = vmatmul.bf16.gmra.mxu0 %v617
        %v1067 = vpop.f32.mrf.mxu0
        %v1068 = vadd.f32 0.0, %v1067
        %v1069 = vpop.f32.mrf.mxu0
        %v1070 = vadd.f32 0.0, %v1069
        %1071 = vdwg.mxu0
        %1072 = vmatpush.bf16.msra.mxu0 %v935
        %1073 = vmatpush.bf16.msra.mxu0 %v927
        %1074 = vmatpush.bf16.msra.mxu0 %v919
        %1075 = vmatpush.bf16.msra.mxu0 %v911
        %1076 = vmatpush.bf16.msra.mxu0 %v903
        %1077 = vmatpush.bf16.msra.mxu0 %v895
        %1078 = vmatpush.bf16.msra.mxu0 %v887
        %1079 = vmatpush.bf16.msra.mxu0 %v879
        %1080 = vmatmul.bf16.gmra.mxu0 %v617
        %v1081 = vpop.f32.mrf.mxu0
        %v1082 = vadd.f32 0.0, %v1081
        %v1083 = vpop.f32.mrf.mxu0
        %v1084 = vadd.f32 0.0, %v1083
        %1085 = vdwg.mxu0
        %1086 = vmatpush.bf16.msra.mxu0 %v936
        %1087 = vmatpush.bf16.msra.mxu0 %v928
        %1088 = vmatpush.bf16.msra.mxu0 %v920
        %1089 = vmatpush.bf16.msra.mxu0 %v912
        %1090 = vmatpush.bf16.msra.mxu0 %v904
        %1091 = vmatpush.bf16.msra.mxu0 %v896
        %1092 = vmatpush.bf16.msra.mxu0 %v888
        %1093 = vmatpush.bf16.msra.mxu0 %v880
        %1094 = vmatmul.bf16.gmra.mxu0 %v617
        %v1095 = vpop.f32.mrf.mxu0
        %v1096 = vadd.f32 0.0, %v1095
        %v1097 = vpop.f32.mrf.mxu0
        %v1098 = vadd.f32 0.0, %v1097
        %1099 = vdwg.mxu0
        %1100 = vmatpush.bf16.msra.mxu0 %v937
        %1101 = vmatpush.bf16.msra.mxu0 %v929
        %1102 = vmatpush.bf16.msra.mxu0 %v921
        %1103 = vmatpush.bf16.msra.mxu0 %v913
        %1104 = vmatpush.bf16.msra.mxu0 %v905
        %1105 = vmatpush.bf16.msra.mxu0 %v897
        %1106 = vmatpush.bf16.msra.mxu0 %v889
        %1107 = vmatpush.bf16.msra.mxu0 %v881
        %1108 = vmatmul.bf16.gmra.mxu0 %v617
        %v1109 = vpop.f32.mrf.mxu0
        %v1110 = vadd.f32 0.0, %v1109
        %v1111 = vpop.f32.mrf.mxu0
        %v1112 = vadd.f32 0.0, %v1111
        %1113 = vdwg.mxu0
        %v1114 = vld [vmem:[#allocation12] sm:$0xff]
        %v1116 = vperm.slane %v1114, 0
        %v1117 = vperm.slane %v1114, 1
        %v1118 = vperm.slane %v1114, 2
        %v1119 = vperm.slane %v1114, 3
        %v1120 = vperm.slane %v1114, 4
        %v1121 = vperm.slane %v1114, 5
        %v1122 = vperm.slane %v1114, 6
        %v1123 = vperm.slane %v1114, 7
        %v1132 = vmul.f32 %v1012, %v1116
        %v1133 = vmul.f32 %v1026, %v1117
        %v1134 = vmul.f32 %v1040, %v1118
        %v1135 = vmul.f32 %v1054, %v1119
        %v1136 = vmul.f32 %v1068, %v1120
        %v1137 = vmul.f32 %v1082, %v1121
        %v1138 = vmul.f32 %v1096, %v1122
        %v1139 = vmul.f32 %v1110, %v1123
        %v1140 = vmul.f32 %v1014, %v1116
        %v1141 = vmul.f32 %v1028, %v1117
        %v1142 = vmul.f32 %v1042, %v1118
        %v1143 = vmul.f32 %v1056, %v1119
        %v1144 = vmul.f32 %v1070, %v1120
        %v1145 = vmul.f32 %v1084, %v1121
        %v1146 = vmul.f32 %v1098, %v1122
        %v1147 = vmul.f32 %v1112, %v1123
        %v1148 = vld [vmem:[#allocation13] sm:$0xff]
        %v1150 = vperm.slane %v1148, 0
        %v1151 = vperm.slane %v1148, 1
        %v1152 = vperm.slane %v1148, 2
        %v1153 = vperm.slane %v1148, 3
        %v1154 = vperm.slane %v1148, 4
        %v1155 = vperm.slane %v1148, 5
        %v1156 = vperm.slane %v1148, 6
        %v1157 = vperm.slane %v1148, 7
        %v1166 = vadd.f32 %v1132, %v1150
        %v1167 = vadd.f32 %v1133, %v1151
        %v1168 = vadd.f32 %v1134, %v1152
        %v1169 = vadd.f32 %v1135, %v1153
        %v1170 = vadd.f32 %v1136, %v1154
        %v1171 = vadd.f32 %v1137, %v1155
        %v1172 = vadd.f32 %v1138, %v1156
        %v1173 = vadd.f32 %v1139, %v1157
        %v1174 = vadd.f32 %v1140, %v1150
        %v1175 = vadd.f32 %v1141, %v1151
        %v1176 = vadd.f32 %v1142, %v1152
        %v1177 = vadd.f32 %v1143, %v1153
        %v1178 = vadd.f32 %v1144, %v1154
        %v1179 = vadd.f32 %v1145, %v1155
        %v1180 = vadd.f32 %v1146, %v1156
        %v1181 = vadd.f32 %v1147, %v1157
        %v1182 = vmax.f32 %v1166, 0.0
        %v1183 = vmax.f32 %v1167, 0.0
        %v1184 = vmax.f32 %v1168, 0.0
        %v1185 = vmax.f32 %v1169, 0.0
        %v1186 = vmax.f32 %v1170, 0.0
        %v1187 = vmax.f32 %v1171, 0.0
        %v1188 = vmax.f32 %v1172, 0.0
        %v1189 = vmax.f32 %v1173, 0.0
        %v1190 = vmax.f32 %v1174, 0.0
        %v1191 = vmax.f32 %v1175, 0.0
        %v1192 = vmax.f32 %v1176, 0.0
        %v1193 = vmax.f32 %v1177, 0.0
        %v1194 = vmax.f32 %v1178, 0.0
        %v1195 = vmax.f32 %v1179, 0.0
        %v1196 = vmax.f32 %v1180, 0.0
        %v1197 = vmax.f32 %v1181, 0.0
        %p1198 = scmp.eq.s32.totalorder %s31, 0
        // Predicated region
        $region93: #{pointnet_seg_head_forward.4} parent=59 // pred_check
          %p1199 = pneg %p1198
        $region94: #{pointnet_seg_head_forward.4} parent=59 // pred_check_branch
          %1201 = sbr.rel (%p1199) target = $region96
        $region95: #{pointnet_seg_head_forward.4} parent=59 // pred_region
          %1202 = vst [vmem:[%s506] sm:$0xff] -inf
        $region96: #{pointnet_seg_head_forward.4} parent=59 // pred_fallthru
          _
        %v1203 = vld [vmem:[%s506] sm:$0xff]
        %v1204 = vmax.f32 %v1182, %v1190
        %v1205 = vrot.slane %v1204, 4
        %v1206 = vmax.f32 %v1204, %v1205
        %v1207 = vrot.slane %v1206, 2
        %v1208 = vmax.f32 %v1206, %v1207
        %v1209 = vrot.slane %v1208, 1
        %v1210 = vmax.f32 %v1208, %v1209
        %v1211 = vmax.f32 %v1183, %v1191
        %v1212 = vrot.slane %v1211, 4
        %v1213 = vmax.f32 %v1211, %v1212
        %v1214 = vrot.slane %v1213, 2
        %v1215 = vmax.f32 %v1213, %v1214
        %v1216 = vrot.slane %v1215, 1
        %v1217 = vmax.f32 %v1215, %v1216
        %v1218 = vmax.f32 %v1184, %v1192
        %v1219 = vrot.slane %v1218, 4
        %v1220 = vmax.f32 %v1218, %v1219
        %v1221 = vrot.slane %v1220, 2
        %v1222 = vmax.f32 %v1220, %v1221
        %v1223 = vrot.slane %v1222, 1
        %v1224 = vmax.f32 %v1222, %v1223
        %v1225 = vmax.f32 %v1185, %v1193
        %v1226 = vrot.slane %v1225, 4
        %v1227 = vmax.f32 %v1225, %v1226
        %v1228 = vrot.slane %v1227, 2
        %v1229 = vmax.f32 %v1227, %v1228
        %v1230 = vrot.slane %v1229, 1
        %v1231 = vmax.f32 %v1229, %v1230
        %v1232 = vmax.f32 %v1186, %v1194
        %v1233 = vrot.slane %v1232, 4
        %v1234 = vmax.f32 %v1232, %v1233
        %v1235 = vrot.slane %v1234, 2
        %v1236 = vmax.f32 %v1234, %v1235
        %v1237 = vrot.slane %v1236, 1
        %v1238 = vmax.f32 %v1236, %v1237
        %v1239 = vmax.f32 %v1187, %v1195
        %v1240 = vrot.slane %v1239, 4
        %v1241 = vmax.f32 %v1239, %v1240
        %v1242 = vrot.slane %v1241, 2
        %v1243 = vmax.f32 %v1241, %v1242
        %v1244 = vrot.slane %v1243, 1
        %v1245 = vmax.f32 %v1243, %v1244
        %v1246 = vmax.f32 %v1188, %v1196
        %v1247 = vrot.slane %v1246, 4
        %v1248 = vmax.f32 %v1246, %v1247
        %v1249 = vrot.slane %v1248, 2
        %v1250 = vmax.f32 %v1248, %v1249
        %v1251 = vrot.slane %v1250, 1
        %v1252 = vmax.f32 %v1250, %v1251
        %v1253 = vmax.f32 %v1189, %v1197
        %v1254 = vrot.slane %v1253, 4
        %v1255 = vmax.f32 %v1253, %v1254
        %v1256 = vrot.slane %v1255, 2
        %v1257 = vmax.f32 %v1255, %v1256
        %v1258 = vrot.slane %v1257, 1
        %v1259 = vmax.f32 %v1257, %v1258
        %v1268 = vrot.slane %v1217, 7
        %v1269 = vrot.slane %v1224, 6
        %v1270 = vrot.slane %v1231, 5
        %v1271 = vrot.slane %v1238, 4
        %v1272 = vrot.slane %v1245, 3
        %v1273 = vrot.slane %v1252, 2
        %v1274 = vrot.slane %v1259, 1
        %vm1275 = vcmask 1040384
        %v1276 = vsel %vm1275, %v1210, %v1268
        %vm1277 = vcmask 1042434
        %v1278 = vsel %vm1277, %v1269, %v1270
        %vm1279 = vcmask 1041408
        %v1280 = vsel %vm1279, %v1276, %v1278
        %vm1281 = vcmask 1044484
        %v1282 = vsel %vm1281, %v1271, %v1272
        %vm1283 = vcmask 1046534
        %v1284 = vsel %vm1283, %v1273, %v1274
        %vm1285 = vcmask 1045508
        %v1286 = vsel %vm1285, %v1282, %v1284
        %vm1287 = vcmask 1043456
        %v1288 = vsel %vm1287, %v1280, %v1286
        %v1290 = vmax.f32 %v1203, %v1288
        %1291 = vst [vmem:[%s506] sm:$0xff] %v1290
        %p1292 = scmp.lt.s32.totalorder %s30, 1
        %s1293 = scalar_select %p1292, %s30, 1
        %s1294 = smul.addr %s1293, 8
        %s1295 = scalar_lea.vmem %s10, %s1294
        // Predicated region
        $region97: #{pointnet_seg_head_forward.4} parent=59 // pred_check
          %p1296 = pneg %p273
        $region98: #{pointnet_seg_head_forward.4} parent=59 // pred_check_branch
          %1298 = sbr.rel (%p1296) target = $region100
        $region99: #{pointnet_seg_head_forward.4} parent=59 // pred_region
          _
        $region100: #{pointnet_seg_head_forward.4} parent=59 // pred_fallthru
          _
      $region60: #{pointnet_seg_head_forward.4} parent=5 // pred_fallthru
        _
      %p1299 = scmp.le.s32.totalorder 2, %s21
      // Predicated region
      $region101: #{pointnet_seg_head_forward.4} parent=5 // pred_check
        %p1300 = pneg %p1299
      $region102: #{pointnet_seg_head_forward.4} parent=5 // pred_check_branch
        %1302 = sbr.rel (%p1300) target = $region104
      $region103: #{pointnet_seg_head_forward.4} parent=5 // pred_region
        %s1303 = ssub.s32 %s21, 2
        // Predicated region
        $region105: #{pointnet_seg_head_forward.4} parent=103 // pred_check
          %p1304 = pneg %p279
        $region106: #{pointnet_seg_head_forward.4} parent=103 // pred_check_branch
          %1306 = sbr.rel (%p1304) target = $region108
        $region107: #{pointnet_seg_head_forward.4} parent=103 // pred_region
          %p1307 = scmp.lt.s32.totalorder %s32, 1
          %s1308 = scalar_select %p1307, %s32, 1
          %s1309 = smul.addr %s1308, 8
          %s1310 = scalar_lea.vmem %s10, %s1309
        $region108: #{pointnet_seg_head_forward.4} parent=103 // pred_fallthru
          _
      $region104: #{pointnet_seg_head_forward.4} parent=5 // pred_fallthru
        _
    $region6: #{pointnet_seg_head_forward.4} parent=1 // loop_footer
      %s25 = sadd.s32 1, %s21
    $region7: #{pointnet_seg_head_forward.4} parent=1 // loop_footer_branch
      %20 = sbr.rel target = $region3
    $region8: #{pointnet_seg_head_forward.4} parent=1 // loop_exit
      _
    %1311 = vsyncpa [#allocation3], 1
    %s1312 = scalar_lea.sflag [#allocation3], 1
    %1313 = vsyncpa %s1312, 1
    %1314 = vsyncpa [#allocation5], 1
    %1315 = vsyncpa [#allocation8], 1
    %1316 = vsyncpa [#allocation11], 1
    %1317 = vsyncpa [#allocation14], 1

// kernel: pointnet_seg_head_forward.5
$region0: #{pointnet_seg_head_forward.5}
  #allocation0 [shape = 'u32[]', space=smem, size = 0x4, offset = 0x4, fixed_abs, tag = 'smem constant byte address 0x4 - core index']
  #allocation1 [shape = 'u32[72,128]{1,0:T(1,128)}', space=vmem, size = 0x9000, scoped, tag = 'internal scratch']
  %s0 = inlined_call_operand.vmem [shape: bf16[2,16,6], index: 0, kind: input, shape index: {}]
  %s1 = inlined_call_operand.vmem [shape: bf16[2,6,64], index: 1, kind: input, shape index: {}]
  %s2 = inlined_call_operand.vmem [shape: f32[1,64], index: 2, kind: input, shape index: {}]
  %s3 = inlined_call_operand.vmem [shape: f32[1,64], index: 3, kind: input, shape index: {}]
  %s4 = inlined_call_operand.vmem [shape: bf16[64,64], index: 4, kind: input, shape index: {}]
  %s5 = inlined_call_operand.vmem [shape: f32[1,64], index: 5, kind: input, shape index: {}]
  %s6 = inlined_call_operand.vmem [shape: f32[1,64], index: 6, kind: input, shape index: {}]
  %s7 = inlined_call_operand.vmem [shape: bf16[64,64], index: 7, kind: input, shape index: {}]
  %s8 = inlined_call_operand.vmem [shape: f32[1,64], index: 8, kind: input, shape index: {}]
  %s9 = inlined_call_operand.vmem [shape: f32[1,64], index: 9, kind: input, shape index: {}]
  %s10 = inlined_call_operand.vmem [shape: bf16[64,128], index: 10, kind: input, shape index: {}]
  %s11 = inlined_call_operand.vmem [shape: f32[1,128], index: 11, kind: input, shape index: {}]
  %s12 = inlined_call_operand.vmem [shape: f32[1,128], index: 12, kind: input, shape index: {}]
  %s13 = inlined_call_operand.hbm [shape: bf16[128,1024], index: 13, kind: input, shape index: {}]
  %s14 = inlined_call_operand.vmem [shape: f32[1,1024], index: 14, kind: input, shape index: {}]
  %s15 = inlined_call_operand.vmem [shape: f32[1,1024], index: 15, kind: input, shape index: {}]
  %s16 = inlined_call_operand.vmem [shape: bf16[2,16,64], index: 16, kind: output, shape index: {0}]
  %s17 = inlined_call_operand.vmem [shape: f32[2,1,1024], index: 17, kind: output, shape index: {1}]
  %18 = xla_tuple %s16, %s17
  %s19 = sld [smem:[#allocation0]]
  $region113: #{pointnet_seg_head_forward.5} parent=0
    _
  %s21 = ssub.s32 1, %s19
  %s22 = scalar_select 0, %s21, %s19
  $region1: #{pointnet_seg_head_forward.5} parent=0
    #allocation2 [shape = 'u8[262144]{0}', space=vmem, size = 0x40000, scoped, tag = 'input window, operand 13, single buffered']
    #allocation3 [shape = 's32[2]{0}', space=sflag, size = 0x8, scoped, tag = 'scoped memory for pointnet_seg_head_forward.5']
    %23 = vsyncpa [#allocation3], 0
    loop: start=0, step=1, limit=4
    $region2: #{pointnet_seg_head_forward.5} parent=1 // loop_pre_header
      _
    $region3: #{pointnet_seg_head_forward.5} parent=1 // loop_header
      %s25 = sphi 0, %s29
      %p26 = scmp.ge.s32.totalorder %s25, 4
      %s32 = sphi 0, %s44
      %s33 = sphi 0, %s40
      %s34 = sphi 0, %s32
      %s35 = sphi 0, %s33
      %s36 = sphi 0, %s34
      %s37 = sphi 0, %s35
      %s49 = sphi 0, %s51
      %s52 = sphi 0, %s49
      %s53 = sphi 0, %s52
      %s69 = sphi 0, %s53
      %s75 = sphi 0, %s77
      %s78 = sphi 0, %s75
      %s79 = sphi 0, %s78
      %s95 = sphi 0, %s79
      %s99 = sphi 0, %s99
      %s101 = sphi 0, %s99
      %s102 = sphi 0, %s101
      %s116 = sphi 0, %s102
      %s120 = sphi 0, %s120
      %s122 = sphi 0, %s120
      %s123 = sphi 0, %s122
      %s137 = sphi 0, %s123
      %s141 = sphi 0, %s141
      %s143 = sphi 0, %s141
      %s144 = sphi 0, %s143
      %s158 = sphi 0, %s144
      %s162 = sphi 0, %s162
      %s164 = sphi 0, %s162
      %s165 = sphi 0, %s164
      %s179 = sphi 0, %s165
      %s183 = sphi 0, %s183
      %s185 = sphi 0, %s183
      %s186 = sphi 0, %s185
      %s200 = sphi 0, %s186
      %s204 = sphi 0, %s204
      %s206 = sphi 0, %s204
      %s207 = sphi 0, %s206
      %s221 = sphi 0, %s207
      %s225 = sphi 0, %s225
      %s227 = sphi 0, %s225
      %s228 = sphi 0, %s227
      %s242 = sphi 0, %s228
      %s246 = sphi 0, %s246
      %s248 = sphi 0, %s246
      %s249 = sphi 0, %s248
      %s263 = sphi 0, %s249
      %s267 = sphi 0, %s267
      %s269 = sphi 0, %s267
      %s270 = sphi 0, %s269
      %s284 = sphi 0, %s270
      %s288 = sphi 0, %s288
      %s290 = sphi 0, %s288
      %s291 = sphi 0, %s290
      %s305 = sphi 0, %s291
      %s309 = sphi 0, %s309
      %s311 = sphi 0, %s309
      %s312 = sphi 0, %s311
      %s326 = sphi 0, %s312
      %s330 = sphi 0, %s330
      %s332 = sphi 0, %s330
      %s333 = sphi 0, %s332
      %s347 = sphi 0, %s333
      %s351 = sphi 0, %s351
      %s353 = sphi 0, %s351
      %s354 = sphi 0, %s353
      %s368 = sphi 0, %s354
      %s372 = sphi 0, %s372
      %s374 = sphi 0, %s372
      %s375 = sphi 0, %s374
      %s389 = sphi 0, %s375
      %s397 = sphi 0, %s399
      %s400 = sphi 0, %s397
      %s401 = sphi 0, %s400
      %s417 = sphi 0, %s401
      %s423 = sphi 0, %s425
      %s426 = sphi 0, %s423
      %s427 = sphi 0, %s426
      %s443 = sphi 0, %s427
    $region4: #{pointnet_seg_head_forward.5} parent=1 // loop_header_branch
      %28 = sbr.rel (%p26) target = $region8
    $region5: #{pointnet_seg_head_forward.5} parent=1 // loop_body
      %s30 = ssub.s32 %s25, 1
      %s31 = ssub.s32 %s25, 2
      %s38 = sadd.s32 1, %s33
      %p39 = scmp.ge.s32.totalorder %s38, 1
      %s40 = scalar_select %p39, 0, %s38
      %s41 = sadd.s32 1, %s32
      %s42 = scalar_select %p39, %s41, %s32
      %p43 = scmp.ge.s32.totalorder %s42, 2
      %s44 = scalar_select %p43, 0, %s42
      %s45 = ssub.s32 %s32, %s44
      %s46 = ssub.s32 %s33, %s40
      %s47 = sor.u32 %s45, %s46
      %p48 = scmp.eq.s32.totalorder %s47, 0
      %s50 = sadd.s32 %s49, 1
      %s51 = scalar_select %p48, %s49, %s50
      %p54 = pneg %p48
      %p55 = scmp.eq.s32.totalorder %s25, 1
      %p56 = por %p54, %p55
      %p57 = scmp.ne.s32.totalorder %s49, %s52
      %p58 = scmp.eq.s32.totalorder %s25, 0
      %p59 = por %p57, %p58
      %p60 = scmp.ne.s32.totalorder %s49, %s52
      %p61 = scmp.eq.s32.totalorder %s30, 1
      %p62 = por %p60, %p61
      %p63 = scmp.ne.s32.totalorder %s52, %s53
      %p64 = scmp.eq.s32.totalorder %s30, 0
      %p65 = por %p63, %p64
      %p66 = scmp.ne.s32.totalorder %s52, %s53
      %p67 = scmp.eq.s32.totalorder %s31, 1
      %p68 = por %p66, %p67
      %p70 = scmp.ne.s32.totalorder %s53, %s69
      %p71 = scmp.eq.s32.totalorder %s31, 0
      %p72 = por %p70, %p71
      %s73 = ssub.s32 %s32, %s44
      %p74 = scmp.eq.s32.totalorder %s73, 0
      %s76 = sadd.s32 %s75, 1
      %s77 = scalar_select %p74, %s75, %s76
      %p80 = pneg %p74
      %p81 = scmp.eq.s32.totalorder %s25, 1
      %p82 = por %p80, %p81
      %p83 = scmp.ne.s32.totalorder %s75, %s78
      %p84 = scmp.eq.s32.totalorder %s25, 0
      %p85 = por %p83, %p84
      %p86 = scmp.ne.s32.totalorder %s75, %s78
      %p87 = scmp.eq.s32.totalorder %s30, 1
      %p88 = por %p86, %p87
      %p89 = scmp.ne.s32.totalorder %s78, %s79
      %p90 = scmp.eq.s32.totalorder %s30, 0
      %p91 = por %p89, %p90
      %p92 = scmp.ne.s32.totalorder %s78, %s79
      %p93 = scmp.eq.s32.totalorder %s31, 1
      %p94 = por %p92, %p93
      %p96 = scmp.ne.s32.totalorder %s79, %s95
      %p97 = scmp.eq.s32.totalorder %s31, 0
      %p98 = por %p96, %p97
      %s100 = sadd.s32 %s99, 1
      %p103 = scmp.eq.s32.totalorder %s25, 1
      %p104 = scmp.ne.s32.totalorder %s99, %s101
      %p105 = scmp.eq.s32.totalorder %s25, 0
      %p106 = por %p104, %p105
      %p107 = scmp.ne.s32.totalorder %s99, %s101
      %p108 = scmp.eq.s32.totalorder %s30, 1
      %p109 = por %p107, %p108
      %p110 = scmp.ne.s32.totalorder %s101, %s102
      %p111 = scmp.eq.s32.totalorder %s30, 0
      %p112 = por %p110, %p111
      %p113 = scmp.ne.s32.totalorder %s101, %s102
      %p114 = scmp.eq.s32.totalorder %s31, 1
      %p115 = por %p113, %p114
      %p117 = scmp.ne.s32.totalorder %s102, %s116
      %p118 = scmp.eq.s32.totalorder %s31, 0
      %p119 = por %p117, %p118
      %s121 = sadd.s32 %s120, 1
      %p124 = scmp.eq.s32.totalorder %s25, 1
      %p125 = scmp.ne.s32.totalorder %s120, %s122
      %p126 = scmp.eq.s32.totalorder %s25, 0
      %p127 = por %p125, %p126
      %p128 = scmp.ne.s32.totalorder %s120, %s122
      %p129 = scmp.eq.s32.totalorder %s30, 1
      %p130 = por %p128, %p129
      %p131 = scmp.ne.s32.totalorder %s122, %s123
      %p132 = scmp.eq.s32.totalorder %s30, 0
      %p133 = por %p131, %p132
      %p134 = scmp.ne.s32.totalorder %s122, %s123
      %p135 = scmp.eq.s32.totalorder %s31, 1
      %p136 = por %p134, %p135
      %p138 = scmp.ne.s32.totalorder %s123, %s137
      %p139 = scmp.eq.s32.totalorder %s31, 0
      %p140 = por %p138, %p139
      %s142 = sadd.s32 %s141, 1
      %p145 = scmp.eq.s32.totalorder %s25, 1
      %p146 = scmp.ne.s32.totalorder %s141, %s143
      %p147 = scmp.eq.s32.totalorder %s25, 0
      %p148 = por %p146, %p147
      %p149 = scmp.ne.s32.totalorder %s141, %s143
      %p150 = scmp.eq.s32.totalorder %s30, 1
      %p151 = por %p149, %p150
      %p152 = scmp.ne.s32.totalorder %s143, %s144
      %p153 = scmp.eq.s32.totalorder %s30, 0
      %p154 = por %p152, %p153
      %p155 = scmp.ne.s32.totalorder %s143, %s144
      %p156 = scmp.eq.s32.totalorder %s31, 1
      %p157 = por %p155, %p156
      %p159 = scmp.ne.s32.totalorder %s144, %s158
      %p160 = scmp.eq.s32.totalorder %s31, 0
      %p161 = por %p159, %p160
      %s163 = sadd.s32 %s162, 1
      %p166 = scmp.eq.s32.totalorder %s25, 1
      %p167 = scmp.ne.s32.totalorder %s162, %s164
      %p168 = scmp.eq.s32.totalorder %s25, 0
      %p169 = por %p167, %p168
      %p170 = scmp.ne.s32.totalorder %s162, %s164
      %p171 = scmp.eq.s32.totalorder %s30, 1
      %p172 = por %p170, %p171
      %p173 = scmp.ne.s32.totalorder %s164, %s165
      %p174 = scmp.eq.s32.totalorder %s30, 0
      %p175 = por %p173, %p174
      %p176 = scmp.ne.s32.totalorder %s164, %s165
      %p177 = scmp.eq.s32.totalorder %s31, 1
      %p178 = por %p176, %p177
      %p180 = scmp.ne.s32.totalorder %s165, %s179
      %p181 = scmp.eq.s32.totalorder %s31, 0
      %p182 = por %p180, %p181
      %s184 = sadd.s32 %s183, 1
      %p187 = scmp.eq.s32.totalorder %s25, 1
      %p188 = scmp.ne.s32.totalorder %s183, %s185
      %p189 = scmp.eq.s32.totalorder %s25, 0
      %p190 = por %p188, %p189
      %p191 = scmp.ne.s32.totalorder %s183, %s185
      %p192 = scmp.eq.s32.totalorder %s30, 1
      %p193 = por %p191, %p192
      %p194 = scmp.ne.s32.totalorder %s185, %s186
      %p195 = scmp.eq.s32.totalorder %s30, 0
      %p196 = por %p194, %p195
      %p197 = scmp.ne.s32.totalorder %s185, %s186
      %p198 = scmp.eq.s32.totalorder %s31, 1
      %p199 = por %p197, %p198
      %p201 = scmp.ne.s32.totalorder %s186, %s200
      %p202 = scmp.eq.s32.totalorder %s31, 0
      %p203 = por %p201, %p202
      %s205 = sadd.s32 %s204, 1
      %p208 = scmp.eq.s32.totalorder %s25, 1
      %p209 = scmp.ne.s32.totalorder %s204, %s206
      %p210 = scmp.eq.s32.totalorder %s25, 0
      %p211 = por %p209, %p210
      %p212 = scmp.ne.s32.totalorder %s204, %s206
      %p213 = scmp.eq.s32.totalorder %s30, 1
      %p214 = por %p212, %p213
      %p215 = scmp.ne.s32.totalorder %s206, %s207
      %p216 = scmp.eq.s32.totalorder %s30, 0
      %p217 = por %p215, %p216
      %p218 = scmp.ne.s32.totalorder %s206, %s207
      %p219 = scmp.eq.s32.totalorder %s31, 1
      %p220 = por %p218, %p219
      %p222 = scmp.ne.s32.totalorder %s207, %s221
      %p223 = scmp.eq.s32.totalorder %s31, 0
      %p224 = por %p222, %p223
      %s226 = sadd.s32 %s225, 1
      %p229 = scmp.eq.s32.totalorder %s25, 1
      %p230 = scmp.ne.s32.totalorder %s225, %s227
      %p231 = scmp.eq.s32.totalorder %s25, 0
      %p232 = por %p230, %p231
      %p233 = scmp.ne.s32.totalorder %s225, %s227
      %p234 = scmp.eq.s32.totalorder %s30, 1
      %p235 = por %p233, %p234
      %p236 = scmp.ne.s32.totalorder %s227, %s228
      %p237 = scmp.eq.s32.totalorder %s30, 0
      %p238 = por %p236, %p237
      %p239 = scmp.ne.s32.totalorder %s227, %s228
      %p240 = scmp.eq.s32.totalorder %s31, 1
      %p241 = por %p239, %p240
      %p243 = scmp.ne.s32.totalorder %s228, %s242
      %p244 = scmp.eq.s32.totalorder %s31, 0
      %p245 = por %p243, %p244
      %s247 = sadd.s32 %s246, 1
      %p250 = scmp.eq.s32.totalorder %s25, 1
      %p251 = scmp.ne.s32.totalorder %s246, %s248
      %p252 = scmp.eq.s32.totalorder %s25, 0
      %p253 = por %p251, %p252
      %p254 = scmp.ne.s32.totalorder %s246, %s248
      %p255 = scmp.eq.s32.totalorder %s30, 1
      %p256 = por %p254, %p255
      %p257 = scmp.ne.s32.totalorder %s248, %s249
      %p258 = scmp.eq.s32.totalorder %s30, 0
      %p259 = por %p257, %p258
      %p260 = scmp.ne.s32.totalorder %s248, %s249
      %p261 = scmp.eq.s32.totalorder %s31, 1
      %p262 = por %p260, %p261
      %p264 = scmp.ne.s32.totalorder %s249, %s263
      %p265 = scmp.eq.s32.totalorder %s31, 0
      %p266 = por %p264, %p265
      %s268 = sadd.s32 %s267, 1
      %p271 = scmp.eq.s32.totalorder %s25, 1
      %p272 = scmp.ne.s32.totalorder %s267, %s269
      %p273 = scmp.eq.s32.totalorder %s25, 0
      %p274 = por %p272, %p273
      %p275 = scmp.ne.s32.totalorder %s267, %s269
      %p276 = scmp.eq.s32.totalorder %s30, 1
      %p277 = por %p275, %p276
      %p278 = scmp.ne.s32.totalorder %s269, %s270
      %p279 = scmp.eq.s32.totalorder %s30, 0
      %p280 = por %p278, %p279
      %p281 = scmp.ne.s32.totalorder %s269, %s270
      %p282 = scmp.eq.s32.totalorder %s31, 1
      %p283 = por %p281, %p282
      %p285 = scmp.ne.s32.totalorder %s270, %s284
      %p286 = scmp.eq.s32.totalorder %s31, 0
      %p287 = por %p285, %p286
      %s289 = sadd.s32 %s288, 1
      %p292 = scmp.eq.s32.totalorder %s25, 1
      %p293 = scmp.ne.s32.totalorder %s288, %s290
      %p294 = scmp.eq.s32.totalorder %s25, 0
      %p295 = por %p293, %p294
      %p296 = scmp.ne.s32.totalorder %s288, %s290
      %p297 = scmp.eq.s32.totalorder %s30, 1
      %p298 = por %p296, %p297
      %p299 = scmp.ne.s32.totalorder %s290, %s291
      %p300 = scmp.eq.s32.totalorder %s30, 0
      %p301 = por %p299, %p300
      %p302 = scmp.ne.s32.totalorder %s290, %s291
      %p303 = scmp.eq.s32.totalorder %s31, 1
      %p304 = por %p302, %p303
      %p306 = scmp.ne.s32.totalorder %s291, %s305
      %p307 = scmp.eq.s32.totalorder %s31, 0
      %p308 = por %p306, %p307
      %s310 = sadd.s32 %s309, 1
      %p313 = scmp.eq.s32.totalorder %s25, 1
      %p314 = scmp.ne.s32.totalorder %s309, %s311
      %p315 = scmp.eq.s32.totalorder %s25, 0
      %p316 = por %p314, %p315
      %p317 = scmp.ne.s32.totalorder %s309, %s311
      %p318 = scmp.eq.s32.totalorder %s30, 1
      %p319 = por %p317, %p318
      %p320 = scmp.ne.s32.totalorder %s311, %s312
      %p321 = scmp.eq.s32.totalorder %s30, 0
      %p322 = por %p320, %p321
      %p323 = scmp.ne.s32.totalorder %s311, %s312
      %p324 = scmp.eq.s32.totalorder %s31, 1
      %p325 = por %p323, %p324
      %p327 = scmp.ne.s32.totalorder %s312, %s326
      %p328 = scmp.eq.s32.totalorder %s31, 0
      %p329 = por %p327, %p328
      %s331 = sadd.s32 %s330, 1
      %p334 = scmp.eq.s32.totalorder %s25, 1
      %p335 = scmp.ne.s32.totalorder %s330, %s332
      %p336 = scmp.eq.s32.totalorder %s25, 0
      %p337 = por %p335, %p336
      %p338 = scmp.ne.s32.totalorder %s330, %s332
      %p339 = scmp.eq.s32.totalorder %s30, 1
      %p340 = por %p338, %p339
      %p341 = scmp.ne.s32.totalorder %s332, %s333
      %p342 = scmp.eq.s32.totalorder %s30, 0
      %p343 = por %p341, %p342
      %p344 = scmp.ne.s32.totalorder %s332, %s333
      %p345 = scmp.eq.s32.totalorder %s31, 1
      %p346 = por %p344, %p345
      %p348 = scmp.ne.s32.totalorder %s333, %s347
      %p349 = scmp.eq.s32.totalorder %s31, 0
      %p350 = por %p348, %p349
      %s352 = sadd.s32 %s351, 1
      %p355 = scmp.eq.s32.totalorder %s25, 1
      %p356 = scmp.ne.s32.totalorder %s351, %s353
      %p357 = scmp.eq.s32.totalorder %s25, 0
      %p358 = por %p356, %p357
      %p359 = scmp.ne.s32.totalorder %s351, %s353
      %p360 = scmp.eq.s32.totalorder %s30, 1
      %p361 = por %p359, %p360
      %p362 = scmp.ne.s32.totalorder %s353, %s354
      %p363 = scmp.eq.s32.totalorder %s30, 0
      %p364 = por %p362, %p363
      %p365 = scmp.ne.s32.totalorder %s353, %s354
      %p366 = scmp.eq.s32.totalorder %s31, 1
      %p367 = por %p365, %p366
      %p369 = scmp.ne.s32.totalorder %s354, %s368
      %p370 = scmp.eq.s32.totalorder %s31, 0
      %p371 = por %p369, %p370
      %s373 = sadd.s32 %s372, 1
      %p376 = scmp.eq.s32.totalorder %s25, 1
      %p377 = scmp.ne.s32.totalorder %s372, %s374
      %p378 = scmp.eq.s32.totalorder %s25, 0
      %p379 = por %p377, %p378
      %p380 = scmp.ne.s32.totalorder %s372, %s374
      %p381 = scmp.eq.s32.totalorder %s30, 1
      %p382 = por %p380, %p381
      %p383 = scmp.ne.s32.totalorder %s374, %s375
      %p384 = scmp.eq.s32.totalorder %s30, 0
      %p385 = por %p383, %p384
      %p386 = scmp.ne.s32.totalorder %s374, %s375
      %p387 = scmp.eq.s32.totalorder %s31, 1
      %p388 = por %p386, %p387
      %p390 = scmp.ne.s32.totalorder %s375, %s389
      %p391 = scmp.eq.s32.totalorder %s31, 0
      %p392 = por %p390, %p391
      %s393 = ssub.s32 %s32, %s44
      %s394 = ssub.s32 %s33, %s40
      %s395 = sor.u32 %s393, %s394
      %p396 = scmp.eq.s32.totalorder %s395, 0
      %s398 = sadd.s32 %s397, 1
      %s399 = scalar_select %p396, %s397, %s398
      %p402 = pneg %p396
      %p403 = scmp.eq.s32.totalorder %s25, 1
      %p404 = por %p402, %p403
      %p405 = scmp.ne.s32.totalorder %s397, %s400
      %p406 = scmp.eq.s32.totalorder %s25, 0
      %p407 = por %p405, %p406
      %p408 = scmp.ne.s32.totalorder %s397, %s400
      %p409 = scmp.eq.s32.totalorder %s30, 1
      %p410 = por %p408, %p409
      %p411 = scmp.ne.s32.totalorder %s400, %s401
      %p412 = scmp.eq.s32.totalorder %s30, 0
      %p413 = por %p411, %p412
      %p414 = scmp.ne.s32.totalorder %s400, %s401
      %p415 = scmp.eq.s32.totalorder %s31, 1
      %p416 = por %p414, %p415
      %p418 = scmp.ne.s32.totalorder %s401, %s417
      %p419 = scmp.eq.s32.totalorder %s31, 0
      %p420 = por %p418, %p419
      %s421 = ssub.s32 %s32, %s44
      %p422 = scmp.eq.s32.totalorder %s421, 0
      %s424 = sadd.s32 %s423, 1
      %s425 = scalar_select %p422, %s423, %s424
      %p428 = pneg %p422
      %p429 = scmp.eq.s32.totalorder %s25, 1
      %p430 = por %p428, %p429
      %p431 = scmp.ne.s32.totalorder %s423, %s426
      %p432 = scmp.eq.s32.totalorder %s25, 0
      %p433 = por %p431, %p432
      %p434 = scmp.ne.s32.totalorder %s423, %s426
      %p435 = scmp.eq.s32.totalorder %s30, 1
      %p436 = por %p434, %p435
      %p437 = scmp.ne.s32.totalorder %s426, %s427
      %p438 = scmp.eq.s32.totalorder %s30, 0
      %p439 = por %p437, %p438
      %p440 = scmp.ne.s32.totalorder %s426, %s427
      %p441 = scmp.eq.s32.totalorder %s31, 1
      %p442 = por %p440, %p441
      %p444 = scmp.ne.s32.totalorder %s427, %s443
      %p445 = scmp.eq.s32.totalorder %s31, 0
      %p446 = por %p444, %p445
      %p447 = scmp.le.s32.totalorder 1, %s25
      %p448 = scmp.lt.s32.totalorder %s25, 3
      %p449 = pnand %p447, %p448
      %p450 = pneg %p449
      // Predicated region
      $region9: #{pointnet_seg_head_forward.5} parent=5 // pred_check
        _
      $region10: #{pointnet_seg_head_forward.5} parent=5 // pred_check_branch
        %452 = sbr.rel (%p449) target = $region12
      $region11: #{pointnet_seg_head_forward.5} parent=5 // pred_region
        %s453 = ssub.s32 %s25, 1
        // Predicated region
        $region13: #{pointnet_seg_head_forward.5} parent=11 // pred_check
          %p454 = pneg %p112
        $region14: #{pointnet_seg_head_forward.5} parent=11 // pred_check_branch
          %456 = sbr.rel (%p454) target = $region16
        $region15: #{pointnet_seg_head_forward.5} parent=11 // pred_region
          _
        $region16: #{pointnet_seg_head_forward.5} parent=11 // pred_fallthru
          _
        // Predicated region
        $region17: #{pointnet_seg_head_forward.5} parent=11 // pred_check
          %p457 = pneg %p133
        $region18: #{pointnet_seg_head_forward.5} parent=11 // pred_check_branch
          %459 = sbr.rel (%p457) target = $region20
        $region19: #{pointnet_seg_head_forward.5} parent=11 // pred_region
          _
        $region20: #{pointnet_seg_head_forward.5} parent=11 // pred_fallthru
          _
        // Predicated region
        $region21: #{pointnet_seg_head_forward.5} parent=11 // pred_check
          %p460 = pneg %p154
        $region22: #{pointnet_seg_head_forward.5} parent=11 // pred_check_branch
          %462 = sbr.rel (%p460) target = $region24
        $region23: #{pointnet_seg_head_forward.5} parent=11 // pred_region
          _
        $region24: #{pointnet_seg_head_forward.5} parent=11 // pred_fallthru
          _
        // Predicated region
        $region25: #{pointnet_seg_head_forward.5} parent=11 // pred_check
          %p463 = pneg %p175
        $region26: #{pointnet_seg_head_forward.5} parent=11 // pred_check_branch
          %465 = sbr.rel (%p463) target = $region28
        $region27: #{pointnet_seg_head_forward.5} parent=11 // pred_region
          _
        $region28: #{pointnet_seg_head_forward.5} parent=11 // pred_fallthru
          _
        // Predicated region
        $region29: #{pointnet_seg_head_forward.5} parent=11 // pred_check
          %p466 = pneg %p196
        $region30: #{pointnet_seg_head_forward.5} parent=11 // pred_check_branch
          %468 = sbr.rel (%p466) target = $region32
        $region31: #{pointnet_seg_head_forward.5} parent=11 // pred_region
          _
        $region32: #{pointnet_seg_head_forward.5} parent=11 // pred_fallthru
          _
        // Predicated region
        $region33: #{pointnet_seg_head_forward.5} parent=11 // pred_check
          %p469 = pneg %p217
        $region34: #{pointnet_seg_head_forward.5} parent=11 // pred_check_branch
          %471 = sbr.rel (%p469) target = $region36
        $region35: #{pointnet_seg_head_forward.5} parent=11 // pred_region
          _
        $region36: #{pointnet_seg_head_forward.5} parent=11 // pred_fallthru
          _
        // Predicated region
        $region37: #{pointnet_seg_head_forward.5} parent=11 // pred_check
          %p472 = pneg %p238
        $region38: #{pointnet_seg_head_forward.5} parent=11 // pred_check_branch
          %474 = sbr.rel (%p472) target = $region40
        $region39: #{pointnet_seg_head_forward.5} parent=11 // pred_region
          _
        $region40: #{pointnet_seg_head_forward.5} parent=11 // pred_fallthru
          _
        // Predicated region
        $region41: #{pointnet_seg_head_forward.5} parent=11 // pred_check
          %p475 = pneg %p259
        $region42: #{pointnet_seg_head_forward.5} parent=11 // pred_check_branch
          %477 = sbr.rel (%p475) target = $region44
        $region43: #{pointnet_seg_head_forward.5} parent=11 // pred_region
          _
        $region44: #{pointnet_seg_head_forward.5} parent=11 // pred_fallthru
          _
        // Predicated region
        $region45: #{pointnet_seg_head_forward.5} parent=11 // pred_check
          %p478 = pneg %p280
        $region46: #{pointnet_seg_head_forward.5} parent=11 // pred_check_branch
          %480 = sbr.rel (%p478) target = $region48
        $region47: #{pointnet_seg_head_forward.5} parent=11 // pred_region
          _
        $region48: #{pointnet_seg_head_forward.5} parent=11 // pred_fallthru
          _
        // Predicated region
        $region49: #{pointnet_seg_head_forward.5} parent=11 // pred_check
          %p481 = pneg %p301
        $region50: #{pointnet_seg_head_forward.5} parent=11 // pred_check_branch
          %483 = sbr.rel (%p481) target = $region52
        $region51: #{pointnet_seg_head_forward.5} parent=11 // pred_region
          _
        $region52: #{pointnet_seg_head_forward.5} parent=11 // pred_fallthru
          _
        // Predicated region
        $region53: #{pointnet_seg_head_forward.5} parent=11 // pred_check
          %p484 = pneg %p322
        $region54: #{pointnet_seg_head_forward.5} parent=11 // pred_check_branch
          %486 = sbr.rel (%p484) target = $region56
        $region55: #{pointnet_seg_head_forward.5} parent=11 // pred_region
          _
        $region56: #{pointnet_seg_head_forward.5} parent=11 // pred_fallthru
          _
        // Predicated region
        $region57: #{pointnet_seg_head_forward.5} parent=11 // pred_check
          %p487 = pneg %p343
        $region58: #{pointnet_seg_head_forward.5} parent=11 // pred_check_branch
          %489 = sbr.rel (%p487) target = $region60
        $region59: #{pointnet_seg_head_forward.5} parent=11 // pred_region
          %491 = vsyncadd [#allocation3], 0
          %s492 = sshll.u32 %s13, 4
          %s493 = int_to_ptr.hbm [resolvable:$true] %s492
          %s494 = sshll.u32 [#allocation2], 4
          %s495 = int_to_ptr.vmem [resolvable:$true] %s494
          %500 = dma.hbm_to_vmem [thread:$0]  %s493, 8192, %s495, [#allocation3], 512, 512, 32
        $region60: #{pointnet_seg_head_forward.5} parent=11 // pred_fallthru
          _
        // Predicated region
        $region61: #{pointnet_seg_head_forward.5} parent=11 // pred_check
          %p501 = pneg %p364
        $region62: #{pointnet_seg_head_forward.5} parent=11 // pred_check_branch
          %503 = sbr.rel (%p501) target = $region64
        $region63: #{pointnet_seg_head_forward.5} parent=11 // pred_region
          _
        $region64: #{pointnet_seg_head_forward.5} parent=11 // pred_fallthru
          _
        // Predicated region
        $region65: #{pointnet_seg_head_forward.5} parent=11 // pred_check
          %p504 = pneg %p385
        $region66: #{pointnet_seg_head_forward.5} parent=11 // pred_check_branch
          %506 = sbr.rel (%p504) target = $region68
        $region67: #{pointnet_seg_head_forward.5} parent=11 // pred_region
          _
        $region68: #{pointnet_seg_head_forward.5} parent=11 // pred_fallthru
          _
      $region12: #{pointnet_seg_head_forward.5} parent=5 // pred_fallthru
        _
      %p507 = scmp.lt.s32.totalorder %s25, 2
      // Predicated region
      $region69: #{pointnet_seg_head_forward.5} parent=5 // pred_check
        %p508 = pneg %p507
      $region70: #{pointnet_seg_head_forward.5} parent=5 // pred_check_branch
        %510 = sbr.rel (%p508) target = $region72
      $region71: #{pointnet_seg_head_forward.5} parent=5 // pred_region
        // Predicated region
        $region73: #{pointnet_seg_head_forward.5} parent=71 // pred_check
          %p511 = pneg %p59
        $region74: #{pointnet_seg_head_forward.5} parent=71 // pred_check_branch
          %513 = sbr.rel (%p511) target = $region76
        $region75: #{pointnet_seg_head_forward.5} parent=71 // pred_region
          %s514 = smul.u32 2, %s33
          %p515 = scmp.lt.s32.totalorder %s32, 1
          %s516 = scalar_select %p515, %s32, 1
          %p517 = scmp.lt.s32.totalorder %s514, 1
          %s518 = scalar_select %p517, %s514, 1
          %s519 = smul.addr %s516, 2
          %s520 = sadd.s32 %s518, %s519
          %s521 = smul.addr %s520, 4
          %s522 = scalar_lea.vmem %s0, %s521
          %s523 = smul.u32 2, %s33
        $region76: #{pointnet_seg_head_forward.5} parent=71 // pred_fallthru
          _
        // Predicated region
        $region77: #{pointnet_seg_head_forward.5} parent=71 // pred_check
          %p524 = pneg %p85
        $region78: #{pointnet_seg_head_forward.5} parent=71 // pred_check_branch
          %526 = sbr.rel (%p524) target = $region80
        $region79: #{pointnet_seg_head_forward.5} parent=71 // pred_region
          %p527 = scmp.lt.s32.totalorder %s32, 1
          %s528 = scalar_select %p527, %s32, 1
          %s529 = smul.addr %s528, 4
          %s530 = scalar_lea.vmem %s1, %s529
        $region80: #{pointnet_seg_head_forward.5} parent=71 // pred_fallthru
          _
      $region72: #{pointnet_seg_head_forward.5} parent=5 // pred_fallthru
        _
      %p531 = scmp.le.s32.totalorder 1, %s25
      %p532 = scmp.lt.s32.totalorder %s25, 3
      %p533 = pnand %p531, %p532
      %p534 = pneg %p533
      // Predicated region
      $region81: #{pointnet_seg_head_forward.5} parent=5 // pred_check
        _
      $region82: #{pointnet_seg_head_forward.5} parent=5 // pred_check_branch
        %536 = sbr.rel (%p533) target = $region84
      $region83: #{pointnet_seg_head_forward.5} parent=5 // pred_region
        %s537 = ssub.s32 %s25, 1
        // Predicated region
        $region85: #{pointnet_seg_head_forward.5} parent=83 // pred_check
          %p538 = pneg %p343
        $region86: #{pointnet_seg_head_forward.5} parent=83 // pred_check_branch
          %540 = sbr.rel (%p538) target = $region88
        $region87: #{pointnet_seg_head_forward.5} parent=83 // pred_region
          %542 = dma.done [#allocation3], 8192
        $region88: #{pointnet_seg_head_forward.5} parent=83 // pred_fallthru
          _
        %s543 = smul.u32 2, %s35
        %p544 = scmp.lt.s32.totalorder %s34, 1
        %s545 = scalar_select %p544, %s34, 1
        %p546 = scmp.lt.s32.totalorder %s543, 1
        %s547 = scalar_select %p546, %s543, 1
        %s548 = smul.addr %s545, 2
        %s549 = sadd.s32 %s547, %s548
        %s550 = smul.addr %s549, 4
        %s551 = scalar_lea.vmem %s0, %s550
        %p552 = pneg %p65
        %p553 = pneg %p62
        %p554 = scmp.lt.s32.totalorder %s34, 1
        %s555 = scalar_select %p554, %s34, 1
        %s556 = smul.addr %s555, 4
        %s557 = scalar_lea.vmem %s1, %s556
        %p558 = pneg %p91
        %p559 = pneg %p88
        %p560 = pneg %p112
        %p561 = pneg %p109
        %p562 = pneg %p133
        %p563 = pneg %p130
        %p564 = pneg %p154
        %p565 = pneg %p151
        %p566 = pneg %p175
        %p567 = pneg %p172
        %p568 = pneg %p196
        %p569 = pneg %p193
        %p570 = pneg %p217
        %p571 = pneg %p214
        %p572 = pneg %p238
        %p573 = pneg %p235
        %p574 = pneg %p259
        %p575 = pneg %p256
        %p576 = pneg %p280
        %p577 = pneg %p277
        %p578 = pneg %p301
        %p579 = pneg %p298
        %p580 = pneg %p322
        %p581 = pneg %p319
        %p582 = pneg %p343
        %p583 = pneg %p340
        %p584 = pneg %p364
        %p585 = pneg %p361
        %p586 = pneg %p385
        %p587 = pneg %p382
        %p588 = pneg %p413
        %p589 = pneg %p410
        %s590 = smul.u32 2, %s35
        %p591 = scmp.lt.s32.totalorder %s34, 1
        %s592 = scalar_select %p591, %s34, 1
        %p593 = scmp.lt.s32.totalorder %s590, 1
        %s594 = scalar_select %p593, %s590, 1
        %s595 = smul.addr %s592, 2
        %s596 = sadd.s32 %s594, %s595
        %s597 = smul.addr %s596, 4
        %s598 = scalar_lea.vmem %s16, %s597
        %p599 = pneg %p439
        %p600 = pneg %p436
        %p601 = scmp.lt.s32.totalorder %s34, 1
        %s602 = scalar_select %p601, %s34, 1
        %s603 = smul.addr %s602, 8
        %s604 = scalar_lea.vmem %s17, %s603
        %s605 = smul.u32 2, %s35
        %p606 = scmp.lt.s32.totalorder %s34, 1
        %s607 = scalar_select %p606, %s34, 1
        %p608 = scmp.lt.s32.totalorder %s605, 1
        %s609 = scalar_select %p608, %s605, 1
        %s610 = smul.addr %s607, 2
        %s611 = sadd.s32 %s609, %s610
        %s612 = smul.addr %s611, 4
        %s613 = scalar_lea.vmem %s0, %s612
        %s614 = smul.u32 2, %s35
        %p615 = scmp.lt.s32.totalorder %s34, 1
        %s616 = scalar_select %p615, %s34, 1
        %s617 = smul.addr %s616, 4
        %s618 = scalar_lea.vmem %s1, %s617
        %s619 = smul.u32 2, %s35
        %p620 = scmp.lt.s32.totalorder %s34, 1
        %s621 = scalar_select %p620, %s34, 1
        %p622 = scmp.lt.s32.totalorder %s619, 1
        %s623 = scalar_select %p622, %s619, 1
        %s624 = smul.addr %s621, 2
        %s625 = sadd.s32 %s623, %s624
        %s626 = smul.addr %s625, 4
        %s627 = scalar_lea.vmem %s16, %s626
        %s628 = smul.u32 2, %s35
        %p629 = scmp.lt.s32.totalorder %s34, 1
        %s630 = scalar_select %p629, %s34, 1
        %s631 = smul.addr %s630, 8
        %s632 = scalar_lea.vmem %s17, %s631
        %v634 = vld [vmem:[%s613] sm:$0xf]
        %v635 = vld [vmem:[%s613 + $0x4] sm:$0xf]
        %v636 = vld [vmem:[%s618] sm:$0x7]
        %v639 = vunpack.c.l.b16 %v634
        %v640 = vunpack.c.l.b16 %v635
        %v641 = vpack.c.b16 %v640, %v639
        %vm642 = vcmask 48128
        %v644 = vsel %vm642, %v641, 0
        %vm646 = vcmask 1042432
        %v648 = vsel %vm646, %v636, 0
        %650 = vmatpush.bf16.msra.mxu0 0
        %651 = vmatpush.bf16.msra.mxu0 0
        %652 = vmatpush.bf16.msra.mxu0 0
        %653 = vmatpush.bf16.msra.mxu0 0
        %654 = vmatpush.bf16.msra.mxu0 0
        %655 = vmatpush.bf16.msra.mxu0 0
        %656 = vmatpush.bf16.msra.mxu0 0
        %657 = vmatpush.bf16.msra.mxu0 %v648
        %658 = vmatmul.bf16.gmra.mxu0 %v644
        %v659 = vpop.f32.mrf.mxu0
        %v660 = vadd.f32 0.0, %v659
        %v661 = vpop.f32.mrf.mxu0
        %v662 = vadd.f32 0.0, %v661
        %663 = vdwg.mxu0
        %v664 = vld [vmem:[%s2] sm:$0x1]
        %v666 = vperm.slane %v664, 0
        %v668 = vmul.f32 %v660, %v666
        %v669 = vmul.f32 %v662, %v666
        %v670 = vld [vmem:[%s3] sm:$0x1]
        %v672 = vperm.slane %v670, 0
        %v674 = vadd.f32 %v668, %v672
        %v675 = vadd.f32 %v669, %v672
        %v676 = vmax.f32 %v674, 0.0
        %v677 = vmax.f32 %v675, 0.0
        %v678 = vpack.c.bf16 %v677, %v676
        %v679 = vld [vmem:[%s4] sm:$0xf]
        %v680 = vld [vmem:[%s4 + $0x4] sm:$0xf]
        %v681 = vld [vmem:[%s4 + $0x8] sm:$0xf]
        %v682 = vld [vmem:[%s4 + $0xc] sm:$0xf]
        %v683 = vld [vmem:[%s4 + $0x10] sm:$0xf]
        %v684 = vld [vmem:[%s4 + $0x14] sm:$0xf]
        %v685 = vld [vmem:[%s4 + $0x18] sm:$0xf]
        %v686 = vld [vmem:[%s4 + $0x1c] sm:$0xf]
        %v695 = vunpack.c.l.b16 %v679
        %v696 = vunpack.c.l.b16 %v680
        %v697 = vunpack.c.l.b16 %v681
        %v698 = vunpack.c.l.b16 %v682
        %v699 = vunpack.c.l.b16 %v683
        %v700 = vunpack.c.l.b16 %v684
        %v701 = vunpack.c.l.b16 %v685
        %v702 = vunpack.c.l.b16 %v686
        %v703 = vpack.c.b16 %v696, %v695
        %v704 = vpack.c.b16 %v698, %v697
        %v705 = vpack.c.b16 %v700, %v699
        %v706 = vpack.c.b16 %v702, %v701
        %vm711 = vcmask 523264
        %v713 = vsel %vm711, %v678, 0
        %715 = vmatpush.bf16.msra.mxu0 0
        %716 = vmatpush.bf16.msra.mxu0 0
        %717 = vmatpush.bf16.msra.mxu0 0
        %718 = vmatpush.bf16.msra.mxu0 0
        %719 = vmatpush.bf16.msra.mxu0 %v706
        %720 = vmatpush.bf16.msra.mxu0 %v705
        %721 = vmatpush.bf16.msra.mxu0 %v704
        %722 = vmatpush.bf16.msra.mxu0 %v703
        %723 = vmatmul.bf16.gmra.mxu0 %v713
        %v724 = vpop.f32.mrf.mxu0
        %v725 = vadd.f32 0.0, %v724
        %v726 = vpop.f32.mrf.mxu0
        %v727 = vadd.f32 0.0, %v726
        %728 = vdwg.mxu0
        %v729 = vld [vmem:[%s5] sm:$0x1]
        %v731 = vperm.slane %v729, 0
        %v733 = vmul.f32 %v725, %v731
        %v734 = vmul.f32 %v727, %v731
        %v735 = vld [vmem:[%s6] sm:$0x1]
        %v737 = vperm.slane %v735, 0
        %v739 = vadd.f32 %v733, %v737
        %v740 = vadd.f32 %v734, %v737
        %v741 = vmax.f32 %v739, 0.0
        %v742 = vmax.f32 %v740, 0.0
        %v743 = vpack.c.bf16 %v741, %v741
        %v744 = vpack.c.bf16 %v742, %v742
        %vm745 = vcmask 519168
        %746 = vst.msk [vmem:[%s627] sm:$0xf] %vm745, %v743
        %747 = vst.msk [vmem:[%s627 + $0x4] sm:$0xf] %vm745, %v744
        %v748 = vld [vmem:[%s7] sm:$0xf]
        %v749 = vld [vmem:[%s7 + $0x4] sm:$0xf]
        %v750 = vld [vmem:[%s7 + $0x8] sm:$0xf]
        %v751 = vld [vmem:[%s7 + $0xc] sm:$0xf]
        %v752 = vld [vmem:[%s7 + $0x10] sm:$0xf]
        %v753 = vld [vmem:[%s7 + $0x14] sm:$0xf]
        %v754 = vld [vmem:[%s7 + $0x18] sm:$0xf]
        %v755 = vld [vmem:[%s7 + $0x1c] sm:$0xf]
        %v758 = vunpack.c.l.b16 %v743
        %v759 = vunpack.c.l.b16 %v744
        %v760 = vpack.c.b16 %v759, %v758
        %v769 = vunpack.c.l.b16 %v748
        %v770 = vunpack.c.l.b16 %v749
        %v771 = vunpack.c.l.b16 %v750
        %v772 = vunpack.c.l.b16 %v751
        %v773 = vunpack.c.l.b16 %v752
        %v774 = vunpack.c.l.b16 %v753
        %v775 = vunpack.c.l.b16 %v754
        %v776 = vunpack.c.l.b16 %v755
        %v777 = vpack.c.b16 %v770, %v769
        %v778 = vpack.c.b16 %v772, %v771
        %v779 = vpack.c.b16 %v774, %v773
        %v780 = vpack.c.b16 %v776, %v775
        %v786 = vsel %vm711, %v760, 0
        %788 = vmatpush.bf16.msra.mxu0 0
        %789 = vmatpush.bf16.msra.mxu0 0
        %790 = vmatpush.bf16.msra.mxu0 0
        %791 = vmatpush.bf16.msra.mxu0 0
        %792 = vmatpush.bf16.msra.mxu0 %v780
        %793 = vmatpush.bf16.msra.mxu0 %v779
        %794 = vmatpush.bf16.msra.mxu0 %v778
        %795 = vmatpush.bf16.msra.mxu0 %v777
        %796 = vmatmul.bf16.gmra.mxu0 %v786
        %v797 = vpop.f32.mrf.mxu0
        %v798 = vadd.f32 0.0, %v797
        %v799 = vpop.f32.mrf.mxu0
        %v800 = vadd.f32 0.0, %v799
        %801 = vdwg.mxu0
        %v802 = vld [vmem:[%s8] sm:$0x1]
        %v804 = vperm.slane %v802, 0
        %v806 = vmul.f32 %v798, %v804
        %v807 = vmul.f32 %v800, %v804
        %v808 = vld [vmem:[%s9] sm:$0x1]
        %v810 = vperm.slane %v808, 0
        %v812 = vadd.f32 %v806, %v810
        %v813 = vadd.f32 %v807, %v810
        %v814 = vmax.f32 %v812, 0.0
        %v815 = vmax.f32 %v813, 0.0
        %v816 = vpack.c.bf16 %v815, %v814
        %v817 = vld [vmem:[%s10] sm:$0xf]
        %v818 = vld [vmem:[%s10 + $0x4] sm:$0xf]
        %v819 = vld [vmem:[%s10 + $0x8] sm:$0xf]
        %v820 = vld [vmem:[%s10 + $0xc] sm:$0xf]
        %v821 = vld [vmem:[%s10 + $0x10] sm:$0xf]
        %v822 = vld [vmem:[%s10 + $0x14] sm:$0xf]
        %v823 = vld [vmem:[%s10 + $0x18] sm:$0xf]
        %v824 = vld [vmem:[%s10 + $0x1c] sm:$0xf]
        %v833 = vunpack.c.l.b16 %v817
        %v834 = vunpack.c.l.b16 %v818
        %v835 = vunpack.c.l.b16 %v819
        %v836 = vunpack.c.l.b16 %v820
        %v837 = vunpack.c.l.b16 %v821
        %v838 = vunpack.c.l.b16 %v822
        %v839 = vunpack.c.l.b16 %v823
        %v840 = vunpack.c.l.b16 %v824
        %v841 = vpack.c.b16 %v834, %v833
        %v842 = vpack.c.b16 %v836, %v835
        %v843 = vpack.c.b16 %v838, %v837
        %v844 = vpack.c.b16 %v840, %v839
        %v850 = vsel %vm711, %v816, 0
        %852 = vmatpush.bf16.msra.mxu0 0
        %853 = vmatpush.bf16.msra.mxu0 0
        %854 = vmatpush.bf16.msra.mxu0 0
        %855 = vmatpush.bf16.msra.mxu0 0
        %856 = vmatpush.bf16.msra.mxu0 %v844
        %857 = vmatpush.bf16.msra.mxu0 %v843
        %858 = vmatpush.bf16.msra.mxu0 %v842
        %859 = vmatpush.bf16.msra.mxu0 %v841
        %860 = vmatmul.bf16.gmra.mxu0 %v850
        %v861 = vpop.f32.mrf.mxu0
        %v862 = vadd.f32 0.0, %v861
        %v863 = vpop.f32.mrf.mxu0
        %v864 = vadd.f32 0.0, %v863
        %865 = vdwg.mxu0
        %v866 = vld [vmem:[%s11] sm:$0x1]
        %v868 = vperm.slane %v866, 0
        %v870 = vmul.f32 %v862, %v868
        %v871 = vmul.f32 %v864, %v868
        %v872 = vld [vmem:[%s12] sm:$0x1]
        %v874 = vperm.slane %v872, 0
        %v876 = vadd.f32 %v870, %v874
        %v877 = vadd.f32 %v871, %v874
        %v878 = vmax.f32 %v876, 0.0
        %v879 = vmax.f32 %v877, 0.0
        %v880 = vpack.c.bf16 %v879, %v878
        %v881 = vld [vmem:[#allocation2] sm:$0xff]
        %v882 = vld [vmem:[#allocation2 + $0x8] sm:$0xff]
        %v883 = vld [vmem:[#allocation2 + $0x10] sm:$0xff]
        %v884 = vld [vmem:[#allocation2 + $0x18] sm:$0xff]
        %v885 = vld [vmem:[#allocation2 + $0x20] sm:$0xff]
        %v886 = vld [vmem:[#allocation2 + $0x28] sm:$0xff]
        %v887 = vld [vmem:[#allocation2 + $0x30] sm:$0xff]
        %v888 = vld [vmem:[#allocation2 + $0x38] sm:$0xff]
        %v889 = vld [vmem:[#allocation2 + $0x40] sm:$0xff]
        %v890 = vld [vmem:[#allocation2 + $0x48] sm:$0xff]
        %v891 = vld [vmem:[#allocation2 + $0x50] sm:$0xff]
        %v892 = vld [vmem:[#allocation2 + $0x58] sm:$0xff]
        %v893 = vld [vmem:[#allocation2 + $0x60] sm:$0xff]
        %v894 = vld [vmem:[#allocation2 + $0x68] sm:$0xff]
        %v895 = vld [vmem:[#allocation2 + $0x70] sm:$0xff]
        %v896 = vld [vmem:[#allocation2 + $0x78] sm:$0xff]
        %v897 = vld [vmem:[#allocation2 + $0x80] sm:$0xff]
        %v898 = vld [vmem:[#allocation2 + $0x88] sm:$0xff]
        %v899 = vld [vmem:[#allocation2 + $0x90] sm:$0xff]
        %v900 = vld [vmem:[#allocation2 + $0x98] sm:$0xff]
        %v901 = vld [vmem:[#allocation2 + $0xa0] sm:$0xff]
        %v902 = vld [vmem:[#allocation2 + $0xa8] sm:$0xff]
        %v903 = vld [vmem:[#allocation2 + $0xb0] sm:$0xff]
        %v904 = vld [vmem:[#allocation2 + $0xb8] sm:$0xff]
        %v905 = vld [vmem:[#allocation2 + $0xc0] sm:$0xff]
        %v906 = vld [vmem:[#allocation2 + $0xc8] sm:$0xff]
        %v907 = vld [vmem:[#allocation2 + $0xd0] sm:$0xff]
        %v908 = vld [vmem:[#allocation2 + $0xd8] sm:$0xff]
        %v909 = vld [vmem:[#allocation2 + $0xe0] sm:$0xff]
        %v910 = vld [vmem:[#allocation2 + $0xe8] sm:$0xff]
        %v911 = vld [vmem:[#allocation2 + $0xf0] sm:$0xff]
        %v912 = vld [vmem:[#allocation2 + $0xf8] sm:$0xff]
        %v913 = vld [vmem:[#allocation2 + $0x100] sm:$0xff]
        %v914 = vld [vmem:[#allocation2 + $0x108] sm:$0xff]
        %v915 = vld [vmem:[#allocation2 + $0x110] sm:$0xff]
        %v916 = vld [vmem:[#allocation2 + $0x118] sm:$0xff]
        %v917 = vld [vmem:[#allocation2 + $0x120] sm:$0xff]
        %v918 = vld [vmem:[#allocation2 + $0x128] sm:$0xff]
        %v919 = vld [vmem:[#allocation2 + $0x130] sm:$0xff]
        %v920 = vld [vmem:[#allocation2 + $0x138] sm:$0xff]
        %v921 = vld [vmem:[#allocation2 + $0x140] sm:$0xff]
        %v922 = vld [vmem:[#allocation2 + $0x148] sm:$0xff]
        %v923 = vld [vmem:[#allocation2 + $0x150] sm:$0xff]
        %v924 = vld [vmem:[#allocation2 + $0x158] sm:$0xff]
        %v925 = vld [vmem:[#allocation2 + $0x160] sm:$0xff]
        %v926 = vld [vmem:[#allocation2 + $0x168] sm:$0xff]
        %v927 = vld [vmem:[#allocation2 + $0x170] sm:$0xff]
        %v928 = vld [vmem:[#allocation2 + $0x178] sm:$0xff]
        %v929 = vld [vmem:[#allocation2 + $0x180] sm:$0xff]
        %v930 = vld [vmem:[#allocation2 + $0x188] sm:$0xff]
        %v931 = vld [vmem:[#allocation2 + $0x190] sm:$0xff]
        %v932 = vld [vmem:[#allocation2 + $0x198] sm:$0xff]
        %v933 = vld [vmem:[#allocation2 + $0x1a0] sm:$0xff]
        %v934 = vld [vmem:[#allocation2 + $0x1a8] sm:$0xff]
        %v935 = vld [vmem:[#allocation2 + $0x1b0] sm:$0xff]
        %v936 = vld [vmem:[#allocation2 + $0x1b8] sm:$0xff]
        %v937 = vld [vmem:[#allocation2 + $0x1c0] sm:$0xff]
        %v938 = vld [vmem:[#allocation2 + $0x1c8] sm:$0xff]
        %v939 = vld [vmem:[#allocation2 + $0x1d0] sm:$0xff]
        %v940 = vld [vmem:[#allocation2 + $0x1d8] sm:$0xff]
        %v941 = vld [vmem:[#allocation2 + $0x1e0] sm:$0xff]
        %v942 = vld [vmem:[#allocation2 + $0x1e8] sm:$0xff]
        %v943 = vld [vmem:[#allocation2 + $0x1f0] sm:$0xff]
        %v944 = vld [vmem:[#allocation2 + $0x1f8] sm:$0xff]
        %v1009 = vunpack.c.l.b16 %v881
        %v1010 = vunpack.c.h.b16 %v881
        %v1011 = vunpack.c.l.b16 %v882
        %v1012 = vunpack.c.h.b16 %v882
        %v1013 = vunpack.c.l.b16 %v883
        %v1014 = vunpack.c.h.b16 %v883
        %v1015 = vunpack.c.l.b16 %v884
        %v1016 = vunpack.c.h.b16 %v884
        %v1017 = vunpack.c.l.b16 %v885
        %v1018 = vunpack.c.h.b16 %v885
        %v1019 = vunpack.c.l.b16 %v886
        %v1020 = vunpack.c.h.b16 %v886
        %v1021 = vunpack.c.l.b16 %v887
        %v1022 = vunpack.c.h.b16 %v887
        %v1023 = vunpack.c.l.b16 %v888
        %v1024 = vunpack.c.h.b16 %v888
        %v1025 = vunpack.c.l.b16 %v889
        %v1026 = vunpack.c.h.b16 %v889
        %v1027 = vunpack.c.l.b16 %v890
        %v1028 = vunpack.c.h.b16 %v890
        %v1029 = vunpack.c.l.b16 %v891
        %v1030 = vunpack.c.h.b16 %v891
        %v1031 = vunpack.c.l.b16 %v892
        %v1032 = vunpack.c.h.b16 %v892
        %v1033 = vunpack.c.l.b16 %v893
        %v1034 = vunpack.c.h.b16 %v893
        %v1035 = vunpack.c.l.b16 %v894
        %v1036 = vunpack.c.h.b16 %v894
        %v1037 = vunpack.c.l.b16 %v895
        %v1038 = vunpack.c.h.b16 %v895
        %v1039 = vunpack.c.l.b16 %v896
        %v1040 = vunpack.c.h.b16 %v896
        %v1041 = vunpack.c.l.b16 %v897
        %v1042 = vunpack.c.h.b16 %v897
        %v1043 = vunpack.c.l.b16 %v898
        %v1044 = vunpack.c.h.b16 %v898
        %v1045 = vunpack.c.l.b16 %v899
        %v1046 = vunpack.c.h.b16 %v899
        %v1047 = vunpack.c.l.b16 %v900
        %v1048 = vunpack.c.h.b16 %v900
        %v1049 = vunpack.c.l.b16 %v901
        %v1050 = vunpack.c.h.b16 %v901
        %v1051 = vunpack.c.l.b16 %v902
        %v1052 = vunpack.c.h.b16 %v902
        %v1053 = vunpack.c.l.b16 %v903
        %v1054 = vunpack.c.h.b16 %v903
        %v1055 = vunpack.c.l.b16 %v904
        %v1056 = vunpack.c.h.b16 %v904
        %v1057 = vunpack.c.l.b16 %v905
        %v1058 = vunpack.c.h.b16 %v905
        %v1059 = vunpack.c.l.b16 %v906
        %v1060 = vunpack.c.h.b16 %v906
        %v1061 = vunpack.c.l.b16 %v907
        %v1062 = vunpack.c.h.b16 %v907
        %v1063 = vunpack.c.l.b16 %v908
        %v1064 = vunpack.c.h.b16 %v908
        %v1065 = vunpack.c.l.b16 %v909
        %v1066 = vunpack.c.h.b16 %v909
        %v1067 = vunpack.c.l.b16 %v910
        %v1068 = vunpack.c.h.b16 %v910
        %v1069 = vunpack.c.l.b16 %v911
        %v1070 = vunpack.c.h.b16 %v911
        %v1071 = vunpack.c.l.b16 %v912
        %v1072 = vunpack.c.h.b16 %v912
        %v1073 = vunpack.c.l.b16 %v913
        %v1074 = vunpack.c.h.b16 %v913
        %v1075 = vunpack.c.l.b16 %v914
        %v1076 = vunpack.c.h.b16 %v914
        %v1077 = vunpack.c.l.b16 %v915
        %v1078 = vunpack.c.h.b16 %v915
        %v1079 = vunpack.c.l.b16 %v916
        %v1080 = vunpack.c.h.b16 %v916
        %v1081 = vunpack.c.l.b16 %v917
        %v1082 = vunpack.c.h.b16 %v917
        %v1083 = vunpack.c.l.b16 %v918
        %v1084 = vunpack.c.h.b16 %v918
        %v1085 = vunpack.c.l.b16 %v919
        %v1086 = vunpack.c.h.b16 %v919
        %v1087 = vunpack.c.l.b16 %v920
        %v1088 = vunpack.c.h.b16 %v920
        %v1089 = vunpack.c.l.b16 %v921
        %v1090 = vunpack.c.h.b16 %v921
        %v1091 = vunpack.c.l.b16 %v922
        %v1092 = vunpack.c.h.b16 %v922
        %v1093 = vunpack.c.l.b16 %v923
        %v1094 = vunpack.c.h.b16 %v923
        %v1095 = vunpack.c.l.b16 %v924
        %v1096 = vunpack.c.h.b16 %v924
        %v1097 = vunpack.c.l.b16 %v925
        %v1098 = vunpack.c.h.b16 %v925
        %v1099 = vunpack.c.l.b16 %v926
        %v1100 = vunpack.c.h.b16 %v926
        %v1101 = vunpack.c.l.b16 %v927
        %v1102 = vunpack.c.h.b16 %v927
        %v1103 = vunpack.c.l.b16 %v928
        %v1104 = vunpack.c.h.b16 %v928
        %v1105 = vunpack.c.l.b16 %v929
        %v1106 = vunpack.c.h.b16 %v929
        %v1107 = vunpack.c.l.b16 %v930
        %v1108 = vunpack.c.h.b16 %v930
        %v1109 = vunpack.c.l.b16 %v931
        %v1110 = vunpack.c.h.b16 %v931
        %v1111 = vunpack.c.l.b16 %v932
        %v1112 = vunpack.c.h.b16 %v932
        %v1113 = vunpack.c.l.b16 %v933
        %v1114 = vunpack.c.h.b16 %v933
        %v1115 = vunpack.c.l.b16 %v934
        %v1116 = vunpack.c.h.b16 %v934
        %v1117 = vunpack.c.l.b16 %v935
        %v1118 = vunpack.c.h.b16 %v935
        %v1119 = vunpack.c.l.b16 %v936
        %v1120 = vunpack.c.h.b16 %v936
        %v1121 = vunpack.c.l.b16 %v937
        %v1122 = vunpack.c.h.b16 %v937
        %v1123 = vunpack.c.l.b16 %v938
        %v1124 = vunpack.c.h.b16 %v938
        %v1125 = vunpack.c.l.b16 %v939
        %v1126 = vunpack.c.h.b16 %v939
        %v1127 = vunpack.c.l.b16 %v940
        %v1128 = vunpack.c.h.b16 %v940
        %v1129 = vunpack.c.l.b16 %v941
        %v1130 = vunpack.c.h.b16 %v941
        %v1131 = vunpack.c.l.b16 %v942
        %v1132 = vunpack.c.h.b16 %v942
        %v1133 = vunpack.c.l.b16 %v943
        %v1134 = vunpack.c.h.b16 %v943
        %v1135 = vunpack.c.l.b16 %v944
        %v1136 = vunpack.c.h.b16 %v944
        %v1137 = vpack.c.b16 %v1017, %v1009
        %v1138 = vpack.c.b16 %v1018, %v1010
        %v1139 = vpack.c.b16 %v1019, %v1011
        %v1140 = vpack.c.b16 %v1020, %v1012
        %v1141 = vpack.c.b16 %v1021, %v1013
        %v1142 = vpack.c.b16 %v1022, %v1014
        %v1143 = vpack.c.b16 %v1023, %v1015
        %v1144 = vpack.c.b16 %v1024, %v1016
        %v1145 = vpack.c.b16 %v1033, %v1025
        %v1146 = vpack.c.b16 %v1034, %v1026
        %v1147 = vpack.c.b16 %v1035, %v1027
        %v1148 = vpack.c.b16 %v1036, %v1028
        %v1149 = vpack.c.b16 %v1037, %v1029
        %v1150 = vpack.c.b16 %v1038, %v1030
        %v1151 = vpack.c.b16 %v1039, %v1031
        %v1152 = vpack.c.b16 %v1040, %v1032
        %v1153 = vpack.c.b16 %v1049, %v1041
        %v1154 = vpack.c.b16 %v1050, %v1042
        %v1155 = vpack.c.b16 %v1051, %v1043
        %v1156 = vpack.c.b16 %v1052, %v1044
        %v1157 = vpack.c.b16 %v1053, %v1045
        %v1158 = vpack.c.b16 %v1054, %v1046
        %v1159 = vpack.c.b16 %v1055, %v1047
        %v1160 = vpack.c.b16 %v1056, %v1048
        %v1161 = vpack.c.b16 %v1065, %v1057
        %v1162 = vpack.c.b16 %v1066, %v1058
        %v1163 = vpack.c.b16 %v1067, %v1059
        %v1164 = vpack.c.b16 %v1068, %v1060
        %v1165 = vpack.c.b16 %v1069, %v1061
        %v1166 = vpack.c.b16 %v1070, %v1062
        %v1167 = vpack.c.b16 %v1071, %v1063
        %v1168 = vpack.c.b16 %v1072, %v1064
        %v1169 = vpack.c.b16 %v1081, %v1073
        %v1170 = vpack.c.b16 %v1082, %v1074
        %v1171 = vpack.c.b16 %v1083, %v1075
        %v1172 = vpack.c.b16 %v1084, %v1076
        %v1173 = vpack.c.b16 %v1085, %v1077
        %v1174 = vpack.c.b16 %v1086, %v1078
        %v1175 = vpack.c.b16 %v1087, %v1079
        %v1176 = vpack.c.b16 %v1088, %v1080
        %v1177 = vpack.c.b16 %v1097, %v1089
        %v1178 = vpack.c.b16 %v1098, %v1090
        %v1179 = vpack.c.b16 %v1099, %v1091
        %v1180 = vpack.c.b16 %v1100, %v1092
        %v1181 = vpack.c.b16 %v1101, %v1093
        %v1182 = vpack.c.b16 %v1102, %v1094
        %v1183 = vpack.c.b16 %v1103, %v1095
        %v1184 = vpack.c.b16 %v1104, %v1096
        %v1185 = vpack.c.b16 %v1113, %v1105
        %v1186 = vpack.c.b16 %v1114, %v1106
        %v1187 = vpack.c.b16 %v1115, %v1107
        %v1188 = vpack.c.b16 %v1116, %v1108
        %v1189 = vpack.c.b16 %v1117, %v1109
        %v1190 = vpack.c.b16 %v1118, %v1110
        %v1191 = vpack.c.b16 %v1119, %v1111
        %v1192 = vpack.c.b16 %v1120, %v1112
        %v1193 = vpack.c.b16 %v1129, %v1121
        %v1194 = vpack.c.b16 %v1130, %v1122
        %v1195 = vpack.c.b16 %v1131, %v1123
        %v1196 = vpack.c.b16 %v1132, %v1124
        %v1197 = vpack.c.b16 %v1133, %v1125
        %v1198 = vpack.c.b16 %v1134, %v1126
        %v1199 = vpack.c.b16 %v1135, %v1127
        %v1200 = vpack.c.b16 %v1136, %v1128
        %1265 = vmatpush.bf16.msra.mxu0 %v1193
        %1266 = vmatpush.bf16.msra.mxu0 %v1185
        %1267 = vmatpush.bf16.msra.mxu0 %v1177
        %1268 = vmatpush.bf16.msra.mxu0 %v1169
        %1269 = vmatpush.bf16.msra.mxu0 %v1161
        %1270 = vmatpush.bf16.msra.mxu0 %v1153
        %1271 = vmatpush.bf16.msra.mxu0 %v1145
        %1272 = vmatpush.bf16.msra.mxu0 %v1137
        %1273 = vmatmul.bf16.gmra.mxu0 %v880
        %v1274 = vpop.f32.mrf.mxu0
        %v1275 = vadd.f32 0.0, %v1274
        %v1276 = vpop.f32.mrf.mxu0
        %v1277 = vadd.f32 0.0, %v1276
        %1278 = vdwg.mxu0
        %1279 = vmatpush.bf16.msra.mxu0 %v1194
        %1280 = vmatpush.bf16.msra.mxu0 %v1186
        %1281 = vmatpush.bf16.msra.mxu0 %v1178
        %1282 = vmatpush.bf16.msra.mxu0 %v1170
        %1283 = vmatpush.bf16.msra.mxu0 %v1162
        %1284 = vmatpush.bf16.msra.mxu0 %v1154
        %1285 = vmatpush.bf16.msra.mxu0 %v1146
        %1286 = vmatpush.bf16.msra.mxu0 %v1138
        %1287 = vmatmul.bf16.gmra.mxu0 %v880
        %v1288 = vpop.f32.mrf.mxu0
        %v1289 = vadd.f32 0.0, %v1288
        %v1290 = vpop.f32.mrf.mxu0
        %v1291 = vadd.f32 0.0, %v1290
        %1292 = vdwg.mxu0
        %1293 = vmatpush.bf16.msra.mxu0 %v1195
        %1294 = vmatpush.bf16.msra.mxu0 %v1187
        %1295 = vmatpush.bf16.msra.mxu0 %v1179
        %1296 = vmatpush.bf16.msra.mxu0 %v1171
        %1297 = vmatpush.bf16.msra.mxu0 %v1163
        %1298 = vmatpush.bf16.msra.mxu0 %v1155
        %1299 = vmatpush.bf16.msra.mxu0 %v1147
        %1300 = vmatpush.bf16.msra.mxu0 %v1139
        %1301 = vmatmul.bf16.gmra.mxu0 %v880
        %v1302 = vpop.f32.mrf.mxu0
        %v1303 = vadd.f32 0.0, %v1302
        %v1304 = vpop.f32.mrf.mxu0
        %v1305 = vadd.f32 0.0, %v1304
        %1306 = vdwg.mxu0
        %1307 = vmatpush.bf16.msra.mxu0 %v1196
        %1308 = vmatpush.bf16.msra.mxu0 %v1188
        %1309 = vmatpush.bf16.msra.mxu0 %v1180
        %1310 = vmatpush.bf16.msra.mxu0 %v1172
        %1311 = vmatpush.bf16.msra.mxu0 %v1164
        %1312 = vmatpush.bf16.msra.mxu0 %v1156
        %1313 = vmatpush.bf16.msra.mxu0 %v1148
        %1314 = vmatpush.bf16.msra.mxu0 %v1140
        %1315 = vmatmul.bf16.gmra.mxu0 %v880
        %v1316 = vpop.f32.mrf.mxu0
        %v1317 = vadd.f32 0.0, %v1316
        %v1318 = vpop.f32.mrf.mxu0
        %v1319 = vadd.f32 0.0, %v1318
        %1320 = vdwg.mxu0
        %1321 = vmatpush.bf16.msra.mxu0 %v1197
        %1322 = vmatpush.bf16.msra.mxu0 %v1189
        %1323 = vmatpush.bf16.msra.mxu0 %v1181
        %1324 = vmatpush.bf16.msra.mxu0 %v1173
        %1325 = vmatpush.bf16.msra.mxu0 %v1165
        %1326 = vmatpush.bf16.msra.mxu0 %v1157
        %1327 = vmatpush.bf16.msra.mxu0 %v1149
        %1328 = vmatpush.bf16.msra.mxu0 %v1141
        %1329 = vmatmul.bf16.gmra.mxu0 %v880
        %v1330 = vpop.f32.mrf.mxu0
        %v1331 = vadd.f32 0.0, %v1330
        %v1332 = vpop.f32.mrf.mxu0
        %v1333 = vadd.f32 0.0, %v1332
        %1334 = vdwg.mxu0
        %1335 = vmatpush.bf16.msra.mxu0 %v1198
        %1336 = vmatpush.bf16.msra.mxu0 %v1190
        %1337 = vmatpush.bf16.msra.mxu0 %v1182
        %1338 = vmatpush.bf16.msra.mxu0 %v1174
        %1339 = vmatpush.bf16.msra.mxu0 %v1166
        %1340 = vmatpush.bf16.msra.mxu0 %v1158
        %1341 = vmatpush.bf16.msra.mxu0 %v1150
        %1342 = vmatpush.bf16.msra.mxu0 %v1142
        %1343 = vmatmul.bf16.gmra.mxu0 %v880
        %v1344 = vpop.f32.mrf.mxu0
        %v1345 = vadd.f32 0.0, %v1344
        %v1346 = vpop.f32.mrf.mxu0
        %v1347 = vadd.f32 0.0, %v1346
        %1348 = vdwg.mxu0
        %1349 = vmatpush.bf16.msra.mxu0 %v1199
        %1350 = vmatpush.bf16.msra.mxu0 %v1191
        %1351 = vmatpush.bf16.msra.mxu0 %v1183
        %1352 = vmatpush.bf16.msra.mxu0 %v1175
        %1353 = vmatpush.bf16.msra.mxu0 %v1167
        %1354 = vmatpush.bf16.msra.mxu0 %v1159
        %1355 = vmatpush.bf16.msra.mxu0 %v1151
        %1356 = vmatpush.bf16.msra.mxu0 %v1143
        %1357 = vmatmul.bf16.gmra.mxu0 %v880
        %v1358 = vpop.f32.mrf.mxu0
        %v1359 = vadd.f32 0.0, %v1358
        %v1360 = vpop.f32.mrf.mxu0
        %v1361 = vadd.f32 0.0, %v1360
        %1362 = vdwg.mxu0
        %1363 = vmatpush.bf16.msra.mxu0 %v1200
        %1364 = vmatpush.bf16.msra.mxu0 %v1192
        %1365 = vmatpush.bf16.msra.mxu0 %v1184
        %1366 = vmatpush.bf16.msra.mxu0 %v1176
        %1367 = vmatpush.bf16.msra.mxu0 %v1168
        %1368 = vmatpush.bf16.msra.mxu0 %v1160
        %1369 = vmatpush.bf16.msra.mxu0 %v1152
        %1370 = vmatpush.bf16.msra.mxu0 %v1144
        %1371 = vmatmul.bf16.gmra.mxu0 %v880
        %v1372 = vpop.f32.mrf.mxu0
        %v1373 = vadd.f32 0.0, %v1372
        %v1374 = vpop.f32.mrf.mxu0
        %v1375 = vadd.f32 0.0, %v1374
        %1376 = vdwg.mxu0
        %v1377 = vld [vmem:[%s14] sm:$0xff]
        %v1379 = vperm.slane %v1377, 0
        %v1380 = vperm.slane %v1377, 1
        %v1381 = vperm.slane %v1377, 2
        %v1382 = vperm.slane %v1377, 3
        %v1383 = vperm.slane %v1377, 4
        %v1384 = vperm.slane %v1377, 5
        %v1385 = vperm.slane %v1377, 6
        %v1386 = vperm.slane %v1377, 7
        %v1395 = vmul.f32 %v1275, %v1379
        %v1396 = vmul.f32 %v1289, %v1380
        %v1397 = vmul.f32 %v1303, %v1381
        %v1398 = vmul.f32 %v1317, %v1382
        %v1399 = vmul.f32 %v1331, %v1383
        %v1400 = vmul.f32 %v1345, %v1384
        %v1401 = vmul.f32 %v1359, %v1385
        %v1402 = vmul.f32 %v1373, %v1386
        %v1403 = vmul.f32 %v1277, %v1379
        %v1404 = vmul.f32 %v1291, %v1380
        %v1405 = vmul.f32 %v1305, %v1381
        %v1406 = vmul.f32 %v1319, %v1382
        %v1407 = vmul.f32 %v1333, %v1383
        %v1408 = vmul.f32 %v1347, %v1384
        %v1409 = vmul.f32 %v1361, %v1385
        %v1410 = vmul.f32 %v1375, %v1386
        %v1411 = vld [vmem:[%s15] sm:$0xff]
        %v1413 = vperm.slane %v1411, 0
        %v1414 = vperm.slane %v1411, 1
        %v1415 = vperm.slane %v1411, 2
        %v1416 = vperm.slane %v1411, 3
        %v1417 = vperm.slane %v1411, 4
        %v1418 = vperm.slane %v1411, 5
        %v1419 = vperm.slane %v1411, 6
        %v1420 = vperm.slane %v1411, 7
        %v1429 = vadd.f32 %v1395, %v1413
        %v1430 = vadd.f32 %v1396, %v1414
        %v1431 = vadd.f32 %v1397, %v1415
        %v1432 = vadd.f32 %v1398, %v1416
        %v1433 = vadd.f32 %v1399, %v1417
        %v1434 = vadd.f32 %v1400, %v1418
        %v1435 = vadd.f32 %v1401, %v1419
        %v1436 = vadd.f32 %v1402, %v1420
        %v1437 = vadd.f32 %v1403, %v1413
        %v1438 = vadd.f32 %v1404, %v1414
        %v1439 = vadd.f32 %v1405, %v1415
        %v1440 = vadd.f32 %v1406, %v1416
        %v1441 = vadd.f32 %v1407, %v1417
        %v1442 = vadd.f32 %v1408, %v1418
        %v1443 = vadd.f32 %v1409, %v1419
        %v1444 = vadd.f32 %v1410, %v1420
        %v1445 = vmax.f32 %v1429, 0.0
        %v1446 = vmax.f32 %v1430, 0.0
        %v1447 = vmax.f32 %v1431, 0.0
        %v1448 = vmax.f32 %v1432, 0.0
        %v1449 = vmax.f32 %v1433, 0.0
        %v1450 = vmax.f32 %v1434, 0.0
        %v1451 = vmax.f32 %v1435, 0.0
        %v1452 = vmax.f32 %v1436, 0.0
        %v1453 = vmax.f32 %v1437, 0.0
        %v1454 = vmax.f32 %v1438, 0.0
        %v1455 = vmax.f32 %v1439, 0.0
        %v1456 = vmax.f32 %v1440, 0.0
        %v1457 = vmax.f32 %v1441, 0.0
        %v1458 = vmax.f32 %v1442, 0.0
        %v1459 = vmax.f32 %v1443, 0.0
        %v1460 = vmax.f32 %v1444, 0.0
        %p1461 = scmp.eq.s32.totalorder %s35, 0
        // Predicated region
        $region89: #{pointnet_seg_head_forward.5} parent=83 // pred_check
          %p1462 = pneg %p1461
        $region90: #{pointnet_seg_head_forward.5} parent=83 // pred_check_branch
          %1464 = sbr.rel (%p1462) target = $region92
        $region91: #{pointnet_seg_head_forward.5} parent=83 // pred_region
          %1465 = vst [vmem:[%s632] sm:$0xff] -inf
        $region92: #{pointnet_seg_head_forward.5} parent=83 // pred_fallthru
          _
        %v1466 = vld [vmem:[%s632] sm:$0xff]
        %v1467 = vmax.f32 %v1445, %v1453
        %v1468 = vrot.slane %v1467, 4
        %v1469 = vmax.f32 %v1467, %v1468
        %v1470 = vrot.slane %v1469, 2
        %v1471 = vmax.f32 %v1469, %v1470
        %v1472 = vrot.slane %v1471, 1
        %v1473 = vmax.f32 %v1471, %v1472
        %v1474 = vmax.f32 %v1446, %v1454
        %v1475 = vrot.slane %v1474, 4
        %v1476 = vmax.f32 %v1474, %v1475
        %v1477 = vrot.slane %v1476, 2
        %v1478 = vmax.f32 %v1476, %v1477
        %v1479 = vrot.slane %v1478, 1
        %v1480 = vmax.f32 %v1478, %v1479
        %v1481 = vmax.f32 %v1447, %v1455
        %v1482 = vrot.slane %v1481, 4
        %v1483 = vmax.f32 %v1481, %v1482
        %v1484 = vrot.slane %v1483, 2
        %v1485 = vmax.f32 %v1483, %v1484
        %v1486 = vrot.slane %v1485, 1
        %v1487 = vmax.f32 %v1485, %v1486
        %v1488 = vmax.f32 %v1448, %v1456
        %v1489 = vrot.slane %v1488, 4
        %v1490 = vmax.f32 %v1488, %v1489
        %v1491 = vrot.slane %v1490, 2
        %v1492 = vmax.f32 %v1490, %v1491
        %v1493 = vrot.slane %v1492, 1
        %v1494 = vmax.f32 %v1492, %v1493
        %v1495 = vmax.f32 %v1449, %v1457
        %v1496 = vrot.slane %v1495, 4
        %v1497 = vmax.f32 %v1495, %v1496
        %v1498 = vrot.slane %v1497, 2
        %v1499 = vmax.f32 %v1497, %v1498
        %v1500 = vrot.slane %v1499, 1
        %v1501 = vmax.f32 %v1499, %v1500
        %v1502 = vmax.f32 %v1450, %v1458
        %v1503 = vrot.slane %v1502, 4
        %v1504 = vmax.f32 %v1502, %v1503
        %v1505 = vrot.slane %v1504, 2
        %v1506 = vmax.f32 %v1504, %v1505
        %v1507 = vrot.slane %v1506, 1
        %v1508 = vmax.f32 %v1506, %v1507
        %v1509 = vmax.f32 %v1451, %v1459
        %v1510 = vrot.slane %v1509, 4
        %v1511 = vmax.f32 %v1509, %v1510
        %v1512 = vrot.slane %v1511, 2
        %v1513 = vmax.f32 %v1511, %v1512
        %v1514 = vrot.slane %v1513, 1
        %v1515 = vmax.f32 %v1513, %v1514
        %v1516 = vmax.f32 %v1452, %v1460
        %v1517 = vrot.slane %v1516, 4
        %v1518 = vmax.f32 %v1516, %v1517
        %v1519 = vrot.slane %v1518, 2
        %v1520 = vmax.f32 %v1518, %v1519
        %v1521 = vrot.slane %v1520, 1
        %v1522 = vmax.f32 %v1520, %v1521
        %v1531 = vrot.slane %v1480, 7
        %v1532 = vrot.slane %v1487, 6
        %v1533 = vrot.slane %v1494, 5
        %v1534 = vrot.slane %v1501, 4
        %v1535 = vrot.slane %v1508, 3
        %v1536 = vrot.slane %v1515, 2
        %v1537 = vrot.slane %v1522, 1
        %vm1538 = vcmask 1040384
        %v1539 = vsel %vm1538, %v1473, %v1531
        %vm1540 = vcmask 1042434
        %v1541 = vsel %vm1540, %v1532, %v1533
        %vm1542 = vcmask 1041408
        %v1543 = vsel %vm1542, %v1539, %v1541
        %vm1544 = vcmask 1044484
        %v1545 = vsel %vm1544, %v1534, %v1535
        %vm1546 = vcmask 1046534
        %v1547 = vsel %vm1546, %v1536, %v1537
        %vm1548 = vcmask 1045508
        %v1549 = vsel %vm1548, %v1545, %v1547
        %vm1550 = vcmask 1043456
        %v1551 = vsel %vm1550, %v1543, %v1549
        %v1553 = vmax.f32 %v1466, %v1551
        %1554 = vst [vmem:[%s632] sm:$0xff] %v1553
        %s1555 = smul.u32 2, %s35
        %p1556 = scmp.lt.s32.totalorder %s34, 1
        %s1557 = scalar_select %p1556, %s34, 1
        %p1558 = scmp.lt.s32.totalorder %s1555, 1
        %s1559 = scalar_select %p1558, %s1555, 1
        %s1560 = smul.addr %s1557, 2
        %s1561 = sadd.s32 %s1559, %s1560
        %s1562 = smul.addr %s1561, 4
        %s1563 = scalar_lea.vmem %s16, %s1562
        %p1564 = scmp.lt.s32.totalorder %s34, 1
        %s1565 = scalar_select %p1564, %s34, 1
        %s1566 = smul.addr %s1565, 8
        %s1567 = scalar_lea.vmem %s17, %s1566
        // Predicated region
        $region93: #{pointnet_seg_head_forward.5} parent=83 // pred_check
          %p1568 = pneg %p410
        $region94: #{pointnet_seg_head_forward.5} parent=83 // pred_check_branch
          %1570 = sbr.rel (%p1568) target = $region96
        $region95: #{pointnet_seg_head_forward.5} parent=83 // pred_region
          %s1571 = smul.u32 2, %s35
        $region96: #{pointnet_seg_head_forward.5} parent=83 // pred_fallthru
          _
        // Predicated region
        $region97: #{pointnet_seg_head_forward.5} parent=83 // pred_check
          %p1572 = pneg %p436
        $region98: #{pointnet_seg_head_forward.5} parent=83 // pred_check_branch
          %1574 = sbr.rel (%p1572) target = $region100
        $region99: #{pointnet_seg_head_forward.5} parent=83 // pred_region
          _
        $region100: #{pointnet_seg_head_forward.5} parent=83 // pred_fallthru
          _
      $region84: #{pointnet_seg_head_forward.5} parent=5 // pred_fallthru
        _
      %p1575 = scmp.le.s32.totalorder 2, %s25
      // Predicated region
      $region101: #{pointnet_seg_head_forward.5} parent=5 // pred_check
        %p1576 = pneg %p1575
      $region102: #{pointnet_seg_head_forward.5} parent=5 // pred_check_branch
        %1578 = sbr.rel (%p1576) target = $region104
      $region103: #{pointnet_seg_head_forward.5} parent=5 // pred_region
        %s1579 = ssub.s32 %s25, 2
        // Predicated region
        $region105: #{pointnet_seg_head_forward.5} parent=103 // pred_check
          %p1580 = pneg %p416
        $region106: #{pointnet_seg_head_forward.5} parent=103 // pred_check_branch
          %1582 = sbr.rel (%p1580) target = $region108
        $region107: #{pointnet_seg_head_forward.5} parent=103 // pred_region
          %s1583 = smul.u32 2, %s37
          %p1584 = scmp.lt.s32.totalorder %s36, 1
          %s1585 = scalar_select %p1584, %s36, 1
          %p1586 = scmp.lt.s32.totalorder %s1583, 1
          %s1587 = scalar_select %p1586, %s1583, 1
          %s1588 = smul.addr %s1585, 2
          %s1589 = sadd.s32 %s1587, %s1588
          %s1590 = smul.addr %s1589, 4
          %s1591 = scalar_lea.vmem %s16, %s1590
        $region108: #{pointnet_seg_head_forward.5} parent=103 // pred_fallthru
          _
        // Predicated region
        $region109: #{pointnet_seg_head_forward.5} parent=103 // pred_check
          %p1592 = pneg %p442
        $region110: #{pointnet_seg_head_forward.5} parent=103 // pred_check_branch
          %1594 = sbr.rel (%p1592) target = $region112
        $region111: #{pointnet_seg_head_forward.5} parent=103 // pred_region
          %p1595 = scmp.lt.s32.totalorder %s36, 1
          %s1596 = scalar_select %p1595, %s36, 1
          %s1597 = smul.addr %s1596, 8
          %s1598 = scalar_lea.vmem %s17, %s1597
        $region112: #{pointnet_seg_head_forward.5} parent=103 // pred_fallthru
          _
      $region104: #{pointnet_seg_head_forward.5} parent=5 // pred_fallthru
        _
    $region6: #{pointnet_seg_head_forward.5} parent=1 // loop_footer
      %s29 = sadd.s32 1, %s25
    $region7: #{pointnet_seg_head_forward.5} parent=1 // loop_footer_branch
      %24 = sbr.rel target = $region3
    $region8: #{pointnet_seg_head_forward.5} parent=1 // loop_exit
      _
    %1599 = vsyncpa [#allocation3], 1
    %s1600 = scalar_lea.sflag [#allocation3], 1
    %1601 = vsyncpa %s1600, 1

// kernel: pointnet_seg_head_forward.6
$region0: #{pointnet_seg_head_forward.6}
  #allocation0 [shape = 'u32[]', space=smem, size = 0x4, offset = 0x4, fixed_abs, tag = 'smem constant byte address 0x4 - core index']
  #allocation1 [shape = 'u32[72,128]{1,0:T(1,128)}', space=vmem, size = 0x9000, scoped, tag = 'internal scratch']
  %s0 = inlined_call_operand.vmem [shape: bf16[2,16,64], index: 0, kind: input, shape index: {}]
  %s1 = inlined_call_operand.vmem [shape: bf16[2,64,64], index: 1, kind: input, shape index: {}]
  %s2 = inlined_call_operand.vmem [shape: f32[1,64], index: 2, kind: input, shape index: {}]
  %s3 = inlined_call_operand.vmem [shape: f32[1,64], index: 3, kind: input, shape index: {}]
  %s4 = inlined_call_operand.vmem [shape: bf16[64,128], index: 4, kind: input, shape index: {}]
  %s5 = inlined_call_operand.vmem [shape: f32[1,128], index: 5, kind: input, shape index: {}]
  %s6 = inlined_call_operand.vmem [shape: f32[1,128], index: 6, kind: input, shape index: {}]
  %s7 = inlined_call_operand.vmem [shape: bf16[128,1024], index: 7, kind: input, shape index: {}]
  %s8 = inlined_call_operand.vmem [shape: f32[1,1024], index: 8, kind: input, shape index: {}]
  %s9 = inlined_call_operand.vmem [shape: f32[1,1024], index: 9, kind: input, shape index: {}]
  %s10 = inlined_call_operand.vmem [shape: f32[2,1,1024], index: 10, kind: output, shape index: {}]
  %s11 = sld [smem:[#allocation0]]
  $region77: #{pointnet_seg_head_forward.6} parent=0
    _
  %s13 = ssub.s32 1, %s11
  %s14 = scalar_select 0, %s13, %s11
  loop: start=0, step=1, limit=4
  $region2: #{pointnet_seg_head_forward.6} parent=0 // loop_pre_header
    _
  $region3: #{pointnet_seg_head_forward.6} parent=0 // loop_header
    %s16 = sphi 0, %s20
    %p17 = scmp.ge.s32.totalorder %s16, 4
    %s23 = sphi 0, %s35
    %s24 = sphi 0, %s31
    %s25 = sphi 0, %s23
    %s26 = sphi 0, %s24
    %s27 = sphi 0, %s25
    %s28 = sphi 0, %s26
    %s40 = sphi 0, %s42
    %s43 = sphi 0, %s40
    %s44 = sphi 0, %s43
    %s60 = sphi 0, %s44
    %s66 = sphi 0, %s68
    %s69 = sphi 0, %s66
    %s70 = sphi 0, %s69
    %s86 = sphi 0, %s70
    %s90 = sphi 0, %s90
    %s92 = sphi 0, %s90
    %s93 = sphi 0, %s92
    %s107 = sphi 0, %s93
    %s111 = sphi 0, %s111
    %s113 = sphi 0, %s111
    %s114 = sphi 0, %s113
    %s128 = sphi 0, %s114
    %s132 = sphi 0, %s132
    %s134 = sphi 0, %s132
    %s135 = sphi 0, %s134
    %s149 = sphi 0, %s135
    %s153 = sphi 0, %s153
    %s155 = sphi 0, %s153
    %s156 = sphi 0, %s155
    %s170 = sphi 0, %s156
    %s174 = sphi 0, %s174
    %s176 = sphi 0, %s174
    %s177 = sphi 0, %s176
    %s191 = sphi 0, %s177
    %s195 = sphi 0, %s195
    %s197 = sphi 0, %s195
    %s198 = sphi 0, %s197
    %s212 = sphi 0, %s198
    %s216 = sphi 0, %s216
    %s218 = sphi 0, %s216
    %s219 = sphi 0, %s218
    %s233 = sphi 0, %s219
    %s237 = sphi 0, %s237
    %s239 = sphi 0, %s237
    %s240 = sphi 0, %s239
    %s254 = sphi 0, %s240
    %s260 = sphi 0, %s262
    %s263 = sphi 0, %s260
    %s264 = sphi 0, %s263
    %s280 = sphi 0, %s264
  $region4: #{pointnet_seg_head_forward.6} parent=0 // loop_header_branch
    %19 = sbr.rel (%p17) target = $region8
  $region5: #{pointnet_seg_head_forward.6} parent=0 // loop_body
    %s21 = ssub.s32 %s16, 1
    %s22 = ssub.s32 %s16, 2
    %s29 = sadd.s32 1, %s24
    %p30 = scmp.ge.s32.totalorder %s29, 1
    %s31 = scalar_select %p30, 0, %s29
    %s32 = sadd.s32 1, %s23
    %s33 = scalar_select %p30, %s32, %s23
    %p34 = scmp.ge.s32.totalorder %s33, 2
    %s35 = scalar_select %p34, 0, %s33
    %s36 = ssub.s32 %s23, %s35
    %s37 = ssub.s32 %s24, %s31
    %s38 = sor.u32 %s36, %s37
    %p39 = scmp.eq.s32.totalorder %s38, 0
    %s41 = sadd.s32 %s40, 1
    %s42 = scalar_select %p39, %s40, %s41
    %p45 = pneg %p39
    %p46 = scmp.eq.s32.totalorder %s16, 1
    %p47 = por %p45, %p46
    %p48 = scmp.ne.s32.totalorder %s40, %s43
    %p49 = scmp.eq.s32.totalorder %s16, 0
    %p50 = por %p48, %p49
    %p51 = scmp.ne.s32.totalorder %s40, %s43
    %p52 = scmp.eq.s32.totalorder %s21, 1
    %p53 = por %p51, %p52
    %p54 = scmp.ne.s32.totalorder %s43, %s44
    %p55 = scmp.eq.s32.totalorder %s21, 0
    %p56 = por %p54, %p55
    %p57 = scmp.ne.s32.totalorder %s43, %s44
    %p58 = scmp.eq.s32.totalorder %s22, 1
    %p59 = por %p57, %p58
    %p61 = scmp.ne.s32.totalorder %s44, %s60
    %p62 = scmp.eq.s32.totalorder %s22, 0
    %p63 = por %p61, %p62
    %s64 = ssub.s32 %s23, %s35
    %p65 = scmp.eq.s32.totalorder %s64, 0
    %s67 = sadd.s32 %s66, 1
    %s68 = scalar_select %p65, %s66, %s67
    %p71 = pneg %p65
    %p72 = scmp.eq.s32.totalorder %s16, 1
    %p73 = por %p71, %p72
    %p74 = scmp.ne.s32.totalorder %s66, %s69
    %p75 = scmp.eq.s32.totalorder %s16, 0
    %p76 = por %p74, %p75
    %p77 = scmp.ne.s32.totalorder %s66, %s69
    %p78 = scmp.eq.s32.totalorder %s21, 1
    %p79 = por %p77, %p78
    %p80 = scmp.ne.s32.totalorder %s69, %s70
    %p81 = scmp.eq.s32.totalorder %s21, 0
    %p82 = por %p80, %p81
    %p83 = scmp.ne.s32.totalorder %s69, %s70
    %p84 = scmp.eq.s32.totalorder %s22, 1
    %p85 = por %p83, %p84
    %p87 = scmp.ne.s32.totalorder %s70, %s86
    %p88 = scmp.eq.s32.totalorder %s22, 0
    %p89 = por %p87, %p88
    %s91 = sadd.s32 %s90, 1
    %p94 = scmp.eq.s32.totalorder %s16, 1
    %p95 = scmp.ne.s32.totalorder %s90, %s92
    %p96 = scmp.eq.s32.totalorder %s16, 0
    %p97 = por %p95, %p96
    %p98 = scmp.ne.s32.totalorder %s90, %s92
    %p99 = scmp.eq.s32.totalorder %s21, 1
    %p100 = por %p98, %p99
    %p101 = scmp.ne.s32.totalorder %s92, %s93
    %p102 = scmp.eq.s32.totalorder %s21, 0
    %p103 = por %p101, %p102
    %p104 = scmp.ne.s32.totalorder %s92, %s93
    %p105 = scmp.eq.s32.totalorder %s22, 1
    %p106 = por %p104, %p105
    %p108 = scmp.ne.s32.totalorder %s93, %s107
    %p109 = scmp.eq.s32.totalorder %s22, 0
    %p110 = por %p108, %p109
    %s112 = sadd.s32 %s111, 1
    %p115 = scmp.eq.s32.totalorder %s16, 1
    %p116 = scmp.ne.s32.totalorder %s111, %s113
    %p117 = scmp.eq.s32.totalorder %s16, 0
    %p118 = por %p116, %p117
    %p119 = scmp.ne.s32.totalorder %s111, %s113
    %p120 = scmp.eq.s32.totalorder %s21, 1
    %p121 = por %p119, %p120
    %p122 = scmp.ne.s32.totalorder %s113, %s114
    %p123 = scmp.eq.s32.totalorder %s21, 0
    %p124 = por %p122, %p123
    %p125 = scmp.ne.s32.totalorder %s113, %s114
    %p126 = scmp.eq.s32.totalorder %s22, 1
    %p127 = por %p125, %p126
    %p129 = scmp.ne.s32.totalorder %s114, %s128
    %p130 = scmp.eq.s32.totalorder %s22, 0
    %p131 = por %p129, %p130
    %s133 = sadd.s32 %s132, 1
    %p136 = scmp.eq.s32.totalorder %s16, 1
    %p137 = scmp.ne.s32.totalorder %s132, %s134
    %p138 = scmp.eq.s32.totalorder %s16, 0
    %p139 = por %p137, %p138
    %p140 = scmp.ne.s32.totalorder %s132, %s134
    %p141 = scmp.eq.s32.totalorder %s21, 1
    %p142 = por %p140, %p141
    %p143 = scmp.ne.s32.totalorder %s134, %s135
    %p144 = scmp.eq.s32.totalorder %s21, 0
    %p145 = por %p143, %p144
    %p146 = scmp.ne.s32.totalorder %s134, %s135
    %p147 = scmp.eq.s32.totalorder %s22, 1
    %p148 = por %p146, %p147
    %p150 = scmp.ne.s32.totalorder %s135, %s149
    %p151 = scmp.eq.s32.totalorder %s22, 0
    %p152 = por %p150, %p151
    %s154 = sadd.s32 %s153, 1
    %p157 = scmp.eq.s32.totalorder %s16, 1
    %p158 = scmp.ne.s32.totalorder %s153, %s155
    %p159 = scmp.eq.s32.totalorder %s16, 0
    %p160 = por %p158, %p159
    %p161 = scmp.ne.s32.totalorder %s153, %s155
    %p162 = scmp.eq.s32.totalorder %s21, 1
    %p163 = por %p161, %p162
    %p164 = scmp.ne.s32.totalorder %s155, %s156
    %p165 = scmp.eq.s32.totalorder %s21, 0
    %p166 = por %p164, %p165
    %p167 = scmp.ne.s32.totalorder %s155, %s156
    %p168 = scmp.eq.s32.totalorder %s22, 1
    %p169 = por %p167, %p168
    %p171 = scmp.ne.s32.totalorder %s156, %s170
    %p172 = scmp.eq.s32.totalorder %s22, 0
    %p173 = por %p171, %p172
    %s175 = sadd.s32 %s174, 1
    %p178 = scmp.eq.s32.totalorder %s16, 1
    %p179 = scmp.ne.s32.totalorder %s174, %s176
    %p180 = scmp.eq.s32.totalorder %s16, 0
    %p181 = por %p179, %p180
    %p182 = scmp.ne.s32.totalorder %s174, %s176
    %p183 = scmp.eq.s32.totalorder %s21, 1
    %p184 = por %p182, %p183
    %p185 = scmp.ne.s32.totalorder %s176, %s177
    %p186 = scmp.eq.s32.totalorder %s21, 0
    %p187 = por %p185, %p186
    %p188 = scmp.ne.s32.totalorder %s176, %s177
    %p189 = scmp.eq.s32.totalorder %s22, 1
    %p190 = por %p188, %p189
    %p192 = scmp.ne.s32.totalorder %s177, %s191
    %p193 = scmp.eq.s32.totalorder %s22, 0
    %p194 = por %p192, %p193
    %s196 = sadd.s32 %s195, 1
    %p199 = scmp.eq.s32.totalorder %s16, 1
    %p200 = scmp.ne.s32.totalorder %s195, %s197
    %p201 = scmp.eq.s32.totalorder %s16, 0
    %p202 = por %p200, %p201
    %p203 = scmp.ne.s32.totalorder %s195, %s197
    %p204 = scmp.eq.s32.totalorder %s21, 1
    %p205 = por %p203, %p204
    %p206 = scmp.ne.s32.totalorder %s197, %s198
    %p207 = scmp.eq.s32.totalorder %s21, 0
    %p208 = por %p206, %p207
    %p209 = scmp.ne.s32.totalorder %s197, %s198
    %p210 = scmp.eq.s32.totalorder %s22, 1
    %p211 = por %p209, %p210
    %p213 = scmp.ne.s32.totalorder %s198, %s212
    %p214 = scmp.eq.s32.totalorder %s22, 0
    %p215 = por %p213, %p214
    %s217 = sadd.s32 %s216, 1
    %p220 = scmp.eq.s32.totalorder %s16, 1
    %p221 = scmp.ne.s32.totalorder %s216, %s218
    %p222 = scmp.eq.s32.totalorder %s16, 0
    %p223 = por %p221, %p222
    %p224 = scmp.ne.s32.totalorder %s216, %s218
    %p225 = scmp.eq.s32.totalorder %s21, 1
    %p226 = por %p224, %p225
    %p227 = scmp.ne.s32.totalorder %s218, %s219
    %p228 = scmp.eq.s32.totalorder %s21, 0
    %p229 = por %p227, %p228
    %p230 = scmp.ne.s32.totalorder %s218, %s219
    %p231 = scmp.eq.s32.totalorder %s22, 1
    %p232 = por %p230, %p231
    %p234 = scmp.ne.s32.totalorder %s219, %s233
    %p235 = scmp.eq.s32.totalorder %s22, 0
    %p236 = por %p234, %p235
    %s238 = sadd.s32 %s237, 1
    %p241 = scmp.eq.s32.totalorder %s16, 1
    %p242 = scmp.ne.s32.totalorder %s237, %s239
    %p243 = scmp.eq.s32.totalorder %s16, 0
    %p244 = por %p242, %p243
    %p245 = scmp.ne.s32.totalorder %s237, %s239
    %p246 = scmp.eq.s32.totalorder %s21, 1
    %p247 = por %p245, %p246
    %p248 = scmp.ne.s32.totalorder %s239, %s240
    %p249 = scmp.eq.s32.totalorder %s21, 0
    %p250 = por %p248, %p249
    %p251 = scmp.ne.s32.totalorder %s239, %s240
    %p252 = scmp.eq.s32.totalorder %s22, 1
    %p253 = por %p251, %p252
    %p255 = scmp.ne.s32.totalorder %s240, %s254
    %p256 = scmp.eq.s32.totalorder %s22, 0
    %p257 = por %p255, %p256
    %s258 = ssub.s32 %s23, %s35
    %p259 = scmp.eq.s32.totalorder %s258, 0
    %s261 = sadd.s32 %s260, 1
    %s262 = scalar_select %p259, %s260, %s261
    %p265 = pneg %p259
    %p266 = scmp.eq.s32.totalorder %s16, 1
    %p267 = por %p265, %p266
    %p268 = scmp.ne.s32.totalorder %s260, %s263
    %p269 = scmp.eq.s32.totalorder %s16, 0
    %p270 = por %p268, %p269
    %p271 = scmp.ne.s32.totalorder %s260, %s263
    %p272 = scmp.eq.s32.totalorder %s21, 1
    %p273 = por %p271, %p272
    %p274 = scmp.ne.s32.totalorder %s263, %s264
    %p275 = scmp.eq.s32.totalorder %s21, 0
    %p276 = por %p274, %p275
    %p277 = scmp.ne.s32.totalorder %s263, %s264
    %p278 = scmp.eq.s32.totalorder %s22, 1
    %p279 = por %p277, %p278
    %p281 = scmp.ne.s32.totalorder %s264, %s280
    %p282 = scmp.eq.s32.totalorder %s22, 0
    %p283 = por %p281, %p282
    %p284 = scmp.le.s32.totalorder 1, %s16
    %p285 = scmp.lt.s32.totalorder %s16, 3
    %p286 = pnand %p284, %p285
    %p287 = pneg %p286
    // Predicated region
    $region9: #{pointnet_seg_head_forward.6} parent=5 // pred_check
      _
    $region10: #{pointnet_seg_head_forward.6} parent=5 // pred_check_branch
      %289 = sbr.rel (%p286) target = $region12
    $region11: #{pointnet_seg_head_forward.6} parent=5 // pred_region
      %s290 = ssub.s32 %s16, 1
      // Predicated region
      $region13: #{pointnet_seg_head_forward.6} parent=11 // pred_check
        %p291 = pneg %p103
      $region14: #{pointnet_seg_head_forward.6} parent=11 // pred_check_branch
        %293 = sbr.rel (%p291) target = $region16
      $region15: #{pointnet_seg_head_forward.6} parent=11 // pred_region
        _
      $region16: #{pointnet_seg_head_forward.6} parent=11 // pred_fallthru
        _
      // Predicated region
      $region17: #{pointnet_seg_head_forward.6} parent=11 // pred_check
        %p294 = pneg %p124
      $region18: #{pointnet_seg_head_forward.6} parent=11 // pred_check_branch
        %296 = sbr.rel (%p294) target = $region20
      $region19: #{pointnet_seg_head_forward.6} parent=11 // pred_region
        _
      $region20: #{pointnet_seg_head_forward.6} parent=11 // pred_fallthru
        _
      // Predicated region
      $region21: #{pointnet_seg_head_forward.6} parent=11 // pred_check
        %p297 = pneg %p145
      $region22: #{pointnet_seg_head_forward.6} parent=11 // pred_check_branch
        %299 = sbr.rel (%p297) target = $region24
      $region23: #{pointnet_seg_head_forward.6} parent=11 // pred_region
        _
      $region24: #{pointnet_seg_head_forward.6} parent=11 // pred_fallthru
        _
      // Predicated region
      $region25: #{pointnet_seg_head_forward.6} parent=11 // pred_check
        %p300 = pneg %p166
      $region26: #{pointnet_seg_head_forward.6} parent=11 // pred_check_branch
        %302 = sbr.rel (%p300) target = $region28
      $region27: #{pointnet_seg_head_forward.6} parent=11 // pred_region
        _
      $region28: #{pointnet_seg_head_forward.6} parent=11 // pred_fallthru
        _
      // Predicated region
      $region29: #{pointnet_seg_head_forward.6} parent=11 // pred_check
        %p303 = pneg %p187
      $region30: #{pointnet_seg_head_forward.6} parent=11 // pred_check_branch
        %305 = sbr.rel (%p303) target = $region32
      $region31: #{pointnet_seg_head_forward.6} parent=11 // pred_region
        _
      $region32: #{pointnet_seg_head_forward.6} parent=11 // pred_fallthru
        _
      // Predicated region
      $region33: #{pointnet_seg_head_forward.6} parent=11 // pred_check
        %p306 = pneg %p208
      $region34: #{pointnet_seg_head_forward.6} parent=11 // pred_check_branch
        %308 = sbr.rel (%p306) target = $region36
      $region35: #{pointnet_seg_head_forward.6} parent=11 // pred_region
        _
      $region36: #{pointnet_seg_head_forward.6} parent=11 // pred_fallthru
        _
      // Predicated region
      $region37: #{pointnet_seg_head_forward.6} parent=11 // pred_check
        %p309 = pneg %p229
      $region38: #{pointnet_seg_head_forward.6} parent=11 // pred_check_branch
        %311 = sbr.rel (%p309) target = $region40
      $region39: #{pointnet_seg_head_forward.6} parent=11 // pred_region
        _
      $region40: #{pointnet_seg_head_forward.6} parent=11 // pred_fallthru
        _
      // Predicated region
      $region41: #{pointnet_seg_head_forward.6} parent=11 // pred_check
        %p312 = pneg %p250
      $region42: #{pointnet_seg_head_forward.6} parent=11 // pred_check_branch
        %314 = sbr.rel (%p312) target = $region44
      $region43: #{pointnet_seg_head_forward.6} parent=11 // pred_region
        _
      $region44: #{pointnet_seg_head_forward.6} parent=11 // pred_fallthru
        _
    $region12: #{pointnet_seg_head_forward.6} parent=5 // pred_fallthru
      _
    %p315 = scmp.lt.s32.totalorder %s16, 2
    // Predicated region
    $region45: #{pointnet_seg_head_forward.6} parent=5 // pred_check
      %p316 = pneg %p315
    $region46: #{pointnet_seg_head_forward.6} parent=5 // pred_check_branch
      %318 = sbr.rel (%p316) target = $region48
    $region47: #{pointnet_seg_head_forward.6} parent=5 // pred_region
      // Predicated region
      $region49: #{pointnet_seg_head_forward.6} parent=47 // pred_check
        %p319 = pneg %p50
      $region50: #{pointnet_seg_head_forward.6} parent=47 // pred_check_branch
        %321 = sbr.rel (%p319) target = $region52
      $region51: #{pointnet_seg_head_forward.6} parent=47 // pred_region
        %s322 = smul.u32 2, %s24
        %p323 = scmp.lt.s32.totalorder %s23, 1
        %s324 = scalar_select %p323, %s23, 1
        %p325 = scmp.lt.s32.totalorder %s322, 1
        %s326 = scalar_select %p325, %s322, 1
        %s327 = smul.addr %s324, 2
        %s328 = sadd.s32 %s326, %s327
        %s329 = smul.addr %s328, 4
        %s330 = scalar_lea.vmem %s0, %s329
        %s331 = smul.u32 2, %s24
      $region52: #{pointnet_seg_head_forward.6} parent=47 // pred_fallthru
        _
      // Predicated region
      $region53: #{pointnet_seg_head_forward.6} parent=47 // pred_check
        %p332 = pneg %p76
      $region54: #{pointnet_seg_head_forward.6} parent=47 // pred_check_branch
        %334 = sbr.rel (%p332) target = $region56
      $region55: #{pointnet_seg_head_forward.6} parent=47 // pred_region
        %p335 = scmp.lt.s32.totalorder %s23, 1
        %s336 = scalar_select %p335, %s23, 1
        %s337 = smul.addr %s336, 8
        %s338 = smul.addr %s337, 4
        %s339 = scalar_lea.vmem %s1, %s338
      $region56: #{pointnet_seg_head_forward.6} parent=47 // pred_fallthru
        _
    $region48: #{pointnet_seg_head_forward.6} parent=5 // pred_fallthru
      _
    %p340 = scmp.le.s32.totalorder 1, %s16
    %p341 = scmp.lt.s32.totalorder %s16, 3
    %p342 = pnand %p340, %p341
    %p343 = pneg %p342
    // Predicated region
    $region57: #{pointnet_seg_head_forward.6} parent=5 // pred_check
      _
    $region58: #{pointnet_seg_head_forward.6} parent=5 // pred_check_branch
      %345 = sbr.rel (%p342) target = $region60
    $region59: #{pointnet_seg_head_forward.6} parent=5 // pred_region
      %s346 = ssub.s32 %s16, 1
      %s347 = smul.u32 2, %s26
      %p348 = scmp.lt.s32.totalorder %s25, 1
      %s349 = scalar_select %p348, %s25, 1
      %p350 = scmp.lt.s32.totalorder %s347, 1
      %s351 = scalar_select %p350, %s347, 1
      %s352 = smul.addr %s349, 2
      %s353 = sadd.s32 %s351, %s352
      %s354 = smul.addr %s353, 4
      %s355 = scalar_lea.vmem %s0, %s354
      %p356 = pneg %p56
      %p357 = pneg %p53
      %p358 = scmp.lt.s32.totalorder %s25, 1
      %s359 = scalar_select %p358, %s25, 1
      %s360 = smul.addr %s359, 8
      %s361 = smul.addr %s360, 4
      %s362 = scalar_lea.vmem %s1, %s361
      %p363 = pneg %p82
      %p364 = pneg %p79
      %p365 = pneg %p103
      %p366 = pneg %p100
      %p367 = pneg %p124
      %p368 = pneg %p121
      %p369 = pneg %p145
      %p370 = pneg %p142
      %p371 = pneg %p166
      %p372 = pneg %p163
      %p373 = pneg %p187
      %p374 = pneg %p184
      %p375 = pneg %p208
      %p376 = pneg %p205
      %p377 = pneg %p229
      %p378 = pneg %p226
      %p379 = pneg %p250
      %p380 = pneg %p247
      %p381 = pneg %p276
      %p382 = pneg %p273
      %p383 = scmp.lt.s32.totalorder %s25, 1
      %s384 = scalar_select %p383, %s25, 1
      %s385 = smul.addr %s384, 8
      %s386 = scalar_lea.vmem %s10, %s385
      %s387 = smul.u32 2, %s26
      %p388 = scmp.lt.s32.totalorder %s25, 1
      %s389 = scalar_select %p388, %s25, 1
      %p390 = scmp.lt.s32.totalorder %s387, 1
      %s391 = scalar_select %p390, %s387, 1
      %s392 = smul.addr %s389, 2
      %s393 = sadd.s32 %s391, %s392
      %s394 = smul.addr %s393, 4
      %s395 = scalar_lea.vmem %s0, %s394
      %s396 = smul.u32 2, %s26
      %p397 = scmp.lt.s32.totalorder %s25, 1
      %s398 = scalar_select %p397, %s25, 1
      %s399 = smul.addr %s398, 8
      %s400 = smul.addr %s399, 4
      %s401 = scalar_lea.vmem %s1, %s400
      %p402 = scmp.lt.s32.totalorder %s25, 1
      %s403 = scalar_select %p402, %s25, 1
      %s404 = smul.addr %s403, 8
      %s405 = scalar_lea.vmem %s10, %s404
      %v407 = vld [vmem:[%s395] sm:$0xf]
      %v408 = vld [vmem:[%s395 + $0x4] sm:$0xf]
      %v409 = vld [vmem:[%s401] sm:$0xf]
      %v410 = vld [vmem:[%s401 + $0x4] sm:$0xf]
      %v411 = vld [vmem:[%s401 + $0x8] sm:$0xf]
      %v412 = vld [vmem:[%s401 + $0xc] sm:$0xf]
      %v413 = vld [vmem:[%s401 + $0x10] sm:$0xf]
      %v414 = vld [vmem:[%s401 + $0x14] sm:$0xf]
      %v415 = vld [vmem:[%s401 + $0x18] sm:$0xf]
      %v416 = vld [vmem:[%s401 + $0x1c] sm:$0xf]
      %v419 = vunpack.c.l.b16 %v407
      %v420 = vunpack.c.l.b16 %v408
      %v421 = vpack.c.b16 %v420, %v419
      %v430 = vunpack.c.l.b16 %v409
      %v431 = vunpack.c.l.b16 %v410
      %v432 = vunpack.c.l.b16 %v411
      %v433 = vunpack.c.l.b16 %v412
      %v434 = vunpack.c.l.b16 %v413
      %v435 = vunpack.c.l.b16 %v414
      %v436 = vunpack.c.l.b16 %v415
      %v437 = vunpack.c.l.b16 %v416
      %v438 = vpack.c.b16 %v431, %v430
      %v439 = vpack.c.b16 %v433, %v432
      %v440 = vpack.c.b16 %v435, %v434
      %v441 = vpack.c.b16 %v437, %v436
      %vm446 = vcmask 523264
      %v448 = vsel %vm446, %v421, 0
      %450 = vmatpush.bf16.msra.mxu0 0
      %451 = vmatpush.bf16.msra.mxu0 0
      %452 = vmatpush.bf16.msra.mxu0 0
      %453 = vmatpush.bf16.msra.mxu0 0
      %454 = vmatpush.bf16.msra.mxu0 %v441
      %455 = vmatpush.bf16.msra.mxu0 %v440
      %456 = vmatpush.bf16.msra.mxu0 %v439
      %457 = vmatpush.bf16.msra.mxu0 %v438
      %458 = vmatmul.bf16.gmra.mxu0 %v448
      %v459 = vpop.f32.mrf.mxu0
      %v460 = vadd.f32 0.0, %v459
      %v461 = vpop.f32.mrf.mxu0
      %v462 = vadd.f32 0.0, %v461
      %463 = vdwg.mxu0
      %v464 = vld [vmem:[%s2] sm:$0x1]
      %v466 = vperm.slane %v464, 0
      %v468 = vmul.f32 %v460, %v466
      %v469 = vmul.f32 %v462, %v466
      %v470 = vld [vmem:[%s3] sm:$0x1]
      %v472 = vperm.slane %v470, 0
      %v474 = vadd.f32 %v468, %v472
      %v475 = vadd.f32 %v469, %v472
      %v476 = vmax.f32 %v474, 0.0
      %v477 = vmax.f32 %v475, 0.0
      %v478 = vpack.c.bf16 %v477, %v476
      %v479 = vld [vmem:[%s4] sm:$0xf]
      %v480 = vld [vmem:[%s4 + $0x4] sm:$0xf]
      %v481 = vld [vmem:[%s4 + $0x8] sm:$0xf]
      %v482 = vld [vmem:[%s4 + $0xc] sm:$0xf]
      %v483 = vld [vmem:[%s4 + $0x10] sm:$0xf]
      %v484 = vld [vmem:[%s4 + $0x14] sm:$0xf]
      %v485 = vld [vmem:[%s4 + $0x18] sm:$0xf]
      %v486 = vld [vmem:[%s4 + $0x1c] sm:$0xf]
      %v495 = vunpack.c.l.b16 %v479
      %v496 = vunpack.c.l.b16 %v480
      %v497 = vunpack.c.l.b16 %v481
      %v498 = vunpack.c.l.b16 %v482
      %v499 = vunpack.c.l.b16 %v483
      %v500 = vunpack.c.l.b16 %v484
      %v501 = vunpack.c.l.b16 %v485
      %v502 = vunpack.c.l.b16 %v486
      %v503 = vpack.c.b16 %v496, %v495
      %v504 = vpack.c.b16 %v498, %v497
      %v505 = vpack.c.b16 %v500, %v499
      %v506 = vpack.c.b16 %v502, %v501
      %v512 = vsel %vm446, %v478, 0
      %514 = vmatpush.bf16.msra.mxu0 0
      %515 = vmatpush.bf16.msra.mxu0 0
      %516 = vmatpush.bf16.msra.mxu0 0
      %517 = vmatpush.bf16.msra.mxu0 0
      %518 = vmatpush.bf16.msra.mxu0 %v506
      %519 = vmatpush.bf16.msra.mxu0 %v505
      %520 = vmatpush.bf16.msra.mxu0 %v504
      %521 = vmatpush.bf16.msra.mxu0 %v503
      %522 = vmatmul.bf16.gmra.mxu0 %v512
      %v523 = vpop.f32.mrf.mxu0
      %v524 = vadd.f32 0.0, %v523
      %v525 = vpop.f32.mrf.mxu0
      %v526 = vadd.f32 0.0, %v525
      %527 = vdwg.mxu0
      %v528 = vld [vmem:[%s5] sm:$0x1]
      %v530 = vperm.slane %v528, 0
      %v532 = vmul.f32 %v524, %v530
      %v533 = vmul.f32 %v526, %v530
      %v534 = vld [vmem:[%s6] sm:$0x1]
      %v536 = vperm.slane %v534, 0
      %v538 = vadd.f32 %v532, %v536
      %v539 = vadd.f32 %v533, %v536
      %v540 = vmax.f32 %v538, 0.0
      %v541 = vmax.f32 %v539, 0.0
      %v542 = vpack.c.bf16 %v541, %v540
      %v543 = vld [vmem:[%s7] sm:$0xff]
      %v544 = vld [vmem:[%s7 + $0x8] sm:$0xff]
      %v545 = vld [vmem:[%s7 + $0x10] sm:$0xff]
      %v546 = vld [vmem:[%s7 + $0x18] sm:$0xff]
      %v547 = vld [vmem:[%s7 + $0x20] sm:$0xff]
      %v548 = vld [vmem:[%s7 + $0x28] sm:$0xff]
      %v549 = vld [vmem:[%s7 + $0x30] sm:$0xff]
      %v550 = vld [vmem:[%s7 + $0x38] sm:$0xff]
      %v551 = vld [vmem:[%s7 + $0x40] sm:$0xff]
      %v552 = vld [vmem:[%s7 + $0x48] sm:$0xff]
      %v553 = vld [vmem:[%s7 + $0x50] sm:$0xff]
      %v554 = vld [vmem:[%s7 + $0x58] sm:$0xff]
      %v555 = vld [vmem:[%s7 + $0x60] sm:$0xff]
      %v556 = vld [vmem:[%s7 + $0x68] sm:$0xff]
      %v557 = vld [vmem:[%s7 + $0x70] sm:$0xff]
      %v558 = vld [vmem:[%s7 + $0x78] sm:$0xff]
      %v559 = vld [vmem:[%s7 + $0x80] sm:$0xff]
      %v560 = vld [vmem:[%s7 + $0x88] sm:$0xff]
      %v561 = vld [vmem:[%s7 + $0x90] sm:$0xff]
      %v562 = vld [vmem:[%s7 + $0x98] sm:$0xff]
      %v563 = vld [vmem:[%s7 + $0xa0] sm:$0xff]
      %v564 = vld [vmem:[%s7 + $0xa8] sm:$0xff]
      %v565 = vld [vmem:[%s7 + $0xb0] sm:$0xff]
      %v566 = vld [vmem:[%s7 + $0xb8] sm:$0xff]
      %v567 = vld [vmem:[%s7 + $0xc0] sm:$0xff]
      %v568 = vld [vmem:[%s7 + $0xc8] sm:$0xff]
      %v569 = vld [vmem:[%s7 + $0xd0] sm:$0xff]
      %v570 = vld [vmem:[%s7 + $0xd8] sm:$0xff]
      %v571 = vld [vmem:[%s7 + $0xe0] sm:$0xff]
      %v572 = vld [vmem:[%s7 + $0xe8] sm:$0xff]
      %v573 = vld [vmem:[%s7 + $0xf0] sm:$0xff]
      %v574 = vld [vmem:[%s7 + $0xf8] sm:$0xff]
      %v575 = vld [vmem:[%s7 + $0x100] sm:$0xff]
      %v576 = vld [vmem:[%s7 + $0x108] sm:$0xff]
      %v577 = vld [vmem:[%s7 + $0x110] sm:$0xff]
      %v578 = vld [vmem:[%s7 + $0x118] sm:$0xff]
      %v579 = vld [vmem:[%s7 + $0x120] sm:$0xff]
      %v580 = vld [vmem:[%s7 + $0x128] sm:$0xff]
      %v581 = vld [vmem:[%s7 + $0x130] sm:$0xff]
      %v582 = vld [vmem:[%s7 + $0x138] sm:$0xff]
      %v583 = vld [vmem:[%s7 + $0x140] sm:$0xff]
      %v584 = vld [vmem:[%s7 + $0x148] sm:$0xff]
      %v585 = vld [vmem:[%s7 + $0x150] sm:$0xff]
      %v586 = vld [vmem:[%s7 + $0x158] sm:$0xff]
      %v587 = vld [vmem:[%s7 + $0x160] sm:$0xff]
      %v588 = vld [vmem:[%s7 + $0x168] sm:$0xff]
      %v589 = vld [vmem:[%s7 + $0x170] sm:$0xff]
      %v590 = vld [vmem:[%s7 + $0x178] sm:$0xff]
      %v591 = vld [vmem:[%s7 + $0x180] sm:$0xff]
      %v592 = vld [vmem:[%s7 + $0x188] sm:$0xff]
      %v593 = vld [vmem:[%s7 + $0x190] sm:$0xff]
      %v594 = vld [vmem:[%s7 + $0x198] sm:$0xff]
      %v595 = vld [vmem:[%s7 + $0x1a0] sm:$0xff]
      %v596 = vld [vmem:[%s7 + $0x1a8] sm:$0xff]
      %v597 = vld [vmem:[%s7 + $0x1b0] sm:$0xff]
      %v598 = vld [vmem:[%s7 + $0x1b8] sm:$0xff]
      %v599 = vld [vmem:[%s7 + $0x1c0] sm:$0xff]
      %v600 = vld [vmem:[%s7 + $0x1c8] sm:$0xff]
      %v601 = vld [vmem:[%s7 + $0x1d0] sm:$0xff]
      %v602 = vld [vmem:[%s7 + $0x1d8] sm:$0xff]
      %v603 = vld [vmem:[%s7 + $0x1e0] sm:$0xff]
      %v604 = vld [vmem:[%s7 + $0x1e8] sm:$0xff]
      %v605 = vld [vmem:[%s7 + $0x1f0] sm:$0xff]
      %v606 = vld [vmem:[%s7 + $0x1f8] sm:$0xff]
      %v671 = vunpack.c.l.b16 %v543
      %v672 = vunpack.c.h.b16 %v543
      %v673 = vunpack.c.l.b16 %v544
      %v674 = vunpack.c.h.b16 %v544
      %v675 = vunpack.c.l.b16 %v545
      %v676 = vunpack.c.h.b16 %v545
      %v677 = vunpack.c.l.b16 %v546
      %v678 = vunpack.c.h.b16 %v546
      %v679 = vunpack.c.l.b16 %v547
      %v680 = vunpack.c.h.b16 %v547
      %v681 = vunpack.c.l.b16 %v548
      %v682 = vunpack.c.h.b16 %v548
      %v683 = vunpack.c.l.b16 %v549
      %v684 = vunpack.c.h.b16 %v549
      %v685 = vunpack.c.l.b16 %v550
      %v686 = vunpack.c.h.b16 %v550
      %v687 = vunpack.c.l.b16 %v551
      %v688 = vunpack.c.h.b16 %v551
      %v689 = vunpack.c.l.b16 %v552
      %v690 = vunpack.c.h.b16 %v552
      %v691 = vunpack.c.l.b16 %v553
      %v692 = vunpack.c.h.b16 %v553
      %v693 = vunpack.c.l.b16 %v554
      %v694 = vunpack.c.h.b16 %v554
      %v695 = vunpack.c.l.b16 %v555
      %v696 = vunpack.c.h.b16 %v555
      %v697 = vunpack.c.l.b16 %v556
      %v698 = vunpack.c.h.b16 %v556
      %v699 = vunpack.c.l.b16 %v557
      %v700 = vunpack.c.h.b16 %v557
      %v701 = vunpack.c.l.b16 %v558
      %v702 = vunpack.c.h.b16 %v558
      %v703 = vunpack.c.l.b16 %v559
      %v704 = vunpack.c.h.b16 %v559
      %v705 = vunpack.c.l.b16 %v560
      %v706 = vunpack.c.h.b16 %v560
      %v707 = vunpack.c.l.b16 %v561
      %v708 = vunpack.c.h.b16 %v561
      %v709 = vunpack.c.l.b16 %v562
      %v710 = vunpack.c.h.b16 %v562
      %v711 = vunpack.c.l.b16 %v563
      %v712 = vunpack.c.h.b16 %v563
      %v713 = vunpack.c.l.b16 %v564
      %v714 = vunpack.c.h.b16 %v564
      %v715 = vunpack.c.l.b16 %v565
      %v716 = vunpack.c.h.b16 %v565
      %v717 = vunpack.c.l.b16 %v566
      %v718 = vunpack.c.h.b16 %v566
      %v719 = vunpack.c.l.b16 %v567
      %v720 = vunpack.c.h.b16 %v567
      %v721 = vunpack.c.l.b16 %v568
      %v722 = vunpack.c.h.b16 %v568
      %v723 = vunpack.c.l.b16 %v569
      %v724 = vunpack.c.h.b16 %v569
      %v725 = vunpack.c.l.b16 %v570
      %v726 = vunpack.c.h.b16 %v570
      %v727 = vunpack.c.l.b16 %v571
      %v728 = vunpack.c.h.b16 %v571
      %v729 = vunpack.c.l.b16 %v572
      %v730 = vunpack.c.h.b16 %v572
      %v731 = vunpack.c.l.b16 %v573
      %v732 = vunpack.c.h.b16 %v573
      %v733 = vunpack.c.l.b16 %v574
      %v734 = vunpack.c.h.b16 %v574
      %v735 = vunpack.c.l.b16 %v575
      %v736 = vunpack.c.h.b16 %v575
      %v737 = vunpack.c.l.b16 %v576
      %v738 = vunpack.c.h.b16 %v576
      %v739 = vunpack.c.l.b16 %v577
      %v740 = vunpack.c.h.b16 %v577
      %v741 = vunpack.c.l.b16 %v578
      %v742 = vunpack.c.h.b16 %v578
      %v743 = vunpack.c.l.b16 %v579
      %v744 = vunpack.c.h.b16 %v579
      %v745 = vunpack.c.l.b16 %v580
      %v746 = vunpack.c.h.b16 %v580
      %v747 = vunpack.c.l.b16 %v581
      %v748 = vunpack.c.h.b16 %v581
      %v749 = vunpack.c.l.b16 %v582
      %v750 = vunpack.c.h.b16 %v582
      %v751 = vunpack.c.l.b16 %v583
      %v752 = vunpack.c.h.b16 %v583
      %v753 = vunpack.c.l.b16 %v584
      %v754 = vunpack.c.h.b16 %v584
      %v755 = vunpack.c.l.b16 %v585
      %v756 = vunpack.c.h.b16 %v585
      %v757 = vunpack.c.l.b16 %v586
      %v758 = vunpack.c.h.b16 %v586
      %v759 = vunpack.c.l.b16 %v587
      %v760 = vunpack.c.h.b16 %v587
      %v761 = vunpack.c.l.b16 %v588
      %v762 = vunpack.c.h.b16 %v588
      %v763 = vunpack.c.l.b16 %v589
      %v764 = vunpack.c.h.b16 %v589
      %v765 = vunpack.c.l.b16 %v590
      %v766 = vunpack.c.h.b16 %v590
      %v767 = vunpack.c.l.b16 %v591
      %v768 = vunpack.c.h.b16 %v591
      %v769 = vunpack.c.l.b16 %v592
      %v770 = vunpack.c.h.b16 %v592
      %v771 = vunpack.c.l.b16 %v593
      %v772 = vunpack.c.h.b16 %v593
      %v773 = vunpack.c.l.b16 %v594
      %v774 = vunpack.c.h.b16 %v594
      %v775 = vunpack.c.l.b16 %v595
      %v776 = vunpack.c.h.b16 %v595
      %v777 = vunpack.c.l.b16 %v596
      %v778 = vunpack.c.h.b16 %v596
      %v779 = vunpack.c.l.b16 %v597
      %v780 = vunpack.c.h.b16 %v597
      %v781 = vunpack.c.l.b16 %v598
      %v782 = vunpack.c.h.b16 %v598
      %v783 = vunpack.c.l.b16 %v599
      %v784 = vunpack.c.h.b16 %v599
      %v785 = vunpack.c.l.b16 %v600
      %v786 = vunpack.c.h.b16 %v600
      %v787 = vunpack.c.l.b16 %v601
      %v788 = vunpack.c.h.b16 %v601
      %v789 = vunpack.c.l.b16 %v602
      %v790 = vunpack.c.h.b16 %v602
      %v791 = vunpack.c.l.b16 %v603
      %v792 = vunpack.c.h.b16 %v603
      %v793 = vunpack.c.l.b16 %v604
      %v794 = vunpack.c.h.b16 %v604
      %v795 = vunpack.c.l.b16 %v605
      %v796 = vunpack.c.h.b16 %v605
      %v797 = vunpack.c.l.b16 %v606
      %v798 = vunpack.c.h.b16 %v606
      %v799 = vpack.c.b16 %v679, %v671
      %v800 = vpack.c.b16 %v680, %v672
      %v801 = vpack.c.b16 %v681, %v673
      %v802 = vpack.c.b16 %v682, %v674
      %v803 = vpack.c.b16 %v683, %v675
      %v804 = vpack.c.b16 %v684, %v676
      %v805 = vpack.c.b16 %v685, %v677
      %v806 = vpack.c.b16 %v686, %v678
      %v807 = vpack.c.b16 %v695, %v687
      %v808 = vpack.c.b16 %v696, %v688
      %v809 = vpack.c.b16 %v697, %v689
      %v810 = vpack.c.b16 %v698, %v690
      %v811 = vpack.c.b16 %v699, %v691
      %v812 = vpack.c.b16 %v700, %v692
      %v813 = vpack.c.b16 %v701, %v693
      %v814 = vpack.c.b16 %v702, %v694
      %v815 = vpack.c.b16 %v711, %v703
      %v816 = vpack.c.b16 %v712, %v704
      %v817 = vpack.c.b16 %v713, %v705
      %v818 = vpack.c.b16 %v714, %v706
      %v819 = vpack.c.b16 %v715, %v707
      %v820 = vpack.c.b16 %v716, %v708
      %v821 = vpack.c.b16 %v717, %v709
      %v822 = vpack.c.b16 %v718, %v710
      %v823 = vpack.c.b16 %v727, %v719
      %v824 = vpack.c.b16 %v728, %v720
      %v825 = vpack.c.b16 %v729, %v721
      %v826 = vpack.c.b16 %v730, %v722
      %v827 = vpack.c.b16 %v731, %v723
      %v828 = vpack.c.b16 %v732, %v724
      %v829 = vpack.c.b16 %v733, %v725
      %v830 = vpack.c.b16 %v734, %v726
      %v831 = vpack.c.b16 %v743, %v735
      %v832 = vpack.c.b16 %v744, %v736
      %v833 = vpack.c.b16 %v745, %v737
      %v834 = vpack.c.b16 %v746, %v738
      %v835 = vpack.c.b16 %v747, %v739
      %v836 = vpack.c.b16 %v748, %v740
      %v837 = vpack.c.b16 %v749, %v741
      %v838 = vpack.c.b16 %v750, %v742
      %v839 = vpack.c.b16 %v759, %v751
      %v840 = vpack.c.b16 %v760, %v752
      %v841 = vpack.c.b16 %v761, %v753
      %v842 = vpack.c.b16 %v762, %v754
      %v843 = vpack.c.b16 %v763, %v755
      %v844 = vpack.c.b16 %v764, %v756
      %v845 = vpack.c.b16 %v765, %v757
      %v846 = vpack.c.b16 %v766, %v758
      %v847 = vpack.c.b16 %v775, %v767
      %v848 = vpack.c.b16 %v776, %v768
      %v849 = vpack.c.b16 %v777, %v769
      %v850 = vpack.c.b16 %v778, %v770
      %v851 = vpack.c.b16 %v779, %v771
      %v852 = vpack.c.b16 %v780, %v772
      %v853 = vpack.c.b16 %v781, %v773
      %v854 = vpack.c.b16 %v782, %v774
      %v855 = vpack.c.b16 %v791, %v783
      %v856 = vpack.c.b16 %v792, %v784
      %v857 = vpack.c.b16 %v793, %v785
      %v858 = vpack.c.b16 %v794, %v786
      %v859 = vpack.c.b16 %v795, %v787
      %v860 = vpack.c.b16 %v796, %v788
      %v861 = vpack.c.b16 %v797, %v789
      %v862 = vpack.c.b16 %v798, %v790
      %927 = vmatpush.bf16.msra.mxu0 %v855
      %928 = vmatpush.bf16.msra.mxu0 %v847
      %929 = vmatpush.bf16.msra.mxu0 %v839
      %930 = vmatpush.bf16.msra.mxu0 %v831
      %931 = vmatpush.bf16.msra.mxu0 %v823
      %932 = vmatpush.bf16.msra.mxu0 %v815
      %933 = vmatpush.bf16.msra.mxu0 %v807
      %934 = vmatpush.bf16.msra.mxu0 %v799
      %935 = vmatmul.bf16.gmra.mxu0 %v542
      %v936 = vpop.f32.mrf.mxu0
      %v937 = vadd.f32 0.0, %v936
      %v938 = vpop.f32.mrf.mxu0
      %v939 = vadd.f32 0.0, %v938
      %940 = vdwg.mxu0
      %941 = vmatpush.bf16.msra.mxu0 %v856
      %942 = vmatpush.bf16.msra.mxu0 %v848
      %943 = vmatpush.bf16.msra.mxu0 %v840
      %944 = vmatpush.bf16.msra.mxu0 %v832
      %945 = vmatpush.bf16.msra.mxu0 %v824
      %946 = vmatpush.bf16.msra.mxu0 %v816
      %947 = vmatpush.bf16.msra.mxu0 %v808
      %948 = vmatpush.bf16.msra.mxu0 %v800
      %949 = vmatmul.bf16.gmra.mxu0 %v542
      %v950 = vpop.f32.mrf.mxu0
      %v951 = vadd.f32 0.0, %v950
      %v952 = vpop.f32.mrf.mxu0
      %v953 = vadd.f32 0.0, %v952
      %954 = vdwg.mxu0
      %955 = vmatpush.bf16.msra.mxu0 %v857
      %956 = vmatpush.bf16.msra.mxu0 %v849
      %957 = vmatpush.bf16.msra.mxu0 %v841
      %958 = vmatpush.bf16.msra.mxu0 %v833
      %959 = vmatpush.bf16.msra.mxu0 %v825
      %960 = vmatpush.bf16.msra.mxu0 %v817
      %961 = vmatpush.bf16.msra.mxu0 %v809
      %962 = vmatpush.bf16.msra.mxu0 %v801
      %963 = vmatmul.bf16.gmra.mxu0 %v542
      %v964 = vpop.f32.mrf.mxu0
      %v965 = vadd.f32 0.0, %v964
      %v966 = vpop.f32.mrf.mxu0
      %v967 = vadd.f32 0.0, %v966
      %968 = vdwg.mxu0
      %969 = vmatpush.bf16.msra.mxu0 %v858
      %970 = vmatpush.bf16.msra.mxu0 %v850
      %971 = vmatpush.bf16.msra.mxu0 %v842
      %972 = vmatpush.bf16.msra.mxu0 %v834
      %973 = vmatpush.bf16.msra.mxu0 %v826
      %974 = vmatpush.bf16.msra.mxu0 %v818
      %975 = vmatpush.bf16.msra.mxu0 %v810
      %976 = vmatpush.bf16.msra.mxu0 %v802
      %977 = vmatmul.bf16.gmra.mxu0 %v542
      %v978 = vpop.f32.mrf.mxu0
      %v979 = vadd.f32 0.0, %v978
      %v980 = vpop.f32.mrf.mxu0
      %v981 = vadd.f32 0.0, %v980
      %982 = vdwg.mxu0
      %983 = vmatpush.bf16.msra.mxu0 %v859
      %984 = vmatpush.bf16.msra.mxu0 %v851
      %985 = vmatpush.bf16.msra.mxu0 %v843
      %986 = vmatpush.bf16.msra.mxu0 %v835
      %987 = vmatpush.bf16.msra.mxu0 %v827
      %988 = vmatpush.bf16.msra.mxu0 %v819
      %989 = vmatpush.bf16.msra.mxu0 %v811
      %990 = vmatpush.bf16.msra.mxu0 %v803
      %991 = vmatmul.bf16.gmra.mxu0 %v542
      %v992 = vpop.f32.mrf.mxu0
      %v993 = vadd.f32 0.0, %v992
      %v994 = vpop.f32.mrf.mxu0
      %v995 = vadd.f32 0.0, %v994
      %996 = vdwg.mxu0
      %997 = vmatpush.bf16.msra.mxu0 %v860
      %998 = vmatpush.bf16.msra.mxu0 %v852
      %999 = vmatpush.bf16.msra.mxu0 %v844
      %1000 = vmatpush.bf16.msra.mxu0 %v836
      %1001 = vmatpush.bf16.msra.mxu0 %v828
      %1002 = vmatpush.bf16.msra.mxu0 %v820
      %1003 = vmatpush.bf16.msra.mxu0 %v812
      %1004 = vmatpush.bf16.msra.mxu0 %v804
      %1005 = vmatmul.bf16.gmra.mxu0 %v542
      %v1006 = vpop.f32.mrf.mxu0
      %v1007 = vadd.f32 0.0, %v1006
      %v1008 = vpop.f32.mrf.mxu0
      %v1009 = vadd.f32 0.0, %v1008
      %1010 = vdwg.mxu0
      %1011 = vmatpush.bf16.msra.mxu0 %v861
      %1012 = vmatpush.bf16.msra.mxu0 %v853
      %1013 = vmatpush.bf16.msra.mxu0 %v845
      %1014 = vmatpush.bf16.msra.mxu0 %v837
      %1015 = vmatpush.bf16.msra.mxu0 %v829
      %1016 = vmatpush.bf16.msra.mxu0 %v821
      %1017 = vmatpush.bf16.msra.mxu0 %v813
      %1018 = vmatpush.bf16.msra.mxu0 %v805
      %1019 = vmatmul.bf16.gmra.mxu0 %v542
      %v1020 = vpop.f32.mrf.mxu0
      %v1021 = vadd.f32 0.0, %v1020
      %v1022 = vpop.f32.mrf.mxu0
      %v1023 = vadd.f32 0.0, %v1022
      %1024 = vdwg.mxu0
      %1025 = vmatpush.bf16.msra.mxu0 %v862
      %1026 = vmatpush.bf16.msra.mxu0 %v854
      %1027 = vmatpush.bf16.msra.mxu0 %v846
      %1028 = vmatpush.bf16.msra.mxu0 %v838
      %1029 = vmatpush.bf16.msra.mxu0 %v830
      %1030 = vmatpush.bf16.msra.mxu0 %v822
      %1031 = vmatpush.bf16.msra.mxu0 %v814
      %1032 = vmatpush.bf16.msra.mxu0 %v806
      %1033 = vmatmul.bf16.gmra.mxu0 %v542
      %v1034 = vpop.f32.mrf.mxu0
      %v1035 = vadd.f32 0.0, %v1034
      %v1036 = vpop.f32.mrf.mxu0
      %v1037 = vadd.f32 0.0, %v1036
      %1038 = vdwg.mxu0
      %v1039 = vld [vmem:[%s8] sm:$0xff]
      %v1041 = vperm.slane %v1039, 0
      %v1042 = vperm.slane %v1039, 1
      %v1043 = vperm.slane %v1039, 2
      %v1044 = vperm.slane %v1039, 3
      %v1045 = vperm.slane %v1039, 4
      %v1046 = vperm.slane %v1039, 5
      %v1047 = vperm.slane %v1039, 6
      %v1048 = vperm.slane %v1039, 7
      %v1057 = vmul.f32 %v937, %v1041
      %v1058 = vmul.f32 %v951, %v1042
      %v1059 = vmul.f32 %v965, %v1043
      %v1060 = vmul.f32 %v979, %v1044
      %v1061 = vmul.f32 %v993, %v1045
      %v1062 = vmul.f32 %v1007, %v1046
      %v1063 = vmul.f32 %v1021, %v1047
      %v1064 = vmul.f32 %v1035, %v1048
      %v1065 = vmul.f32 %v939, %v1041
      %v1066 = vmul.f32 %v953, %v1042
      %v1067 = vmul.f32 %v967, %v1043
      %v1068 = vmul.f32 %v981, %v1044
      %v1069 = vmul.f32 %v995, %v1045
      %v1070 = vmul.f32 %v1009, %v1046
      %v1071 = vmul.f32 %v1023, %v1047
      %v1072 = vmul.f32 %v1037, %v1048
      %v1073 = vld [vmem:[%s9] sm:$0xff]
      %v1075 = vperm.slane %v1073, 0
      %v1076 = vperm.slane %v1073, 1
      %v1077 = vperm.slane %v1073, 2
      %v1078 = vperm.slane %v1073, 3
      %v1079 = vperm.slane %v1073, 4
      %v1080 = vperm.slane %v1073, 5
      %v1081 = vperm.slane %v1073, 6
      %v1082 = vperm.slane %v1073, 7
      %v1091 = vadd.f32 %v1057, %v1075
      %v1092 = vadd.f32 %v1058, %v1076
      %v1093 = vadd.f32 %v1059, %v1077
      %v1094 = vadd.f32 %v1060, %v1078
      %v1095 = vadd.f32 %v1061, %v1079
      %v1096 = vadd.f32 %v1062, %v1080
      %v1097 = vadd.f32 %v1063, %v1081
      %v1098 = vadd.f32 %v1064, %v1082
      %v1099 = vadd.f32 %v1065, %v1075
      %v1100 = vadd.f32 %v1066, %v1076
      %v1101 = vadd.f32 %v1067, %v1077
      %v1102 = vadd.f32 %v1068, %v1078
      %v1103 = vadd.f32 %v1069, %v1079
      %v1104 = vadd.f32 %v1070, %v1080
      %v1105 = vadd.f32 %v1071, %v1081
      %v1106 = vadd.f32 %v1072, %v1082
      %v1107 = vmax.f32 %v1091, 0.0
      %v1108 = vmax.f32 %v1092, 0.0
      %v1109 = vmax.f32 %v1093, 0.0
      %v1110 = vmax.f32 %v1094, 0.0
      %v1111 = vmax.f32 %v1095, 0.0
      %v1112 = vmax.f32 %v1096, 0.0
      %v1113 = vmax.f32 %v1097, 0.0
      %v1114 = vmax.f32 %v1098, 0.0
      %v1115 = vmax.f32 %v1099, 0.0
      %v1116 = vmax.f32 %v1100, 0.0
      %v1117 = vmax.f32 %v1101, 0.0
      %v1118 = vmax.f32 %v1102, 0.0
      %v1119 = vmax.f32 %v1103, 0.0
      %v1120 = vmax.f32 %v1104, 0.0
      %v1121 = vmax.f32 %v1105, 0.0
      %v1122 = vmax.f32 %v1106, 0.0
      %p1123 = scmp.eq.s32.totalorder %s26, 0
      // Predicated region
      $region61: #{pointnet_seg_head_forward.6} parent=59 // pred_check
        %p1124 = pneg %p1123
      $region62: #{pointnet_seg_head_forward.6} parent=59 // pred_check_branch
        %1126 = sbr.rel (%p1124) target = $region64
      $region63: #{pointnet_seg_head_forward.6} parent=59 // pred_region
        %1127 = vst [vmem:[%s405] sm:$0xff] -inf
      $region64: #{pointnet_seg_head_forward.6} parent=59 // pred_fallthru
        _
      %v1128 = vld [vmem:[%s405] sm:$0xff]
      %v1129 = vmax.f32 %v1107, %v1115
      %v1130 = vrot.slane %v1129, 4
      %v1131 = vmax.f32 %v1129, %v1130
      %v1132 = vrot.slane %v1131, 2
      %v1133 = vmax.f32 %v1131, %v1132
      %v1134 = vrot.slane %v1133, 1
      %v1135 = vmax.f32 %v1133, %v1134
      %v1136 = vmax.f32 %v1108, %v1116
      %v1137 = vrot.slane %v1136, 4
      %v1138 = vmax.f32 %v1136, %v1137
      %v1139 = vrot.slane %v1138, 2
      %v1140 = vmax.f32 %v1138, %v1139
      %v1141 = vrot.slane %v1140, 1
      %v1142 = vmax.f32 %v1140, %v1141
      %v1143 = vmax.f32 %v1109, %v1117
      %v1144 = vrot.slane %v1143, 4
      %v1145 = vmax.f32 %v1143, %v1144
      %v1146 = vrot.slane %v1145, 2
      %v1147 = vmax.f32 %v1145, %v1146
      %v1148 = vrot.slane %v1147, 1
      %v1149 = vmax.f32 %v1147, %v1148
      %v1150 = vmax.f32 %v1110, %v1118
      %v1151 = vrot.slane %v1150, 4
      %v1152 = vmax.f32 %v1150, %v1151
      %v1153 = vrot.slane %v1152, 2
      %v1154 = vmax.f32 %v1152, %v1153
      %v1155 = vrot.slane %v1154, 1
      %v1156 = vmax.f32 %v1154, %v1155
      %v1157 = vmax.f32 %v1111, %v1119
      %v1158 = vrot.slane %v1157, 4
      %v1159 = vmax.f32 %v1157, %v1158
      %v1160 = vrot.slane %v1159, 2
      %v1161 = vmax.f32 %v1159, %v1160
      %v1162 = vrot.slane %v1161, 1
      %v1163 = vmax.f32 %v1161, %v1162
      %v1164 = vmax.f32 %v1112, %v1120
      %v1165 = vrot.slane %v1164, 4
      %v1166 = vmax.f32 %v1164, %v1165
      %v1167 = vrot.slane %v1166, 2
      %v1168 = vmax.f32 %v1166, %v1167
      %v1169 = vrot.slane %v1168, 1
      %v1170 = vmax.f32 %v1168, %v1169
      %v1171 = vmax.f32 %v1113, %v1121
      %v1172 = vrot.slane %v1171, 4
      %v1173 = vmax.f32 %v1171, %v1172
      %v1174 = vrot.slane %v1173, 2
      %v1175 = vmax.f32 %v1173, %v1174
      %v1176 = vrot.slane %v1175, 1
      %v1177 = vmax.f32 %v1175, %v1176
      %v1178 = vmax.f32 %v1114, %v1122
      %v1179 = vrot.slane %v1178, 4
      %v1180 = vmax.f32 %v1178, %v1179
      %v1181 = vrot.slane %v1180, 2
      %v1182 = vmax.f32 %v1180, %v1181
      %v1183 = vrot.slane %v1182, 1
      %v1184 = vmax.f32 %v1182, %v1183
      %v1193 = vrot.slane %v1142, 7
      %v1194 = vrot.slane %v1149, 6
      %v1195 = vrot.slane %v1156, 5
      %v1196 = vrot.slane %v1163, 4
      %v1197 = vrot.slane %v1170, 3
      %v1198 = vrot.slane %v1177, 2
      %v1199 = vrot.slane %v1184, 1
      %vm1200 = vcmask 1040384
      %v1201 = vsel %vm1200, %v1135, %v1193
      %vm1202 = vcmask 1042434
      %v1203 = vsel %vm1202, %v1194, %v1195
      %vm1204 = vcmask 1041408
      %v1205 = vsel %vm1204, %v1201, %v1203
      %vm1206 = vcmask 1044484
      %v1207 = vsel %vm1206, %v1196, %v1197
      %vm1208 = vcmask 1046534
      %v1209 = vsel %vm1208, %v1198, %v1199
      %vm1210 = vcmask 1045508
      %v1211 = vsel %vm1210, %v1207, %v1209
      %vm1212 = vcmask 1043456
      %v1213 = vsel %vm1212, %v1205, %v1211
      %v1215 = vmax.f32 %v1128, %v1213
      %1216 = vst [vmem:[%s405] sm:$0xff] %v1215
      %p1217 = scmp.lt.s32.totalorder %s25, 1
      %s1218 = scalar_select %p1217, %s25, 1
      %s1219 = smul.addr %s1218, 8
      %s1220 = scalar_lea.vmem %s10, %s1219
      // Predicated region
      $region65: #{pointnet_seg_head_forward.6} parent=59 // pred_check
        %p1221 = pneg %p273
      $region66: #{pointnet_seg_head_forward.6} parent=59 // pred_check_branch
        %1223 = sbr.rel (%p1221) target = $region68
      $region67: #{pointnet_seg_head_forward.6} parent=59 // pred_region
        _
      $region68: #{pointnet_seg_head_forward.6} parent=59 // pred_fallthru
        _
    $region60: #{pointnet_seg_head_forward.6} parent=5 // pred_fallthru
      _
    %p1224 = scmp.le.s32.totalorder 2, %s16
    // Predicated region
    $region69: #{pointnet_seg_head_forward.6} parent=5 // pred_check
      %p1225 = pneg %p1224
    $region70: #{pointnet_seg_head_forward.6} parent=5 // pred_check_branch
      %1227 = sbr.rel (%p1225) target = $region72
    $region71: #{pointnet_seg_head_forward.6} parent=5 // pred_region
      %s1228 = ssub.s32 %s16, 2
      // Predicated region
      $region73: #{pointnet_seg_head_forward.6} parent=71 // pred_check
        %p1229 = pneg %p279
      $region74: #{pointnet_seg_head_forward.6} parent=71 // pred_check_branch
        %1231 = sbr.rel (%p1229) target = $region76
      $region75: #{pointnet_seg_head_forward.6} parent=71 // pred_region
        %p1232 = scmp.lt.s32.totalorder %s27, 1
        %s1233 = scalar_select %p1232, %s27, 1
        %s1234 = smul.addr %s1233, 8
        %s1235 = scalar_lea.vmem %s10, %s1234
      $region76: #{pointnet_seg_head_forward.6} parent=71 // pred_fallthru
        _
    $region72: #{pointnet_seg_head_forward.6} parent=5 // pred_fallthru
      _
  $region6: #{pointnet_seg_head_forward.6} parent=0 // loop_footer
    %s20 = sadd.s32 1, %s16
  $region7: #{pointnet_seg_head_forward.6} parent=0 // loop_footer_branch
    %15 = sbr.rel target = $region3
  $region8: #{pointnet_seg_head_forward.6} parent=0 // loop_exit
    _

// kernel: pointnet_seg_head_forward.7
$region0: #{pointnet_seg_head_forward.7}
  #allocation0 [shape = 'u32[]', space=smem, size = 0x4, offset = 0x4, fixed_abs, tag = 'smem constant byte address 0x4 - core index']
  #allocation1 [shape = 'u32[72,128]{1,0:T(1,128)}', space=vmem, size = 0x9000, scoped, tag = 'internal scratch']
  %s0 = inlined_call_operand.vmem [shape: bf16[2,16,64], index: 0, kind: input, shape index: {}]
  %s1 = inlined_call_operand.vmem [shape: bf16[2,64,512], index: 1, kind: input, shape index: {}]
  %s2 = inlined_call_operand.vmem [shape: f32[2,1,512], index: 2, kind: input, shape index: {}]
  %s3 = inlined_call_operand.vmem [shape: f32[1,512], index: 3, kind: input, shape index: {}]
  %s4 = inlined_call_operand.vmem [shape: bf16[512,256], index: 4, kind: input, shape index: {}]
  %s5 = inlined_call_operand.vmem [shape: f32[1,256], index: 5, kind: input, shape index: {}]
  %s6 = inlined_call_operand.vmem [shape: f32[1,256], index: 6, kind: input, shape index: {}]
  %s7 = inlined_call_operand.vmem [shape: bf16[256,128], index: 7, kind: input, shape index: {}]
  %s8 = inlined_call_operand.vmem [shape: f32[1,128], index: 8, kind: input, shape index: {}]
  %s9 = inlined_call_operand.vmem [shape: f32[1,128], index: 9, kind: input, shape index: {}]
  %s10 = inlined_call_operand.vmem [shape: bf16[128,2], index: 10, kind: input, shape index: {}]
  %s11 = inlined_call_operand.vmem [shape: f32[1,2], index: 11, kind: input, shape index: {}]
  %s12 = inlined_call_operand.vmem [shape: f32[2,16,2], index: 12, kind: output, shape index: {}]
  %s13 = sld [smem:[#allocation0]]
  $region81: #{pointnet_seg_head_forward.7} parent=0
    _
  %s15 = ssub.s32 1, %s13
  %s16 = scalar_select 0, %s15, %s13
  loop: start=0, step=1, limit=4
  $region2: #{pointnet_seg_head_forward.7} parent=0 // loop_pre_header
    _
  $region3: #{pointnet_seg_head_forward.7} parent=0 // loop_header
    %s18 = sphi 0, %s22
    %p19 = scmp.ge.s32.totalorder %s18, 4
    %s25 = sphi 0, %s37
    %s26 = sphi 0, %s33
    %s27 = sphi 0, %s25
    %s28 = sphi 0, %s26
    %s29 = sphi 0, %s27
    %s30 = sphi 0, %s28
    %s42 = sphi 0, %s44
    %s45 = sphi 0, %s42
    %s46 = sphi 0, %s45
    %s62 = sphi 0, %s46
    %s68 = sphi 0, %s70
    %s71 = sphi 0, %s68
    %s72 = sphi 0, %s71
    %s88 = sphi 0, %s72
    %s94 = sphi 0, %s96
    %s97 = sphi 0, %s94
    %s98 = sphi 0, %s97
    %s114 = sphi 0, %s98
    %s118 = sphi 0, %s118
    %s120 = sphi 0, %s118
    %s121 = sphi 0, %s120
    %s135 = sphi 0, %s121
    %s139 = sphi 0, %s139
    %s141 = sphi 0, %s139
    %s142 = sphi 0, %s141
    %s156 = sphi 0, %s142
    %s160 = sphi 0, %s160
    %s162 = sphi 0, %s160
    %s163 = sphi 0, %s162
    %s177 = sphi 0, %s163
    %s181 = sphi 0, %s181
    %s183 = sphi 0, %s181
    %s184 = sphi 0, %s183
    %s198 = sphi 0, %s184
    %s202 = sphi 0, %s202
    %s204 = sphi 0, %s202
    %s205 = sphi 0, %s204
    %s219 = sphi 0, %s205
    %s223 = sphi 0, %s223
    %s225 = sphi 0, %s223
    %s226 = sphi 0, %s225
    %s240 = sphi 0, %s226
    %s244 = sphi 0, %s244
    %s246 = sphi 0, %s244
    %s247 = sphi 0, %s246
    %s261 = sphi 0, %s247
    %s265 = sphi 0, %s265
    %s267 = sphi 0, %s265
    %s268 = sphi 0, %s267
    %s282 = sphi 0, %s268
    %s286 = sphi 0, %s286
    %s288 = sphi 0, %s286
    %s289 = sphi 0, %s288
    %s303 = sphi 0, %s289
    %s311 = sphi 0, %s313
    %s314 = sphi 0, %s311
    %s315 = sphi 0, %s314
    %s331 = sphi 0, %s315
  $region4: #{pointnet_seg_head_forward.7} parent=0 // loop_header_branch
    %21 = sbr.rel (%p19) target = $region8
  $region5: #{pointnet_seg_head_forward.7} parent=0 // loop_body
    %s23 = ssub.s32 %s18, 1
    %s24 = ssub.s32 %s18, 2
    %s31 = sadd.s32 1, %s26
    %p32 = scmp.ge.s32.totalorder %s31, 1
    %s33 = scalar_select %p32, 0, %s31
    %s34 = sadd.s32 1, %s25
    %s35 = scalar_select %p32, %s34, %s25
    %p36 = scmp.ge.s32.totalorder %s35, 2
    %s37 = scalar_select %p36, 0, %s35
    %s38 = ssub.s32 %s25, %s37
    %s39 = ssub.s32 %s26, %s33
    %s40 = sor.u32 %s38, %s39
    %p41 = scmp.eq.s32.totalorder %s40, 0
    %s43 = sadd.s32 %s42, 1
    %s44 = scalar_select %p41, %s42, %s43
    %p47 = pneg %p41
    %p48 = scmp.eq.s32.totalorder %s18, 1
    %p49 = por %p47, %p48
    %p50 = scmp.ne.s32.totalorder %s42, %s45
    %p51 = scmp.eq.s32.totalorder %s18, 0
    %p52 = por %p50, %p51
    %p53 = scmp.ne.s32.totalorder %s42, %s45
    %p54 = scmp.eq.s32.totalorder %s23, 1
    %p55 = por %p53, %p54
    %p56 = scmp.ne.s32.totalorder %s45, %s46
    %p57 = scmp.eq.s32.totalorder %s23, 0
    %p58 = por %p56, %p57
    %p59 = scmp.ne.s32.totalorder %s45, %s46
    %p60 = scmp.eq.s32.totalorder %s24, 1
    %p61 = por %p59, %p60
    %p63 = scmp.ne.s32.totalorder %s46, %s62
    %p64 = scmp.eq.s32.totalorder %s24, 0
    %p65 = por %p63, %p64
    %s66 = ssub.s32 %s25, %s37
    %p67 = scmp.eq.s32.totalorder %s66, 0
    %s69 = sadd.s32 %s68, 1
    %s70 = scalar_select %p67, %s68, %s69
    %p73 = pneg %p67
    %p74 = scmp.eq.s32.totalorder %s18, 1
    %p75 = por %p73, %p74
    %p76 = scmp.ne.s32.totalorder %s68, %s71
    %p77 = scmp.eq.s32.totalorder %s18, 0
    %p78 = por %p76, %p77
    %p79 = scmp.ne.s32.totalorder %s68, %s71
    %p80 = scmp.eq.s32.totalorder %s23, 1
    %p81 = por %p79, %p80
    %p82 = scmp.ne.s32.totalorder %s71, %s72
    %p83 = scmp.eq.s32.totalorder %s23, 0
    %p84 = por %p82, %p83
    %p85 = scmp.ne.s32.totalorder %s71, %s72
    %p86 = scmp.eq.s32.totalorder %s24, 1
    %p87 = por %p85, %p86
    %p89 = scmp.ne.s32.totalorder %s72, %s88
    %p90 = scmp.eq.s32.totalorder %s24, 0
    %p91 = por %p89, %p90
    %s92 = ssub.s32 %s25, %s37
    %p93 = scmp.eq.s32.totalorder %s92, 0
    %s95 = sadd.s32 %s94, 1
    %s96 = scalar_select %p93, %s94, %s95
    %p99 = pneg %p93
    %p100 = scmp.eq.s32.totalorder %s18, 1
    %p101 = por %p99, %p100
    %p102 = scmp.ne.s32.totalorder %s94, %s97
    %p103 = scmp.eq.s32.totalorder %s18, 0
    %p104 = por %p102, %p103
    %p105 = scmp.ne.s32.totalorder %s94, %s97
    %p106 = scmp.eq.s32.totalorder %s23, 1
    %p107 = por %p105, %p106
    %p108 = scmp.ne.s32.totalorder %s97, %s98
    %p109 = scmp.eq.s32.totalorder %s23, 0
    %p110 = por %p108, %p109
    %p111 = scmp.ne.s32.totalorder %s97, %s98
    %p112 = scmp.eq.s32.totalorder %s24, 1
    %p113 = por %p111, %p112
    %p115 = scmp.ne.s32.totalorder %s98, %s114
    %p116 = scmp.eq.s32.totalorder %s24, 0
    %p117 = por %p115, %p116
    %s119 = sadd.s32 %s118, 1
    %p122 = scmp.eq.s32.totalorder %s18, 1
    %p123 = scmp.ne.s32.totalorder %s118, %s120
    %p124 = scmp.eq.s32.totalorder %s18, 0
    %p125 = por %p123, %p124
    %p126 = scmp.ne.s32.totalorder %s118, %s120
    %p127 = scmp.eq.s32.totalorder %s23, 1
    %p128 = por %p126, %p127
    %p129 = scmp.ne.s32.totalorder %s120, %s121
    %p130 = scmp.eq.s32.totalorder %s23, 0
    %p131 = por %p129, %p130
    %p132 = scmp.ne.s32.totalorder %s120, %s121
    %p133 = scmp.eq.s32.totalorder %s24, 1
    %p134 = por %p132, %p133
    %p136 = scmp.ne.s32.totalorder %s121, %s135
    %p137 = scmp.eq.s32.totalorder %s24, 0
    %p138 = por %p136, %p137
    %s140 = sadd.s32 %s139, 1
    %p143 = scmp.eq.s32.totalorder %s18, 1
    %p144 = scmp.ne.s32.totalorder %s139, %s141
    %p145 = scmp.eq.s32.totalorder %s18, 0
    %p146 = por %p144, %p145
    %p147 = scmp.ne.s32.totalorder %s139, %s141
    %p148 = scmp.eq.s32.totalorder %s23, 1
    %p149 = por %p147, %p148
    %p150 = scmp.ne.s32.totalorder %s141, %s142
    %p151 = scmp.eq.s32.totalorder %s23, 0
    %p152 = por %p150, %p151
    %p153 = scmp.ne.s32.totalorder %s141, %s142
    %p154 = scmp.eq.s32.totalorder %s24, 1
    %p155 = por %p153, %p154
    %p157 = scmp.ne.s32.totalorder %s142, %s156
    %p158 = scmp.eq.s32.totalorder %s24, 0
    %p159 = por %p157, %p158
    %s161 = sadd.s32 %s160, 1
    %p164 = scmp.eq.s32.totalorder %s18, 1
    %p165 = scmp.ne.s32.totalorder %s160, %s162
    %p166 = scmp.eq.s32.totalorder %s18, 0
    %p167 = por %p165, %p166
    %p168 = scmp.ne.s32.totalorder %s160, %s162
    %p169 = scmp.eq.s32.totalorder %s23, 1
    %p170 = por %p168, %p169
    %p171 = scmp.ne.s32.totalorder %s162, %s163
    %p172 = scmp.eq.s32.totalorder %s23, 0
    %p173 = por %p171, %p172
    %p174 = scmp.ne.s32.totalorder %s162, %s163
    %p175 = scmp.eq.s32.totalorder %s24, 1
    %p176 = por %p174, %p175
    %p178 = scmp.ne.s32.totalorder %s163, %s177
    %p179 = scmp.eq.s32.totalorder %s24, 0
    %p180 = por %p178, %p179
    %s182 = sadd.s32 %s181, 1
    %p185 = scmp.eq.s32.totalorder %s18, 1
    %p186 = scmp.ne.s32.totalorder %s181, %s183
    %p187 = scmp.eq.s32.totalorder %s18, 0
    %p188 = por %p186, %p187
    %p189 = scmp.ne.s32.totalorder %s181, %s183
    %p190 = scmp.eq.s32.totalorder %s23, 1
    %p191 = por %p189, %p190
    %p192 = scmp.ne.s32.totalorder %s183, %s184
    %p193 = scmp.eq.s32.totalorder %s23, 0
    %p194 = por %p192, %p193
    %p195 = scmp.ne.s32.totalorder %s183, %s184
    %p196 = scmp.eq.s32.totalorder %s24, 1
    %p197 = por %p195, %p196
    %p199 = scmp.ne.s32.totalorder %s184, %s198
    %p200 = scmp.eq.s32.totalorder %s24, 0
    %p201 = por %p199, %p200
    %s203 = sadd.s32 %s202, 1
    %p206 = scmp.eq.s32.totalorder %s18, 1
    %p207 = scmp.ne.s32.totalorder %s202, %s204
    %p208 = scmp.eq.s32.totalorder %s18, 0
    %p209 = por %p207, %p208
    %p210 = scmp.ne.s32.totalorder %s202, %s204
    %p211 = scmp.eq.s32.totalorder %s23, 1
    %p212 = por %p210, %p211
    %p213 = scmp.ne.s32.totalorder %s204, %s205
    %p214 = scmp.eq.s32.totalorder %s23, 0
    %p215 = por %p213, %p214
    %p216 = scmp.ne.s32.totalorder %s204, %s205
    %p217 = scmp.eq.s32.totalorder %s24, 1
    %p218 = por %p216, %p217
    %p220 = scmp.ne.s32.totalorder %s205, %s219
    %p221 = scmp.eq.s32.totalorder %s24, 0
    %p222 = por %p220, %p221
    %s224 = sadd.s32 %s223, 1
    %p227 = scmp.eq.s32.totalorder %s18, 1
    %p228 = scmp.ne.s32.totalorder %s223, %s225
    %p229 = scmp.eq.s32.totalorder %s18, 0
    %p230 = por %p228, %p229
    %p231 = scmp.ne.s32.totalorder %s223, %s225
    %p232 = scmp.eq.s32.totalorder %s23, 1
    %p233 = por %p231, %p232
    %p234 = scmp.ne.s32.totalorder %s225, %s226
    %p235 = scmp.eq.s32.totalorder %s23, 0
    %p236 = por %p234, %p235
    %p237 = scmp.ne.s32.totalorder %s225, %s226
    %p238 = scmp.eq.s32.totalorder %s24, 1
    %p239 = por %p237, %p238
    %p241 = scmp.ne.s32.totalorder %s226, %s240
    %p242 = scmp.eq.s32.totalorder %s24, 0
    %p243 = por %p241, %p242
    %s245 = sadd.s32 %s244, 1
    %p248 = scmp.eq.s32.totalorder %s18, 1
    %p249 = scmp.ne.s32.totalorder %s244, %s246
    %p250 = scmp.eq.s32.totalorder %s18, 0
    %p251 = por %p249, %p250
    %p252 = scmp.ne.s32.totalorder %s244, %s246
    %p253 = scmp.eq.s32.totalorder %s23, 1
    %p254 = por %p252, %p253
    %p255 = scmp.ne.s32.totalorder %s246, %s247
    %p256 = scmp.eq.s32.totalorder %s23, 0
    %p257 = por %p255, %p256
    %p258 = scmp.ne.s32.totalorder %s246, %s247
    %p259 = scmp.eq.s32.totalorder %s24, 1
    %p260 = por %p258, %p259
    %p262 = scmp.ne.s32.totalorder %s247, %s261
    %p263 = scmp.eq.s32.totalorder %s24, 0
    %p264 = por %p262, %p263
    %s266 = sadd.s32 %s265, 1
    %p269 = scmp.eq.s32.totalorder %s18, 1
    %p270 = scmp.ne.s32.totalorder %s265, %s267
    %p271 = scmp.eq.s32.totalorder %s18, 0
    %p272 = por %p270, %p271
    %p273 = scmp.ne.s32.totalorder %s265, %s267
    %p274 = scmp.eq.s32.totalorder %s23, 1
    %p275 = por %p273, %p274
    %p276 = scmp.ne.s32.totalorder %s267, %s268
    %p277 = scmp.eq.s32.totalorder %s23, 0
    %p278 = por %p276, %p277
    %p279 = scmp.ne.s32.totalorder %s267, %s268
    %p280 = scmp.eq.s32.totalorder %s24, 1
    %p281 = por %p279, %p280
    %p283 = scmp.ne.s32.totalorder %s268, %s282
    %p284 = scmp.eq.s32.totalorder %s24, 0
    %p285 = por %p283, %p284
    %s287 = sadd.s32 %s286, 1
    %p290 = scmp.eq.s32.totalorder %s18, 1
    %p291 = scmp.ne.s32.totalorder %s286, %s288
    %p292 = scmp.eq.s32.totalorder %s18, 0
    %p293 = por %p291, %p292
    %p294 = scmp.ne.s32.totalorder %s286, %s288
    %p295 = scmp.eq.s32.totalorder %s23, 1
    %p296 = por %p294, %p295
    %p297 = scmp.ne.s32.totalorder %s288, %s289
    %p298 = scmp.eq.s32.totalorder %s23, 0
    %p299 = por %p297, %p298
    %p300 = scmp.ne.s32.totalorder %s288, %s289
    %p301 = scmp.eq.s32.totalorder %s24, 1
    %p302 = por %p300, %p301
    %p304 = scmp.ne.s32.totalorder %s289, %s303
    %p305 = scmp.eq.s32.totalorder %s24, 0
    %p306 = por %p304, %p305
    %s307 = ssub.s32 %s25, %s37
    %s308 = ssub.s32 %s26, %s33
    %s309 = sor.u32 %s307, %s308
    %p310 = scmp.eq.s32.totalorder %s309, 0
    %s312 = sadd.s32 %s311, 1
    %s313 = scalar_select %p310, %s311, %s312
    %p316 = pneg %p310
    %p317 = scmp.eq.s32.totalorder %s18, 1
    %p318 = por %p316, %p317
    %p319 = scmp.ne.s32.totalorder %s311, %s314
    %p320 = scmp.eq.s32.totalorder %s18, 0
    %p321 = por %p319, %p320
    %p322 = scmp.ne.s32.totalorder %s311, %s314
    %p323 = scmp.eq.s32.totalorder %s23, 1
    %p324 = por %p322, %p323
    %p325 = scmp.ne.s32.totalorder %s314, %s315
    %p326 = scmp.eq.s32.totalorder %s23, 0
    %p327 = por %p325, %p326
    %p328 = scmp.ne.s32.totalorder %s314, %s315
    %p329 = scmp.eq.s32.totalorder %s24, 1
    %p330 = por %p328, %p329
    %p332 = scmp.ne.s32.totalorder %s315, %s331
    %p333 = scmp.eq.s32.totalorder %s24, 0
    %p334 = por %p332, %p333
    %p335 = scmp.le.s32.totalorder 1, %s18
    %p336 = scmp.lt.s32.totalorder %s18, 3
    %p337 = pnand %p335, %p336
    %p338 = pneg %p337
    // Predicated region
    $region9: #{pointnet_seg_head_forward.7} parent=5 // pred_check
      _
    $region10: #{pointnet_seg_head_forward.7} parent=5 // pred_check_branch
      %340 = sbr.rel (%p337) target = $region12
    $region11: #{pointnet_seg_head_forward.7} parent=5 // pred_region
      %s341 = ssub.s32 %s18, 1
      // Predicated region
      $region13: #{pointnet_seg_head_forward.7} parent=11 // pred_check
        %p342 = pneg %p131
      $region14: #{pointnet_seg_head_forward.7} parent=11 // pred_check_branch
        %344 = sbr.rel (%p342) target = $region16
      $region15: #{pointnet_seg_head_forward.7} parent=11 // pred_region
        _
      $region16: #{pointnet_seg_head_forward.7} parent=11 // pred_fallthru
        _
      // Predicated region
      $region17: #{pointnet_seg_head_forward.7} parent=11 // pred_check
        %p345 = pneg %p152
      $region18: #{pointnet_seg_head_forward.7} parent=11 // pred_check_branch
        %347 = sbr.rel (%p345) target = $region20
      $region19: #{pointnet_seg_head_forward.7} parent=11 // pred_region
        _
      $region20: #{pointnet_seg_head_forward.7} parent=11 // pred_fallthru
        _
      // Predicated region
      $region21: #{pointnet_seg_head_forward.7} parent=11 // pred_check
        %p348 = pneg %p173
      $region22: #{pointnet_seg_head_forward.7} parent=11 // pred_check_branch
        %350 = sbr.rel (%p348) target = $region24
      $region23: #{pointnet_seg_head_forward.7} parent=11 // pred_region
        _
      $region24: #{pointnet_seg_head_forward.7} parent=11 // pred_fallthru
        _
      // Predicated region
      $region25: #{pointnet_seg_head_forward.7} parent=11 // pred_check
        %p351 = pneg %p194
      $region26: #{pointnet_seg_head_forward.7} parent=11 // pred_check_branch
        %353 = sbr.rel (%p351) target = $region28
      $region27: #{pointnet_seg_head_forward.7} parent=11 // pred_region
        _
      $region28: #{pointnet_seg_head_forward.7} parent=11 // pred_fallthru
        _
      // Predicated region
      $region29: #{pointnet_seg_head_forward.7} parent=11 // pred_check
        %p354 = pneg %p215
      $region30: #{pointnet_seg_head_forward.7} parent=11 // pred_check_branch
        %356 = sbr.rel (%p354) target = $region32
      $region31: #{pointnet_seg_head_forward.7} parent=11 // pred_region
        _
      $region32: #{pointnet_seg_head_forward.7} parent=11 // pred_fallthru
        _
      // Predicated region
      $region33: #{pointnet_seg_head_forward.7} parent=11 // pred_check
        %p357 = pneg %p236
      $region34: #{pointnet_seg_head_forward.7} parent=11 // pred_check_branch
        %359 = sbr.rel (%p357) target = $region36
      $region35: #{pointnet_seg_head_forward.7} parent=11 // pred_region
        _
      $region36: #{pointnet_seg_head_forward.7} parent=11 // pred_fallthru
        _
      // Predicated region
      $region37: #{pointnet_seg_head_forward.7} parent=11 // pred_check
        %p360 = pneg %p257
      $region38: #{pointnet_seg_head_forward.7} parent=11 // pred_check_branch
        %362 = sbr.rel (%p360) target = $region40
      $region39: #{pointnet_seg_head_forward.7} parent=11 // pred_region
        _
      $region40: #{pointnet_seg_head_forward.7} parent=11 // pred_fallthru
        _
      // Predicated region
      $region41: #{pointnet_seg_head_forward.7} parent=11 // pred_check
        %p363 = pneg %p278
      $region42: #{pointnet_seg_head_forward.7} parent=11 // pred_check_branch
        %365 = sbr.rel (%p363) target = $region44
      $region43: #{pointnet_seg_head_forward.7} parent=11 // pred_region
        _
      $region44: #{pointnet_seg_head_forward.7} parent=11 // pred_fallthru
        _
      // Predicated region
      $region45: #{pointnet_seg_head_forward.7} parent=11 // pred_check
        %p366 = pneg %p299
      $region46: #{pointnet_seg_head_forward.7} parent=11 // pred_check_branch
        %368 = sbr.rel (%p366) target = $region48
      $region47: #{pointnet_seg_head_forward.7} parent=11 // pred_region
        _
      $region48: #{pointnet_seg_head_forward.7} parent=11 // pred_fallthru
        _
    $region12: #{pointnet_seg_head_forward.7} parent=5 // pred_fallthru
      _
    %p369 = scmp.lt.s32.totalorder %s18, 2
    // Predicated region
    $region49: #{pointnet_seg_head_forward.7} parent=5 // pred_check
      %p370 = pneg %p369
    $region50: #{pointnet_seg_head_forward.7} parent=5 // pred_check_branch
      %372 = sbr.rel (%p370) target = $region52
    $region51: #{pointnet_seg_head_forward.7} parent=5 // pred_region
      // Predicated region
      $region53: #{pointnet_seg_head_forward.7} parent=51 // pred_check
        %p373 = pneg %p52
      $region54: #{pointnet_seg_head_forward.7} parent=51 // pred_check_branch
        %375 = sbr.rel (%p373) target = $region56
      $region55: #{pointnet_seg_head_forward.7} parent=51 // pred_region
        %s376 = smul.u32 2, %s26
        %p377 = scmp.lt.s32.totalorder %s25, 1
        %s378 = scalar_select %p377, %s25, 1
        %p379 = scmp.lt.s32.totalorder %s376, 1
        %s380 = scalar_select %p379, %s376, 1
        %s381 = smul.addr %s378, 2
        %s382 = sadd.s32 %s380, %s381
        %s383 = smul.addr %s382, 4
        %s384 = scalar_lea.vmem %s0, %s383
        %s385 = smul.u32 2, %s26
      $region56: #{pointnet_seg_head_forward.7} parent=51 // pred_fallthru
        _
      // Predicated region
      $region57: #{pointnet_seg_head_forward.7} parent=51 // pred_check
        %p386 = pneg %p78
      $region58: #{pointnet_seg_head_forward.7} parent=51 // pred_check_branch
        %388 = sbr.rel (%p386) target = $region60
      $region59: #{pointnet_seg_head_forward.7} parent=51 // pred_region
        %p389 = scmp.lt.s32.totalorder %s25, 1
        %s390 = scalar_select %p389, %s25, 1
        %s391 = smul.addr %s390, 32
        %s392 = smul.addr %s391, 4
        %s393 = scalar_lea.vmem %s1, %s392
      $region60: #{pointnet_seg_head_forward.7} parent=51 // pred_fallthru
        _
      // Predicated region
      $region61: #{pointnet_seg_head_forward.7} parent=51 // pred_check
        %p394 = pneg %p104
      $region62: #{pointnet_seg_head_forward.7} parent=51 // pred_check_branch
        %396 = sbr.rel (%p394) target = $region64
      $region63: #{pointnet_seg_head_forward.7} parent=51 // pred_region
        %p397 = scmp.lt.s32.totalorder %s25, 1
        %s398 = scalar_select %p397, %s25, 1
        %s399 = smul.addr %s398, 4
        %s400 = scalar_lea.vmem %s2, %s399
      $region64: #{pointnet_seg_head_forward.7} parent=51 // pred_fallthru
        _
    $region52: #{pointnet_seg_head_forward.7} parent=5 // pred_fallthru
      _
    %p401 = scmp.le.s32.totalorder 1, %s18
    %p402 = scmp.lt.s32.totalorder %s18, 3
    %p403 = pnand %p401, %p402
    %p404 = pneg %p403
    // Predicated region
    $region65: #{pointnet_seg_head_forward.7} parent=5 // pred_check
      _
    $region66: #{pointnet_seg_head_forward.7} parent=5 // pred_check_branch
      %406 = sbr.rel (%p403) target = $region68
    $region67: #{pointnet_seg_head_forward.7} parent=5 // pred_region
      %s407 = ssub.s32 %s18, 1
      %s408 = smul.u32 2, %s28
      %p409 = scmp.lt.s32.totalorder %s27, 1
      %s410 = scalar_select %p409, %s27, 1
      %p411 = scmp.lt.s32.totalorder %s408, 1
      %s412 = scalar_select %p411, %s408, 1
      %s413 = smul.addr %s410, 2
      %s414 = sadd.s32 %s412, %s413
      %s415 = smul.addr %s414, 4
      %s416 = scalar_lea.vmem %s0, %s415
      %p417 = pneg %p58
      %p418 = pneg %p55
      %p419 = scmp.lt.s32.totalorder %s27, 1
      %s420 = scalar_select %p419, %s27, 1
      %s421 = smul.addr %s420, 32
      %s422 = smul.addr %s421, 4
      %s423 = scalar_lea.vmem %s1, %s422
      %p424 = pneg %p84
      %p425 = pneg %p81
      %p426 = scmp.lt.s32.totalorder %s27, 1
      %s427 = scalar_select %p426, %s27, 1
      %s428 = smul.addr %s427, 4
      %s429 = scalar_lea.vmem %s2, %s428
      %p430 = pneg %p110
      %p431 = pneg %p107
      %p432 = pneg %p131
      %p433 = pneg %p128
      %p434 = pneg %p152
      %p435 = pneg %p149
      %p436 = pneg %p173
      %p437 = pneg %p170
      %p438 = pneg %p194
      %p439 = pneg %p191
      %p440 = pneg %p215
      %p441 = pneg %p212
      %p442 = pneg %p236
      %p443 = pneg %p233
      %p444 = pneg %p257
      %p445 = pneg %p254
      %p446 = pneg %p278
      %p447 = pneg %p275
      %p448 = pneg %p299
      %p449 = pneg %p296
      %p450 = pneg %p327
      %p451 = pneg %p324
      %s452 = smul.u32 2, %s28
      %p453 = scmp.lt.s32.totalorder %s27, 1
      %s454 = scalar_select %p453, %s27, 1
      %p455 = scmp.lt.s32.totalorder %s452, 1
      %s456 = scalar_select %p455, %s452, 1
      %s457 = smul.addr %s454, 2
      %s458 = sadd.s32 %s456, %s457
      %s459 = smul.addr %s458, 8
      %s460 = scalar_lea.vmem %s12, %s459
      %s461 = smul.u32 2, %s28
      %p462 = scmp.lt.s32.totalorder %s27, 1
      %s463 = scalar_select %p462, %s27, 1
      %p464 = scmp.lt.s32.totalorder %s461, 1
      %s465 = scalar_select %p464, %s461, 1
      %s466 = smul.addr %s463, 2
      %s467 = sadd.s32 %s465, %s466
      %s468 = smul.addr %s467, 4
      %s469 = scalar_lea.vmem %s0, %s468
      %s470 = smul.u32 2, %s28
      %p471 = scmp.lt.s32.totalorder %s27, 1
      %s472 = scalar_select %p471, %s27, 1
      %s473 = smul.addr %s472, 32
      %s474 = smul.addr %s473, 4
      %s475 = scalar_lea.vmem %s1, %s474
      %p476 = scmp.lt.s32.totalorder %s27, 1
      %s477 = scalar_select %p476, %s27, 1
      %s478 = smul.addr %s477, 4
      %s479 = scalar_lea.vmem %s2, %s478
      %s480 = smul.u32 2, %s28
      %p481 = scmp.lt.s32.totalorder %s27, 1
      %s482 = scalar_select %p481, %s27, 1
      %p483 = scmp.lt.s32.totalorder %s480, 1
      %s484 = scalar_select %p483, %s480, 1
      %s485 = smul.addr %s482, 2
      %s486 = sadd.s32 %s484, %s485
      %s487 = smul.addr %s486, 8
      %s488 = scalar_lea.vmem %s12, %s487
      %s489 = smul.u32 2, %s28
      %v491 = vld [vmem:[%s469] sm:$0xf]
      %v492 = vld [vmem:[%s469 + $0x4] sm:$0xf]
      %v493 = vld [vmem:[%s475] sm:$0xff]
      %v494 = vld [vmem:[%s475 + $0x8] sm:$0xff]
      %v495 = vld [vmem:[%s475 + $0x10] sm:$0xff]
      %v496 = vld [vmem:[%s475 + $0x18] sm:$0xff]
      %v497 = vld [vmem:[%s475 + $0x20] sm:$0xff]
      %v498 = vld [vmem:[%s475 + $0x28] sm:$0xff]
      %v499 = vld [vmem:[%s475 + $0x30] sm:$0xff]
      %v500 = vld [vmem:[%s475 + $0x38] sm:$0xff]
      %v501 = vld [vmem:[%s475 + $0x40] sm:$0xff]
      %v502 = vld [vmem:[%s475 + $0x48] sm:$0xff]
      %v503 = vld [vmem:[%s475 + $0x50] sm:$0xff]
      %v504 = vld [vmem:[%s475 + $0x58] sm:$0xff]
      %v505 = vld [vmem:[%s475 + $0x60] sm:$0xff]
      %v506 = vld [vmem:[%s475 + $0x68] sm:$0xff]
      %v507 = vld [vmem:[%s475 + $0x70] sm:$0xff]
      %v508 = vld [vmem:[%s475 + $0x78] sm:$0xff]
      %v511 = vunpack.c.l.b16 %v491
      %v512 = vunpack.c.l.b16 %v492
      %v513 = vpack.c.b16 %v512, %v511
      %v530 = vunpack.c.l.b16 %v493
      %v531 = vunpack.c.h.b16 %v493
      %v532 = vunpack.c.l.b16 %v494
      %v533 = vunpack.c.h.b16 %v494
      %v534 = vunpack.c.l.b16 %v495
      %v535 = vunpack.c.h.b16 %v495
      %v536 = vunpack.c.l.b16 %v496
      %v537 = vunpack.c.h.b16 %v496
      %v538 = vunpack.c.l.b16 %v497
      %v539 = vunpack.c.h.b16 %v497
      %v540 = vunpack.c.l.b16 %v498
      %v541 = vunpack.c.h.b16 %v498
      %v542 = vunpack.c.l.b16 %v499
      %v543 = vunpack.c.h.b16 %v499
      %v544 = vunpack.c.l.b16 %v500
      %v545 = vunpack.c.h.b16 %v500
      %v546 = vunpack.c.l.b16 %v501
      %v547 = vunpack.c.h.b16 %v501
      %v548 = vunpack.c.l.b16 %v502
      %v549 = vunpack.c.h.b16 %v502
      %v550 = vunpack.c.l.b16 %v503
      %v551 = vunpack.c.h.b16 %v503
      %v552 = vunpack.c.l.b16 %v504
      %v553 = vunpack.c.h.b16 %v504
      %v554 = vunpack.c.l.b16 %v505
      %v555 = vunpack.c.h.b16 %v505
      %v556 = vunpack.c.l.b16 %v506
      %v557 = vunpack.c.h.b16 %v506
      %v558 = vunpack.c.l.b16 %v507
      %v559 = vunpack.c.h.b16 %v507
      %v560 = vunpack.c.l.b16 %v508
      %v561 = vunpack.c.h.b16 %v508
      %v562 = vpack.c.b16 %v534, %v530
      %v563 = vpack.c.b16 %v535, %v531
      %v564 = vpack.c.b16 %v536, %v532
      %v565 = vpack.c.b16 %v537, %v533
      %v566 = vpack.c.b16 %v542, %v538
      %v567 = vpack.c.b16 %v543, %v539
      %v568 = vpack.c.b16 %v544, %v540
      %v569 = vpack.c.b16 %v545, %v541
      %v570 = vpack.c.b16 %v550, %v546
      %v571 = vpack.c.b16 %v551, %v547
      %v572 = vpack.c.b16 %v552, %v548
      %v573 = vpack.c.b16 %v553, %v549
      %v574 = vpack.c.b16 %v558, %v554
      %v575 = vpack.c.b16 %v559, %v555
      %v576 = vpack.c.b16 %v560, %v556
      %v577 = vpack.c.b16 %v561, %v557
      %vm594 = vcmask 523264
      %v596 = vsel %vm594, %v513, 0
      %598 = vmatpush.bf16.msra.mxu0 0
      %599 = vmatpush.bf16.msra.mxu0 0
      %600 = vmatpush.bf16.msra.mxu0 0
      %601 = vmatpush.bf16.msra.mxu0 0
      %602 = vmatpush.bf16.msra.mxu0 %v574
      %603 = vmatpush.bf16.msra.mxu0 %v570
      %604 = vmatpush.bf16.msra.mxu0 %v566
      %605 = vmatpush.bf16.msra.mxu0 %v562
      %606 = vmatmul.bf16.gmra.mxu0 %v596
      %v607 = vpop.f32.mrf.mxu0
      %v608 = vadd.f32 0.0, %v607
      %v609 = vpop.f32.mrf.mxu0
      %v610 = vadd.f32 0.0, %v609
      %611 = vdwg.mxu0
      %612 = vmatpush.bf16.msra.mxu0 0
      %613 = vmatpush.bf16.msra.mxu0 0
      %614 = vmatpush.bf16.msra.mxu0 0
      %615 = vmatpush.bf16.msra.mxu0 0
      %616 = vmatpush.bf16.msra.mxu0 %v575
      %617 = vmatpush.bf16.msra.mxu0 %v571
      %618 = vmatpush.bf16.msra.mxu0 %v567
      %619 = vmatpush.bf16.msra.mxu0 %v563
      %620 = vmatmul.bf16.gmra.mxu0 %v596
      %v621 = vpop.f32.mrf.mxu0
      %v622 = vadd.f32 0.0, %v621
      %v623 = vpop.f32.mrf.mxu0
      %v624 = vadd.f32 0.0, %v623
      %625 = vdwg.mxu0
      %626 = vmatpush.bf16.msra.mxu0 0
      %627 = vmatpush.bf16.msra.mxu0 0
      %628 = vmatpush.bf16.msra.mxu0 0
      %629 = vmatpush.bf16.msra.mxu0 0
      %630 = vmatpush.bf16.msra.mxu0 %v576
      %631 = vmatpush.bf16.msra.mxu0 %v572
      %632 = vmatpush.bf16.msra.mxu0 %v568
      %633 = vmatpush.bf16.msra.mxu0 %v564
      %634 = vmatmul.bf16.gmra.mxu0 %v596
      %v635 = vpop.f32.mrf.mxu0
      %v636 = vadd.f32 0.0, %v635
      %v637 = vpop.f32.mrf.mxu0
      %v638 = vadd.f32 0.0, %v637
      %639 = vdwg.mxu0
      %640 = vmatpush.bf16.msra.mxu0 0
      %641 = vmatpush.bf16.msra.mxu0 0
      %642 = vmatpush.bf16.msra.mxu0 0
      %643 = vmatpush.bf16.msra.mxu0 0
      %644 = vmatpush.bf16.msra.mxu0 %v577
      %645 = vmatpush.bf16.msra.mxu0 %v573
      %646 = vmatpush.bf16.msra.mxu0 %v569
      %647 = vmatpush.bf16.msra.mxu0 %v565
      %648 = vmatmul.bf16.gmra.mxu0 %v596
      %v649 = vpop.f32.mrf.mxu0
      %v650 = vadd.f32 0.0, %v649
      %v651 = vpop.f32.mrf.mxu0
      %v652 = vadd.f32 0.0, %v651
      %653 = vdwg.mxu0
      %v654 = vld [vmem:[%s3] sm:$0xf]
      %v656 = vperm.slane %v654, 0
      %v657 = vperm.slane %v654, 1
      %v658 = vperm.slane %v654, 2
      %v659 = vperm.slane %v654, 3
      %v664 = vmul.f32 %v608, %v656
      %v665 = vmul.f32 %v622, %v657
      %v666 = vmul.f32 %v636, %v658
      %v667 = vmul.f32 %v650, %v659
      %v668 = vmul.f32 %v610, %v656
      %v669 = vmul.f32 %v624, %v657
      %v670 = vmul.f32 %v638, %v658
      %v671 = vmul.f32 %v652, %v659
      %v672 = vld [vmem:[%s479] sm:$0xf]
      %v674 = vperm.slane %v672, 0
      %v675 = vperm.slane %v672, 1
      %v676 = vperm.slane %v672, 2
      %v677 = vperm.slane %v672, 3
      %v682 = vadd.f32 %v664, %v674
      %v683 = vadd.f32 %v665, %v675
      %v684 = vadd.f32 %v666, %v676
      %v685 = vadd.f32 %v667, %v677
      %v686 = vadd.f32 %v668, %v674
      %v687 = vadd.f32 %v669, %v675
      %v688 = vadd.f32 %v670, %v676
      %v689 = vadd.f32 %v671, %v677
      %v690 = vmax.f32 %v682, 0.0
      %v691 = vmax.f32 %v683, 0.0
      %v692 = vmax.f32 %v684, 0.0
      %v693 = vmax.f32 %v685, 0.0
      %v694 = vmax.f32 %v686, 0.0
      %v695 = vmax.f32 %v687, 0.0
      %v696 = vmax.f32 %v688, 0.0
      %v697 = vmax.f32 %v689, 0.0
      %v698 = vpack.c.bf16 %v694, %v690
      %v699 = vpack.c.bf16 %v695, %v691
      %v700 = vpack.c.bf16 %v696, %v692
      %v701 = vpack.c.bf16 %v697, %v693
      %v702 = vld [vmem:[%s4] sm:$0xff]
      %v703 = vld [vmem:[%s4 + $0x8] sm:$0xff]
      %v704 = vld [vmem:[%s4 + $0x10] sm:$0xff]
      %v705 = vld [vmem:[%s4 + $0x18] sm:$0xff]
      %v706 = vld [vmem:[%s4 + $0x20] sm:$0xff]
      %v707 = vld [vmem:[%s4 + $0x28] sm:$0xff]
      %v708 = vld [vmem:[%s4 + $0x30] sm:$0xff]
      %v709 = vld [vmem:[%s4 + $0x38] sm:$0xff]
      %v710 = vld [vmem:[%s4 + $0x40] sm:$0xff]
      %v711 = vld [vmem:[%s4 + $0x48] sm:$0xff]
      %v712 = vld [vmem:[%s4 + $0x50] sm:$0xff]
      %v713 = vld [vmem:[%s4 + $0x58] sm:$0xff]
      %v714 = vld [vmem:[%s4 + $0x60] sm:$0xff]
      %v715 = vld [vmem:[%s4 + $0x68] sm:$0xff]
      %v716 = vld [vmem:[%s4 + $0x70] sm:$0xff]
      %v717 = vld [vmem:[%s4 + $0x78] sm:$0xff]
      %v718 = vld [vmem:[%s4 + $0x80] sm:$0xff]
      %v719 = vld [vmem:[%s4 + $0x88] sm:$0xff]
      %v720 = vld [vmem:[%s4 + $0x90] sm:$0xff]
      %v721 = vld [vmem:[%s4 + $0x98] sm:$0xff]
      %v722 = vld [vmem:[%s4 + $0xa0] sm:$0xff]
      %v723 = vld [vmem:[%s4 + $0xa8] sm:$0xff]
      %v724 = vld [vmem:[%s4 + $0xb0] sm:$0xff]
      %v725 = vld [vmem:[%s4 + $0xb8] sm:$0xff]
      %v726 = vld [vmem:[%s4 + $0xc0] sm:$0xff]
      %v727 = vld [vmem:[%s4 + $0xc8] sm:$0xff]
      %v728 = vld [vmem:[%s4 + $0xd0] sm:$0xff]
      %v729 = vld [vmem:[%s4 + $0xd8] sm:$0xff]
      %v730 = vld [vmem:[%s4 + $0xe0] sm:$0xff]
      %v731 = vld [vmem:[%s4 + $0xe8] sm:$0xff]
      %v732 = vld [vmem:[%s4 + $0xf0] sm:$0xff]
      %v733 = vld [vmem:[%s4 + $0xf8] sm:$0xff]
      %v734 = vld [vmem:[%s4 + $0x100] sm:$0xff]
      %v735 = vld [vmem:[%s4 + $0x108] sm:$0xff]
      %v736 = vld [vmem:[%s4 + $0x110] sm:$0xff]
      %v737 = vld [vmem:[%s4 + $0x118] sm:$0xff]
      %v738 = vld [vmem:[%s4 + $0x120] sm:$0xff]
      %v739 = vld [vmem:[%s4 + $0x128] sm:$0xff]
      %v740 = vld [vmem:[%s4 + $0x130] sm:$0xff]
      %v741 = vld [vmem:[%s4 + $0x138] sm:$0xff]
      %v742 = vld [vmem:[%s4 + $0x140] sm:$0xff]
      %v743 = vld [vmem:[%s4 + $0x148] sm:$0xff]
      %v744 = vld [vmem:[%s4 + $0x150] sm:$0xff]
      %v745 = vld [vmem:[%s4 + $0x158] sm:$0xff]
      %v746 = vld [vmem:[%s4 + $0x160] sm:$0xff]
      %v747 = vld [vmem:[%s4 + $0x168] sm:$0xff]
      %v748 = vld [vmem:[%s4 + $0x170] sm:$0xff]
      %v749 = vld [vmem:[%s4 + $0x178] sm:$0xff]
      %v750 = vld [vmem:[%s4 + $0x180] sm:$0xff]
      %v751 = vld [vmem:[%s4 + $0x188] sm:$0xff]
      %v752 = vld [vmem:[%s4 + $0x190] sm:$0xff]
      %v753 = vld [vmem:[%s4 + $0x198] sm:$0xff]
      %v754 = vld [vmem:[%s4 + $0x1a0] sm:$0xff]
      %v755 = vld [vmem:[%s4 + $0x1a8] sm:$0xff]
      %v756 = vld [vmem:[%s4 + $0x1b0] sm:$0xff]
      %v757 = vld [vmem:[%s4 + $0x1b8] sm:$0xff]
      %v758 = vld [vmem:[%s4 + $0x1c0] sm:$0xff]
      %v759 = vld [vmem:[%s4 + $0x1c8] sm:$0xff]
      %v760 = vld [vmem:[%s4 + $0x1d0] sm:$0xff]
      %v761 = vld [vmem:[%s4 + $0x1d8] sm:$0xff]
      %v762 = vld [vmem:[%s4 + $0x1e0] sm:$0xff]
      %v763 = vld [vmem:[%s4 + $0x1e8] sm:$0xff]
      %v764 = vld [vmem:[%s4 + $0x1f0] sm:$0xff]
      %v765 = vld [vmem:[%s4 + $0x1f8] sm:$0xff]
      %v830 = vunpack.c.l.b16 %v702
      %v831 = vunpack.c.h.b16 %v702
      %v832 = vunpack.c.l.b16 %v703
      %v833 = vunpack.c.h.b16 %v703
      %v834 = vunpack.c.l.b16 %v704
      %v835 = vunpack.c.h.b16 %v704
      %v836 = vunpack.c.l.b16 %v705
      %v837 = vunpack.c.h.b16 %v705
      %v838 = vunpack.c.l.b16 %v706
      %v839 = vunpack.c.h.b16 %v706
      %v840 = vunpack.c.l.b16 %v707
      %v841 = vunpack.c.h.b16 %v707
      %v842 = vunpack.c.l.b16 %v708
      %v843 = vunpack.c.h.b16 %v708
      %v844 = vunpack.c.l.b16 %v709
      %v845 = vunpack.c.h.b16 %v709
      %v846 = vunpack.c.l.b16 %v710
      %v847 = vunpack.c.h.b16 %v710
      %v848 = vunpack.c.l.b16 %v711
      %v849 = vunpack.c.h.b16 %v711
      %v850 = vunpack.c.l.b16 %v712
      %v851 = vunpack.c.h.b16 %v712
      %v852 = vunpack.c.l.b16 %v713
      %v853 = vunpack.c.h.b16 %v713
      %v854 = vunpack.c.l.b16 %v714
      %v855 = vunpack.c.h.b16 %v714
      %v856 = vunpack.c.l.b16 %v715
      %v857 = vunpack.c.h.b16 %v715
      %v858 = vunpack.c.l.b16 %v716
      %v859 = vunpack.c.h.b16 %v716
      %v860 = vunpack.c.l.b16 %v717
      %v861 = vunpack.c.h.b16 %v717
      %v862 = vunpack.c.l.b16 %v718
      %v863 = vunpack.c.h.b16 %v718
      %v864 = vunpack.c.l.b16 %v719
      %v865 = vunpack.c.h.b16 %v719
      %v866 = vunpack.c.l.b16 %v720
      %v867 = vunpack.c.h.b16 %v720
      %v868 = vunpack.c.l.b16 %v721
      %v869 = vunpack.c.h.b16 %v721
      %v870 = vunpack.c.l.b16 %v722
      %v871 = vunpack.c.h.b16 %v722
      %v872 = vunpack.c.l.b16 %v723
      %v873 = vunpack.c.h.b16 %v723
      %v874 = vunpack.c.l.b16 %v724
      %v875 = vunpack.c.h.b16 %v724
      %v876 = vunpack.c.l.b16 %v725
      %v877 = vunpack.c.h.b16 %v725
      %v878 = vunpack.c.l.b16 %v726
      %v879 = vunpack.c.h.b16 %v726
      %v880 = vunpack.c.l.b16 %v727
      %v881 = vunpack.c.h.b16 %v727
      %v882 = vunpack.c.l.b16 %v728
      %v883 = vunpack.c.h.b16 %v728
      %v884 = vunpack.c.l.b16 %v729
      %v885 = vunpack.c.h.b16 %v729
      %v886 = vunpack.c.l.b16 %v730
      %v887 = vunpack.c.h.b16 %v730
      %v888 = vunpack.c.l.b16 %v731
      %v889 = vunpack.c.h.b16 %v731
      %v890 = vunpack.c.l.b16 %v732
      %v891 = vunpack.c.h.b16 %v732
      %v892 = vunpack.c.l.b16 %v733
      %v893 = vunpack.c.h.b16 %v733
      %v894 = vunpack.c.l.b16 %v734
      %v895 = vunpack.c.h.b16 %v734
      %v896 = vunpack.c.l.b16 %v735
      %v897 = vunpack.c.h.b16 %v735
      %v898 = vunpack.c.l.b16 %v736
      %v899 = vunpack.c.h.b16 %v736
      %v900 = vunpack.c.l.b16 %v737
      %v901 = vunpack.c.h.b16 %v737
      %v902 = vunpack.c.l.b16 %v738
      %v903 = vunpack.c.h.b16 %v738
      %v904 = vunpack.c.l.b16 %v739
      %v905 = vunpack.c.h.b16 %v739
      %v906 = vunpack.c.l.b16 %v740
      %v907 = vunpack.c.h.b16 %v740
      %v908 = vunpack.c.l.b16 %v741
      %v909 = vunpack.c.h.b16 %v741
      %v910 = vunpack.c.l.b16 %v742
      %v911 = vunpack.c.h.b16 %v742
      %v912 = vunpack.c.l.b16 %v743
      %v913 = vunpack.c.h.b16 %v743
      %v914 = vunpack.c.l.b16 %v744
      %v915 = vunpack.c.h.b16 %v744
      %v916 = vunpack.c.l.b16 %v745
      %v917 = vunpack.c.h.b16 %v745
      %v918 = vunpack.c.l.b16 %v746
      %v919 = vunpack.c.h.b16 %v746
      %v920 = vunpack.c.l.b16 %v747
      %v921 = vunpack.c.h.b16 %v747
      %v922 = vunpack.c.l.b16 %v748
      %v923 = vunpack.c.h.b16 %v748
      %v924 = vunpack.c.l.b16 %v749
      %v925 = vunpack.c.h.b16 %v749
      %v926 = vunpack.c.l.b16 %v750
      %v927 = vunpack.c.h.b16 %v750
      %v928 = vunpack.c.l.b16 %v751
      %v929 = vunpack.c.h.b16 %v751
      %v930 = vunpack.c.l.b16 %v752
      %v931 = vunpack.c.h.b16 %v752
      %v932 = vunpack.c.l.b16 %v753
      %v933 = vunpack.c.h.b16 %v753
      %v934 = vunpack.c.l.b16 %v754
      %v935 = vunpack.c.h.b16 %v754
      %v936 = vunpack.c.l.b16 %v755
      %v937 = vunpack.c.h.b16 %v755
      %v938 = vunpack.c.l.b16 %v756
      %v939 = vunpack.c.h.b16 %v756
      %v940 = vunpack.c.l.b16 %v757
      %v941 = vunpack.c.h.b16 %v757
      %v942 = vunpack.c.l.b16 %v758
      %v943 = vunpack.c.h.b16 %v758
      %v944 = vunpack.c.l.b16 %v759
      %v945 = vunpack.c.h.b16 %v759
      %v946 = vunpack.c.l.b16 %v760
      %v947 = vunpack.c.h.b16 %v760
      %v948 = vunpack.c.l.b16 %v761
      %v949 = vunpack.c.h.b16 %v761
      %v950 = vunpack.c.l.b16 %v762
      %v951 = vunpack.c.h.b16 %v762
      %v952 = vunpack.c.l.b16 %v763
      %v953 = vunpack.c.h.b16 %v763
      %v954 = vunpack.c.l.b16 %v764
      %v955 = vunpack.c.h.b16 %v764
      %v956 = vunpack.c.l.b16 %v765
      %v957 = vunpack.c.h.b16 %v765
      %v958 = vpack.c.b16 %v832, %v830
      %v959 = vpack.c.b16 %v833, %v831
      %v960 = vpack.c.b16 %v836, %v834
      %v961 = vpack.c.b16 %v837, %v835
      %v962 = vpack.c.b16 %v840, %v838
      %v963 = vpack.c.b16 %v841, %v839
      %v964 = vpack.c.b16 %v844, %v842
      %v965 = vpack.c.b16 %v845, %v843
      %v966 = vpack.c.b16 %v848, %v846
      %v967 = vpack.c.b16 %v849, %v847
      %v968 = vpack.c.b16 %v852, %v850
      %v969 = vpack.c.b16 %v853, %v851
      %v970 = vpack.c.b16 %v856, %v854
      %v971 = vpack.c.b16 %v857, %v855
      %v972 = vpack.c.b16 %v860, %v858
      %v973 = vpack.c.b16 %v861, %v859
      %v974 = vpack.c.b16 %v864, %v862
      %v975 = vpack.c.b16 %v865, %v863
      %v976 = vpack.c.b16 %v868, %v866
      %v977 = vpack.c.b16 %v869, %v867
      %v978 = vpack.c.b16 %v872, %v870
      %v979 = vpack.c.b16 %v873, %v871
      %v980 = vpack.c.b16 %v876, %v874
      %v981 = vpack.c.b16 %v877, %v875
      %v982 = vpack.c.b16 %v880, %v878
      %v983 = vpack.c.b16 %v881, %v879
      %v984 = vpack.c.b16 %v884, %v882
      %v985 = vpack.c.b16 %v885, %v883
      %v986 = vpack.c.b16 %v888, %v886
      %v987 = vpack.c.b16 %v889, %v887
      %v988 = vpack.c.b16 %v892, %v890
      %v989 = vpack.c.b16 %v893, %v891
      %v990 = vpack.c.b16 %v896, %v894
      %v991 = vpack.c.b16 %v897, %v895
      %v992 = vpack.c.b16 %v900, %v898
      %v993 = vpack.c.b16 %v901, %v899
      %v994 = vpack.c.b16 %v904, %v902
      %v995 = vpack.c.b16 %v905, %v903
      %v996 = vpack.c.b16 %v908, %v906
      %v997 = vpack.c.b16 %v909, %v907
      %v998 = vpack.c.b16 %v912, %v910
      %v999 = vpack.c.b16 %v913, %v911
      %v1000 = vpack.c.b16 %v916, %v914
      %v1001 = vpack.c.b16 %v917, %v915
      %v1002 = vpack.c.b16 %v920, %v918
      %v1003 = vpack.c.b16 %v921, %v919
      %v1004 = vpack.c.b16 %v924, %v922
      %v1005 = vpack.c.b16 %v925, %v923
      %v1006 = vpack.c.b16 %v928, %v926
      %v1007 = vpack.c.b16 %v929, %v927
      %v1008 = vpack.c.b16 %v932, %v930
      %v1009 = vpack.c.b16 %v933, %v931
      %v1010 = vpack.c.b16 %v936, %v934
      %v1011 = vpack.c.b16 %v937, %v935
      %v1012 = vpack.c.b16 %v940, %v938
      %v1013 = vpack.c.b16 %v941, %v939
      %v1014 = vpack.c.b16 %v944, %v942
      %v1015 = vpack.c.b16 %v945, %v943
      %v1016 = vpack.c.b16 %v948, %v946
      %v1017 = vpack.c.b16 %v949, %v947
      %v1018 = vpack.c.b16 %v952, %v950
      %v1019 = vpack.c.b16 %v953, %v951
      %v1020 = vpack.c.b16 %v956, %v954
      %v1021 = vpack.c.b16 %v957, %v955
      %1086 = vmatpush.bf16.msra.mxu0 %v972
      %1087 = vmatpush.bf16.msra.mxu0 %v970
      %1088 = vmatpush.bf16.msra.mxu0 %v968
      %1089 = vmatpush.bf16.msra.mxu0 %v966
      %1090 = vmatpush.bf16.msra.mxu0 %v964
      %1091 = vmatpush.bf16.msra.mxu0 %v962
      %1092 = vmatpush.bf16.msra.mxu0 %v960
      %1093 = vmatpush.bf16.msra.mxu0 %v958
      %1094 = vmatmul.bf16.gmra.mxu0 %v698
      %v1095 = vpop.f32.mrf.mxu0
      %v1096 = vadd.f32 0.0, %v1095
      %v1097 = vpop.f32.mrf.mxu0
      %v1098 = vadd.f32 0.0, %v1097
      %1099 = vdwg.mxu0
      %1100 = vmatpush.bf16.msra.mxu0 %v988
      %1101 = vmatpush.bf16.msra.mxu0 %v986
      %1102 = vmatpush.bf16.msra.mxu0 %v984
      %1103 = vmatpush.bf16.msra.mxu0 %v982
      %1104 = vmatpush.bf16.msra.mxu0 %v980
      %1105 = vmatpush.bf16.msra.mxu0 %v978
      %1106 = vmatpush.bf16.msra.mxu0 %v976
      %1107 = vmatpush.bf16.msra.mxu0 %v974
      %1108 = vmatmul.bf16.gmra.mxu0 %v699
      %v1109 = vpop.f32.mrf.mxu0
      %v1110 = vadd.f32 %v1096, %v1109
      %v1111 = vpop.f32.mrf.mxu0
      %v1112 = vadd.f32 %v1098, %v1111
      %1113 = vdwg.mxu0
      %1114 = vmatpush.bf16.msra.mxu0 %v1004
      %1115 = vmatpush.bf16.msra.mxu0 %v1002
      %1116 = vmatpush.bf16.msra.mxu0 %v1000
      %1117 = vmatpush.bf16.msra.mxu0 %v998
      %1118 = vmatpush.bf16.msra.mxu0 %v996
      %1119 = vmatpush.bf16.msra.mxu0 %v994
      %1120 = vmatpush.bf16.msra.mxu0 %v992
      %1121 = vmatpush.bf16.msra.mxu0 %v990
      %1122 = vmatmul.bf16.gmra.mxu0 %v700
      %v1123 = vpop.f32.mrf.mxu0
      %v1124 = vadd.f32 %v1110, %v1123
      %v1125 = vpop.f32.mrf.mxu0
      %v1126 = vadd.f32 %v1112, %v1125
      %1127 = vdwg.mxu0
      %1128 = vmatpush.bf16.msra.mxu0 %v1020
      %1129 = vmatpush.bf16.msra.mxu0 %v1018
      %1130 = vmatpush.bf16.msra.mxu0 %v1016
      %1131 = vmatpush.bf16.msra.mxu0 %v1014
      %1132 = vmatpush.bf16.msra.mxu0 %v1012
      %1133 = vmatpush.bf16.msra.mxu0 %v1010
      %1134 = vmatpush.bf16.msra.mxu0 %v1008
      %1135 = vmatpush.bf16.msra.mxu0 %v1006
      %1136 = vmatmul.bf16.gmra.mxu0 %v701
      %v1137 = vpop.f32.mrf.mxu0
      %v1138 = vadd.f32 %v1124, %v1137
      %v1139 = vpop.f32.mrf.mxu0
      %v1140 = vadd.f32 %v1126, %v1139
      %1141 = vdwg.mxu0
      %1142 = vmatpush.bf16.msra.mxu0 %v973
      %1143 = vmatpush.bf16.msra.mxu0 %v971
      %1144 = vmatpush.bf16.msra.mxu0 %v969
      %1145 = vmatpush.bf16.msra.mxu0 %v967
      %1146 = vmatpush.bf16.msra.mxu0 %v965
      %1147 = vmatpush.bf16.msra.mxu0 %v963
      %1148 = vmatpush.bf16.msra.mxu0 %v961
      %1149 = vmatpush.bf16.msra.mxu0 %v959
      %1150 = vmatmul.bf16.gmra.mxu0 %v698
      %v1151 = vpop.f32.mrf.mxu0
      %v1152 = vadd.f32 0.0, %v1151
      %v1153 = vpop.f32.mrf.mxu0
      %v1154 = vadd.f32 0.0, %v1153
      %1155 = vdwg.mxu0
      %1156 = vmatpush.bf16.msra.mxu0 %v989
      %1157 = vmatpush.bf16.msra.mxu0 %v987
      %1158 = vmatpush.bf16.msra.mxu0 %v985
      %1159 = vmatpush.bf16.msra.mxu0 %v983
      %1160 = vmatpush.bf16.msra.mxu0 %v981
      %1161 = vmatpush.bf16.msra.mxu0 %v979
      %1162 = vmatpush.bf16.msra.mxu0 %v977
      %1163 = vmatpush.bf16.msra.mxu0 %v975
      %1164 = vmatmul.bf16.gmra.mxu0 %v699
      %v1165 = vpop.f32.mrf.mxu0
      %v1166 = vadd.f32 %v1152, %v1165
      %v1167 = vpop.f32.mrf.mxu0
      %v1168 = vadd.f32 %v1154, %v1167
      %1169 = vdwg.mxu0
      %1170 = vmatpush.bf16.msra.mxu0 %v1005
      %1171 = vmatpush.bf16.msra.mxu0 %v1003
      %1172 = vmatpush.bf16.msra.mxu0 %v1001
      %1173 = vmatpush.bf16.msra.mxu0 %v999
      %1174 = vmatpush.bf16.msra.mxu0 %v997
      %1175 = vmatpush.bf16.msra.mxu0 %v995
      %1176 = vmatpush.bf16.msra.mxu0 %v993
      %1177 = vmatpush.bf16.msra.mxu0 %v991
      %1178 = vmatmul.bf16.gmra.mxu0 %v700
      %v1179 = vpop.f32.mrf.mxu0
      %v1180 = vadd.f32 %v1166, %v1179
      %v1181 = vpop.f32.mrf.mxu0
      %v1182 = vadd.f32 %v1168, %v1181
      %1183 = vdwg.mxu0
      %1184 = vmatpush.bf16.msra.mxu0 %v1021
      %1185 = vmatpush.bf16.msra.mxu0 %v1019
      %1186 = vmatpush.bf16.msra.mxu0 %v1017
      %1187 = vmatpush.bf16.msra.mxu0 %v1015
      %1188 = vmatpush.bf16.msra.mxu0 %v1013
      %1189 = vmatpush.bf16.msra.mxu0 %v1011
      %1190 = vmatpush.bf16.msra.mxu0 %v1009
      %1191 = vmatpush.bf16.msra.mxu0 %v1007
      %1192 = vmatmul.bf16.gmra.mxu0 %v701
      %v1193 = vpop.f32.mrf.mxu0
      %v1194 = vadd.f32 %v1180, %v1193
      %v1195 = vpop.f32.mrf.mxu0
      %v1196 = vadd.f32 %v1182, %v1195
      %1197 = vdwg.mxu0
      %v1198 = vld [vmem:[%s5] sm:$0x3]
      %v1200 = vperm.slane %v1198, 0
      %v1201 = vperm.slane %v1198, 1
      %v1204 = vmul.f32 %v1138, %v1200
      %v1205 = vmul.f32 %v1194, %v1201
      %v1206 = vmul.f32 %v1140, %v1200
      %v1207 = vmul.f32 %v1196, %v1201
      %v1208 = vld [vmem:[%s6] sm:$0x3]
      %v1210 = vperm.slane %v1208, 0
      %v1211 = vperm.slane %v1208, 1
      %v1214 = vadd.f32 %v1204, %v1210
      %v1215 = vadd.f32 %v1205, %v1211
      %v1216 = vadd.f32 %v1206, %v1210
      %v1217 = vadd.f32 %v1207, %v1211
      %v1218 = vmax.f32 %v1214, 0.0
      %v1219 = vmax.f32 %v1215, 0.0
      %v1220 = vmax.f32 %v1216, 0.0
      %v1221 = vmax.f32 %v1217, 0.0
      %v1222 = vpack.c.bf16 %v1220, %v1218
      %v1223 = vpack.c.bf16 %v1221, %v1219
      %v1224 = vld [vmem:[%s7] sm:$0xf]
      %v1225 = vld [vmem:[%s7 + $0x4] sm:$0xf]
      %v1226 = vld [vmem:[%s7 + $0x8] sm:$0xf]
      %v1227 = vld [vmem:[%s7 + $0xc] sm:$0xf]
      %v1228 = vld [vmem:[%s7 + $0x10] sm:$0xf]
      %v1229 = vld [vmem:[%s7 + $0x14] sm:$0xf]
      %v1230 = vld [vmem:[%s7 + $0x18] sm:$0xf]
      %v1231 = vld [vmem:[%s7 + $0x1c] sm:$0xf]
      %v1232 = vld [vmem:[%s7 + $0x20] sm:$0xf]
      %v1233 = vld [vmem:[%s7 + $0x24] sm:$0xf]
      %v1234 = vld [vmem:[%s7 + $0x28] sm:$0xf]
      %v1235 = vld [vmem:[%s7 + $0x2c] sm:$0xf]
      %v1236 = vld [vmem:[%s7 + $0x30] sm:$0xf]
      %v1237 = vld [vmem:[%s7 + $0x34] sm:$0xf]
      %v1238 = vld [vmem:[%s7 + $0x38] sm:$0xf]
      %v1239 = vld [vmem:[%s7 + $0x3c] sm:$0xf]
      %v1240 = vld [vmem:[%s7 + $0x40] sm:$0xf]
      %v1241 = vld [vmem:[%s7 + $0x44] sm:$0xf]
      %v1242 = vld [vmem:[%s7 + $0x48] sm:$0xf]
      %v1243 = vld [vmem:[%s7 + $0x4c] sm:$0xf]
      %v1244 = vld [vmem:[%s7 + $0x50] sm:$0xf]
      %v1245 = vld [vmem:[%s7 + $0x54] sm:$0xf]
      %v1246 = vld [vmem:[%s7 + $0x58] sm:$0xf]
      %v1247 = vld [vmem:[%s7 + $0x5c] sm:$0xf]
      %v1248 = vld [vmem:[%s7 + $0x60] sm:$0xf]
      %v1249 = vld [vmem:[%s7 + $0x64] sm:$0xf]
      %v1250 = vld [vmem:[%s7 + $0x68] sm:$0xf]
      %v1251 = vld [vmem:[%s7 + $0x6c] sm:$0xf]
      %v1252 = vld [vmem:[%s7 + $0x70] sm:$0xf]
      %v1253 = vld [vmem:[%s7 + $0x74] sm:$0xf]
      %v1254 = vld [vmem:[%s7 + $0x78] sm:$0xf]
      %v1255 = vld [vmem:[%s7 + $0x7c] sm:$0xf]
      %v1288 = vunpack.c.l.b16 %v1224
      %v1289 = vunpack.c.l.b16 %v1225
      %v1290 = vunpack.c.l.b16 %v1226
      %v1291 = vunpack.c.l.b16 %v1227
      %v1292 = vunpack.c.l.b16 %v1228
      %v1293 = vunpack.c.l.b16 %v1229
      %v1294 = vunpack.c.l.b16 %v1230
      %v1295 = vunpack.c.l.b16 %v1231
      %v1296 = vunpack.c.l.b16 %v1232
      %v1297 = vunpack.c.l.b16 %v1233
      %v1298 = vunpack.c.l.b16 %v1234
      %v1299 = vunpack.c.l.b16 %v1235
      %v1300 = vunpack.c.l.b16 %v1236
      %v1301 = vunpack.c.l.b16 %v1237
      %v1302 = vunpack.c.l.b16 %v1238
      %v1303 = vunpack.c.l.b16 %v1239
      %v1304 = vunpack.c.l.b16 %v1240
      %v1305 = vunpack.c.l.b16 %v1241
      %v1306 = vunpack.c.l.b16 %v1242
      %v1307 = vunpack.c.l.b16 %v1243
      %v1308 = vunpack.c.l.b16 %v1244
      %v1309 = vunpack.c.l.b16 %v1245
      %v1310 = vunpack.c.l.b16 %v1246
      %v1311 = vunpack.c.l.b16 %v1247
      %v1312 = vunpack.c.l.b16 %v1248
      %v1313 = vunpack.c.l.b16 %v1249
      %v1314 = vunpack.c.l.b16 %v1250
      %v1315 = vunpack.c.l.b16 %v1251
      %v1316 = vunpack.c.l.b16 %v1252
      %v1317 = vunpack.c.l.b16 %v1253
      %v1318 = vunpack.c.l.b16 %v1254
      %v1319 = vunpack.c.l.b16 %v1255
      %v1320 = vpack.c.b16 %v1289, %v1288
      %v1321 = vpack.c.b16 %v1291, %v1290
      %v1322 = vpack.c.b16 %v1293, %v1292
      %v1323 = vpack.c.b16 %v1295, %v1294
      %v1324 = vpack.c.b16 %v1297, %v1296
      %v1325 = vpack.c.b16 %v1299, %v1298
      %v1326 = vpack.c.b16 %v1301, %v1300
      %v1327 = vpack.c.b16 %v1303, %v1302
      %v1328 = vpack.c.b16 %v1305, %v1304
      %v1329 = vpack.c.b16 %v1307, %v1306
      %v1330 = vpack.c.b16 %v1309, %v1308
      %v1331 = vpack.c.b16 %v1311, %v1310
      %v1332 = vpack.c.b16 %v1313, %v1312
      %v1333 = vpack.c.b16 %v1315, %v1314
      %v1334 = vpack.c.b16 %v1317, %v1316
      %v1335 = vpack.c.b16 %v1319, %v1318
      %1352 = vmatpush.bf16.msra.mxu0 %v1327
      %1353 = vmatpush.bf16.msra.mxu0 %v1326
      %1354 = vmatpush.bf16.msra.mxu0 %v1325
      %1355 = vmatpush.bf16.msra.mxu0 %v1324
      %1356 = vmatpush.bf16.msra.mxu0 %v1323
      %1357 = vmatpush.bf16.msra.mxu0 %v1322
      %1358 = vmatpush.bf16.msra.mxu0 %v1321
      %1359 = vmatpush.bf16.msra.mxu0 %v1320
      %1360 = vmatmul.bf16.gmra.mxu0 %v1222
      %v1361 = vpop.f32.mrf.mxu0
      %v1362 = vadd.f32 0.0, %v1361
      %v1363 = vpop.f32.mrf.mxu0
      %v1364 = vadd.f32 0.0, %v1363
      %1365 = vdwg.mxu0
      %1366 = vmatpush.bf16.msra.mxu0 %v1335
      %1367 = vmatpush.bf16.msra.mxu0 %v1334
      %1368 = vmatpush.bf16.msra.mxu0 %v1333
      %1369 = vmatpush.bf16.msra.mxu0 %v1332
      %1370 = vmatpush.bf16.msra.mxu0 %v1331
      %1371 = vmatpush.bf16.msra.mxu0 %v1330
      %1372 = vmatpush.bf16.msra.mxu0 %v1329
      %1373 = vmatpush.bf16.msra.mxu0 %v1328
      %1374 = vmatmul.bf16.gmra.mxu0 %v1223
      %v1375 = vpop.f32.mrf.mxu0
      %v1376 = vadd.f32 %v1362, %v1375
      %v1377 = vpop.f32.mrf.mxu0
      %v1378 = vadd.f32 %v1364, %v1377
      %1379 = vdwg.mxu0
      %v1380 = vld [vmem:[%s8] sm:$0x1]
      %v1382 = vperm.slane %v1380, 0
      %v1384 = vmul.f32 %v1376, %v1382
      %v1385 = vmul.f32 %v1378, %v1382
      %v1386 = vld [vmem:[%s9] sm:$0x1]
      %v1388 = vperm.slane %v1386, 0
      %v1390 = vadd.f32 %v1384, %v1388
      %v1391 = vadd.f32 %v1385, %v1388
      %v1392 = vmax.f32 %v1390, 0.0
      %v1393 = vmax.f32 %v1391, 0.0
      %v1394 = vpack.c.bf16 %v1393, %v1392
      %v1395 = vld [vmem:[%s10] sm:$0xf]
      %v1396 = vld [vmem:[%s10 + $0x4] sm:$0xf]
      %v1397 = vld [vmem:[%s10 + $0x8] sm:$0xf]
      %v1398 = vld [vmem:[%s10 + $0xc] sm:$0xf]
      %v1399 = vld [vmem:[%s10 + $0x10] sm:$0xf]
      %v1400 = vld [vmem:[%s10 + $0x14] sm:$0xf]
      %v1401 = vld [vmem:[%s10 + $0x18] sm:$0xf]
      %v1402 = vld [vmem:[%s10 + $0x1c] sm:$0xf]
      %v1403 = vld [vmem:[%s10 + $0x20] sm:$0xf]
      %v1404 = vld [vmem:[%s10 + $0x24] sm:$0xf]
      %v1405 = vld [vmem:[%s10 + $0x28] sm:$0xf]
      %v1406 = vld [vmem:[%s10 + $0x2c] sm:$0xf]
      %v1407 = vld [vmem:[%s10 + $0x30] sm:$0xf]
      %v1408 = vld [vmem:[%s10 + $0x34] sm:$0xf]
      %v1409 = vld [vmem:[%s10 + $0x38] sm:$0xf]
      %v1410 = vld [vmem:[%s10 + $0x3c] sm:$0xf]
      %v1411 = vld [vmem:[%s11] sm:$0x1]
      %v1413 = vperm.slane %v1411, 0
      %v1431 = vunpack.c.l.b16 %v1395
      %v1432 = vunpack.c.l.b16 %v1396
      %v1433 = vunpack.c.l.b16 %v1397
      %v1434 = vunpack.c.l.b16 %v1398
      %v1435 = vunpack.c.l.b16 %v1399
      %v1436 = vunpack.c.l.b16 %v1400
      %v1437 = vunpack.c.l.b16 %v1401
      %v1438 = vunpack.c.l.b16 %v1402
      %v1439 = vunpack.c.l.b16 %v1403
      %v1440 = vunpack.c.l.b16 %v1404
      %v1441 = vunpack.c.l.b16 %v1405
      %v1442 = vunpack.c.l.b16 %v1406
      %v1443 = vunpack.c.l.b16 %v1407
      %v1444 = vunpack.c.l.b16 %v1408
      %v1445 = vunpack.c.l.b16 %v1409
      %v1446 = vunpack.c.l.b16 %v1410
      %v1447 = vpack.c.b16 %v1432, %v1431
      %v1448 = vpack.c.b16 %v1434, %v1433
      %v1449 = vpack.c.b16 %v1436, %v1435
      %v1450 = vpack.c.b16 %v1438, %v1437
      %v1451 = vpack.c.b16 %v1440, %v1439
      %v1452 = vpack.c.b16 %v1442, %v1441
      %v1453 = vpack.c.b16 %v1444, %v1443
      %v1454 = vpack.c.b16 %v1446, %v1445
      %1463 = vmatpush.bf16.msra.mxu0 %v1454
      %1464 = vmatpush.bf16.msra.mxu0 %v1453
      %1465 = vmatpush.bf16.msra.mxu0 %v1452
      %1466 = vmatpush.bf16.msra.mxu0 %v1451
      %1467 = vmatpush.bf16.msra.mxu0 %v1450
      %1468 = vmatpush.bf16.msra.mxu0 %v1449
      %1469 = vmatpush.bf16.msra.mxu0 %v1448
      %1470 = vmatpush.bf16.msra.mxu0 %v1447
      %1471 = vmatmul.bf16.gmra.mxu0 %v1394
      %v1472 = vpop.f32.mrf.mxu0
      %v1473 = vadd.f32 %v1413, %v1472
      %v1474 = vpop.f32.mrf.mxu0
      %v1475 = vadd.f32 %v1413, %v1474
      %1476 = vdwg.mxu0
      %vm1477 = vcmask 15360
      %1478 = vst.msk [vmem:[%s488] sm:$0xff] %vm1477, %v1473
      %1479 = vst.msk [vmem:[%s488 + $0x8] sm:$0xff] %vm1477, %v1475
      %s1480 = smul.u32 2, %s28
      %p1481 = scmp.lt.s32.totalorder %s27, 1
      %s1482 = scalar_select %p1481, %s27, 1
      %p1483 = scmp.lt.s32.totalorder %s1480, 1
      %s1484 = scalar_select %p1483, %s1480, 1
      %s1485 = smul.addr %s1482, 2
      %s1486 = sadd.s32 %s1484, %s1485
      %s1487 = smul.addr %s1486, 8
      %s1488 = scalar_lea.vmem %s12, %s1487
      // Predicated region
      $region69: #{pointnet_seg_head_forward.7} parent=67 // pred_check
        %p1489 = pneg %p324
      $region70: #{pointnet_seg_head_forward.7} parent=67 // pred_check_branch
        %1491 = sbr.rel (%p1489) target = $region72
      $region71: #{pointnet_seg_head_forward.7} parent=67 // pred_region
        %s1492 = smul.u32 2, %s28
      $region72: #{pointnet_seg_head_forward.7} parent=67 // pred_fallthru
        _
    $region68: #{pointnet_seg_head_forward.7} parent=5 // pred_fallthru
      _
    %p1493 = scmp.le.s32.totalorder 2, %s18
    // Predicated region
    $region73: #{pointnet_seg_head_forward.7} parent=5 // pred_check
      %p1494 = pneg %p1493
    $region74: #{pointnet_seg_head_forward.7} parent=5 // pred_check_branch
      %1496 = sbr.rel (%p1494) target = $region76
    $region75: #{pointnet_seg_head_forward.7} parent=5 // pred_region
      %s1497 = ssub.s32 %s18, 2
      // Predicated region
      $region77: #{pointnet_seg_head_forward.7} parent=75 // pred_check
        %p1498 = pneg %p330
      $region78: #{pointnet_seg_head_forward.7} parent=75 // pred_check_branch
        %1500 = sbr.rel (%p1498) target = $region80
      $region79: #{pointnet_seg_head_forward.7} parent=75 // pred_region
        %s1501 = smul.u32 2, %s30
        %p1502 = scmp.lt.s32.totalorder %s29, 1
        %s1503 = scalar_select %p1502, %s29, 1
        %p1504 = scmp.lt.s32.totalorder %s1501, 1
        %s1505 = scalar_select %p1504, %s1501, 1
        %s1506 = smul.addr %s1503, 2
        %s1507 = sadd.s32 %s1505, %s1506
        %s1508 = smul.addr %s1507, 8
        %s1509 = scalar_lea.vmem %s12, %s1508
      $region80: #{pointnet_seg_head_forward.7} parent=75 // pred_fallthru
        _
    $region76: #{pointnet_seg_head_forward.7} parent=5 // pred_fallthru
      _
  $region6: #{pointnet_seg_head_forward.7} parent=0 // loop_footer
    %s22 = sadd.s32 1, %s18
  $region7: #{pointnet_seg_head_forward.7} parent=0 // loop_footer_branch
    %17 = sbr.rel target = $region3
  $region8: #{pointnet_seg_head_forward.7} parent=0 // loop_exit
    _

</llo_original>
